<compile_context>
chip_gen: v5e
topology: v5e:2x2
jax: 0.10.0
libtpu: 0.0.40
codegen_flags: <defaults>
</compile_context>

<pallas_src>
import math

import jax
import jax.numpy as jnp
from jax import lax
from jax.experimental import pallas as pl
from jax.experimental.pallas import tpu as pltpu


def _make_tiab_kernel(features, eps):
    inv_scale = 1.0 / math.sqrt(features)

    def kernel(user_ref, src_ref, trg_ref, tmat_ref,
               wq_ref, bq_ref, wk_ref, bk_ref, wv_ref, bv_ref,
               w1_ref, b1_ref, w2_ref, b2_ref, gamma_ref, beta_ref,
               o_ref, kt_ref, v_ref):
        f32 = jnp.float32

        # ---- Hoisted per-batch K/V projections: run once per batch (first
        # query tile) and carried across qi iterations in VMEM scratch.
        @pl.when(pl.program_id(1) == 0)
        def _():
            x_k = src_ref[0]                               # (L, F)
            x_v = trg_ref[0]                               # (L, F)
            # K^T computed directly as Wk @ src^T (rhs-transposed contraction);
            # the relayout cost is paid once per batch, not once per tile.
            kt = lax.dot_general(wk_ref[...], x_k, (((1,), (1,)), ((), ())),
                                 preferred_element_type=f32)
            kt_ref[...] = kt + bk_ref[...]                 # (F, L); bk is (F, 1)
            v_ref[...] = (jnp.dot(x_v, wv_ref[...], preferred_element_type=f32)
                          + bv_ref[...])                   # (L, F)

        # ---- Per-tile query path.
        x_q = user_ref[0]                                  # (TQ, F)
        q = jnp.dot(x_q, wq_ref[...], preferred_element_type=f32) + bq_ref[...]

        # Scale q (TQ*F) rather than score (TQ*L); MXU result is unchanged.
        score = jnp.dot(q * inv_scale, kt_ref[...], preferred_element_type=f32)

        # softmax(score, -1) + softmax(t_mat, -1); reciprocal-then-multiply
        # (masks are intentionally ignored — see header note).
        s = jnp.exp(score - jnp.max(score, axis=-1, keepdims=True))
        inv_s = pl.reciprocal(jnp.sum(s, axis=-1, keepdims=True))
        t = tmat_ref[0].astype(f32)
        ts = jnp.exp(t - jnp.max(t, axis=-1, keepdims=True))
        inv_t = pl.reciprocal(jnp.sum(ts, axis=-1, keepdims=True))
        prob = s * inv_s + ts * inv_t                      # (TQ, L)

        attn = q + jnp.dot(prob, v_ref[...], preferred_element_type=f32)

        # FFN: w2(relu(w1(attn)))
        h = jnp.maximum(
            jnp.dot(attn, w1_ref[...], preferred_element_type=f32) + b1_ref[...],
            0.0)
        f = jnp.dot(h, w2_ref[...], preferred_element_type=f32) + b2_ref[...]

        # Residual + LayerNorm (biased variance, PyTorch eps default 1e-5).
        z = attn + f
        mu = jnp.mean(z, axis=-1, keepdims=True)
        var = jnp.mean(jnp.square(z - mu), axis=-1, keepdims=True)
        zn = (z - mu) * lax.rsqrt(var + eps)
        o_ref[0] = (zn * gamma_ref[...] + beta_ref[...]).astype(o_ref.dtype)

    return kernel


def _vmem_capacity_bytes():
    """Detected on-chip VMEM capacity; conservative (v7x-sized) fallback."""
    try:
        return int(pltpu.get_tpu_info().vmem_capacity_bytes)
    except Exception:
        return 64 * 1024 * 1024


def _pick_tq(L, F, H, itemsize, budget_bytes):
    """Largest 8-aligned query tile whose rough VMEM footprint fits the budget."""
    if L <= 512:
        return L

    def footprint(tq):
        weights = 4 * (3 * F * F + 2 * F * H + 6 * F + H)      # single-buffered f32
        kv_scratch = 4 * 2 * L * F                              # K^T + V scratch
        src_trg = 2 * 2 * L * F * itemsize                      # double-buffered src/trg
        per_tile = 2 * itemsize * (2 * tq * F + tq * L)         # user, out, t_mat (x2 bufs)
        temps = 4 * (3 * tq * L + 3 * tq * F + tq * H)          # f32 softmax/FFN temps
        return weights + kv_scratch + src_trg + per_tile + temps

    for tq in (512, 256, 128, 64, 32, 16, 8):
        if footprint(tq) <= budget_bytes:
            return tq
    return 8


def tiab_forward(user_emb, src_emb, trg_emb, t_mat, params,
                 attn_mask=None, pad_mask=None, *, tq=None, eps=1e-5):
    """user/src/trg_emb: (B, L, F); t_mat: (B, L, L); params in PyTorch layout."""
    # Masks are accepted for signature parity only: the PyTorch forward calls
    # masked_fill out-of-place and discards the result, so they never change
    # the output.  Mirrored here.
    del attn_mask, pad_mask

    B, L, F = user_emb.shape
    H = params["w1"].shape[0]                 # exp_factor * F
    dtype = user_emb.dtype
    itemsize = jnp.dtype(dtype).itemsize

    vmem_cap = _vmem_capacity_bytes()
    if tq is None:
        tq = _pick_tq(L, F, H, itemsize, int(vmem_cap * 0.6))
    assert tq == L or tq % 8 == 0, "query tile must be 8-aligned or the full sequence"
    grid = (B, pl.cdiv(L, tq))

    # Weight prep (once, outside the kernel):
    #   Wq/Wv/W1/W2 pre-transposed to (in, out) for plain MXU dots;
    #   Wk kept (out, in) since K^T is formed directly in-kernel;
    #   biases / LN params as (1, dim) rows, except bk which is an (F, 1) column.
    wq_t, wv_t = params["wq"].T, params["wv"].T
    wk = params["wk"]
    w1_t, w2_t = params["w1"].T, params["w2"].T
    bq = params["bq"].reshape(1, F)
    bk = params["bk"].reshape(F, 1)
    bv = params["bv"].reshape(1, F)
    b1 = params["b1"].reshape(1, H)
    b2 = params["b2"].reshape(1, F)
    gamma = params["gamma"].reshape(1, F)
    beta = params["beta"].reshape(1, F)

    kernel = _make_tiab_kernel(F, eps)

    resident = lambda b, qi: (0, 0)           # weights/biases stay in VMEM
    per_q = lambda b, qi: (b, qi, 0)          # query-tiled tensors
    per_b = lambda b, qi: (b, 0, 0)           # full-sequence src/trg tensors

    flops = B * (6 * L * F * F + 4 * L * L * F + 4 * L * F * H)
    bytes_accessed = itemsize * (4 * B * L * F + B * L * L) + 4 * (
        3 * F * F + 2 * F * H + 6 * F + H)

    def build_and_run(single_buffer_weights):
        if single_buffer_weights:
            # Resident blocks never change index — double-buffering them only
            # doubles their VMEM footprint.
            res_spec = lambda shape: pl.BlockSpec(shape, resident,
                                                  pipeline_mode=pl.Buffered(1))
        else:
            res_spec = lambda shape: pl.BlockSpec(shape, resident)

        return pl.pallas_call(
            kernel,
            out_shape=jax.ShapeDtypeStruct((B, L, F), dtype),
            grid_spec=pltpu.PrefetchScalarGridSpec(
                num_scalar_prefetch=0,
                grid=grid,
                in_specs=[
                    pl.BlockSpec((1, tq, F), per_q),     # user_emb (queries)
                    pl.BlockSpec((1, L, F), per_b),      # src_emb (keys)
                    pl.BlockSpec((1, L, F), per_b),      # trg_emb (values)
                    pl.BlockSpec((1, tq, L), per_q),     # t_mat
                    res_spec((F, F)),                    # Wq^T
                    res_spec((1, F)),                    # bq
                    res_spec((F, F)),                    # Wk (out, in)
                    res_spec((F, 1)),                    # bk (column)
                    res_spec((F, F)),                    # Wv^T
                    res_spec((1, F)),                    # bv
                    res_spec((F, H)),                    # W1^T
                    res_spec((1, H)),                    # b1
                    res_spec((H, F)),                    # W2^T
                    res_spec((1, F)),                    # b2
                    res_spec((1, F)),                    # LayerNorm gamma
                    res_spec((1, F)),                    # LayerNorm beta
                ],
                out_specs=pl.BlockSpec((1, tq, F), per_q),
                scratch_shapes=[
                    pltpu.VMEM((F, L), jnp.float32),     # K^T, carried per batch
                    pltpu.VMEM((L, F), jnp.float32),     # V,   carried per batch
                ],
            ),
            compiler_params=pltpu.CompilerParams(
                # Batch axis parallel for megacore sharding; qi must be
                # "arbitrary" so the K^T/V scratch is carried across tiles.
                dimension_semantics=("parallel", "arbitrary"),
                vmem_limit_bytes=min(int(vmem_cap * 0.75), 128 * 1024 * 1024),
            ),
            cost_estimate=pl.CostEstimate(
                flops=flops,
                transcendentals=2 * B * L * L,
                bytes_accessed=bytes_accessed,
            ),
        )(user_emb, src_emb, trg_emb, t_mat,
          wq_t, bq, wk, bk, wv_t, bv,
          w1_t, b1, w2_t, b2, gamma, beta)

    try:
        return build_and_run(True)
    except Exception:
        # TODO(synk): this JAX build rejected pl.Buffered(1) on resident blocks;
        # fall back to default (double-buffered) resident weights.
        return build_and_run(False)


if __name__ == "__main__":
    # Keep the XLA reference matmuls in true f32 for the correctness check.
    jax.config.update("jax_default_matmul_precision", "highest")

    B, L, F, exp_factor = 2, 8, 32, 4
    H = exp_factor * F

    key = jax.random.PRNGKey(0)
    keys = jax.random.split(key, 14)

    user_emb = jax.random.normal(keys[0], (B, L, F), jnp.float32)
    src_emb = jax.random.normal(keys[1], (B, L, F), jnp.float32)
    trg_emb = jax.random.normal(keys[2], (B, L, F), jnp.float32)
    t_mat = jax.random.normal(keys[3], (B, L, L), jnp.float32)

    def linear_init(kw, kb, out_dim, in_dim):
        bound = 1.0 / math.sqrt(in_dim)
        w = jax.random.uniform(kw, (out_dim, in_dim), jnp.float32, -bound, bound)
        b = jax.random.uniform(kb, (out_dim,), jnp.float32, -bound, bound)
        return w, b

    wq, bq = linear_init(keys[4], keys[5], F, F)
    wk, bk = linear_init(keys[6], keys[7], F, F)
    wv, bv = linear_init(keys[8], keys[9], F, F)
    w1, b1 = linear_init(keys[10], keys[11], H, F)
    w2, b2 = linear_init(keys[12], keys[13], F, H)
    gamma = jnp.ones((F,), jnp.float32)
    beta = jnp.zeros((F,), jnp.float32)

    params = dict(wq=wq, bq=bq, wk=wk, bk=bk, wv=wv, bv=bv,
                  w1=w1, b1=b1, w2=w2, b2=b2, gamma=gamma, beta=beta)

    # Masks are no-ops in the reference PyTorch forward (out-of-place masked_fill).
    attn_mask = jnp.tril(jnp.ones((L, L), jnp.float32))
    pad_mask = jnp.ones((B, 1, L), jnp.float32)

    out = tiab_forward(user_emb, src_emb, trg_emb, t_mat, params,
                       attn_mask=attn_mask, pad_mask=pad_mask)
    out = jax.block_until_ready(out)

    # Pure-JAX reference (inference semantics: dropout = identity, masks no-op).
    def ref_tiab(u, s_, tgt, tm, p):
        q = u @ p["wq"].T + p["bq"]
        k = s_ @ p["wk"].T + p["bk"]
        v = tgt @ p["wv"].T + p["bv"]
        score = jnp.einsum("blf,bmf->blm", q, k) / math.sqrt(q.shape[-1])
        prob = jax.nn.softmax(score, -1) + jax.nn.softmax(tm, -1)
        x = q + jnp.einsum("blm,bmf->blf", prob, v)
        h = jnp.maximum(x @ p["w1"].T + p["b1"], 0.0)
        f = h @ p["w2"].T + p["b2"]
        z = x + f
        mu = z.mean(-1, keepdims=True)
        var = ((z - mu) ** 2).mean(-1, keepdims=True)
        return (z - mu) / jnp.sqrt(var + 1e-5) * p["gamma"] + p["beta"]

    ref = ref_tiab(user_emb, src_emb, trg_emb, t_mat, params)
    assert out.shape == (B, L, F)
    err = float(jnp.max(jnp.abs(out - ref)))
    assert jnp.allclose(out, ref, atol=1e-4, rtol=1e-4), f"max abs err {err}"

    print("KERNEL_OK")
</pallas_src>

<mosaic_0001>
module attributes {stable_mosaic.version = 11 : i64} {
  func.func @kernel(%arg0: i32, %arg1: i32, %arg2: memref<1x8x32xf32, #tpu.memory_space<vmem>>, %arg3: memref<1x8x32xf32, #tpu.memory_space<vmem>>, %arg4: memref<1x8x32xf32, #tpu.memory_space<vmem>>, %arg5: memref<1x8x8xf32, #tpu.memory_space<vmem>>, %arg6: memref<32x32xf32, #tpu.memory_space<vmem>>, %arg7: memref<1x32xf32, #tpu.memory_space<vmem>>, %arg8: memref<32x32xf32, #tpu.memory_space<vmem>>, %arg9: memref<32x1xf32, #tpu.memory_space<vmem>>, %arg10: memref<32x32xf32, #tpu.memory_space<vmem>>, %arg11: memref<1x32xf32, #tpu.memory_space<vmem>>, %arg12: memref<32x128xf32, #tpu.memory_space<vmem>>, %arg13: memref<1x128xf32, #tpu.memory_space<vmem>>, %arg14: memref<128x32xf32, #tpu.memory_space<vmem>>, %arg15: memref<1x32xf32, #tpu.memory_space<vmem>>, %arg16: memref<1x32xf32, #tpu.memory_space<vmem>>, %arg17: memref<1x32xf32, #tpu.memory_space<vmem>>, %arg18: memref<1x8x32xf32, #tpu.memory_space<vmem>>, %arg19: memref<32x8xf32, #tpu.memory_space<vmem>>, %arg20: memref<8x32xf32, #tpu.memory_space<vmem>>) attributes {dimension_semantics = [#tpu.dimension_semantics<parallel>, #tpu.dimension_semantics<arbitrary>], iteration_bounds = array<i64: 2, 1>, scalar_prefetch = 0 : i64, scratch_operands = 2 : i64, tpu.core_type = #tpu.core_type<tc>, window_params = [{transform_indices = @transform_0, window_bounds = array<i64: 1, 8, 32>}, {transform_indices = @transform_1, window_bounds = array<i64: 1, 8, 32>}, {transform_indices = @transform_2, window_bounds = array<i64: 1, 8, 32>}, {transform_indices = @transform_3, window_bounds = array<i64: 1, 8, 8>}, {pipeline_mode = #tpu.pipeline_mode<synchronous>, transform_indices = @transform_4, window_bounds = array<i64: 32, 32>}, {pipeline_mode = #tpu.pipeline_mode<synchronous>, transform_indices = @transform_5, window_bounds = array<i64: 1, 32>}, {pipeline_mode = #tpu.pipeline_mode<synchronous>, transform_indices = @transform_6, window_bounds = array<i64: 32, 32>}, {pipeline_mode = #tpu.pipeline_mode<synchronous>, transform_indices = @transform_7, window_bounds = array<i64: 32, 1>}, {pipeline_mode = #tpu.pipeline_mode<synchronous>, transform_indices = @transform_8, window_bounds = array<i64: 32, 32>}, {pipeline_mode = #tpu.pipeline_mode<synchronous>, transform_indices = @transform_9, window_bounds = array<i64: 1, 32>}, {pipeline_mode = #tpu.pipeline_mode<synchronous>, transform_indices = @transform_10, window_bounds = array<i64: 32, 128>}, {pipeline_mode = #tpu.pipeline_mode<synchronous>, transform_indices = @transform_11, window_bounds = array<i64: 1, 128>}, {pipeline_mode = #tpu.pipeline_mode<synchronous>, transform_indices = @transform_12, window_bounds = array<i64: 128, 32>}, {pipeline_mode = #tpu.pipeline_mode<synchronous>, transform_indices = @transform_13, window_bounds = array<i64: 1, 32>}, {pipeline_mode = #tpu.pipeline_mode<synchronous>, transform_indices = @transform_14, window_bounds = array<i64: 1, 32>}, {pipeline_mode = #tpu.pipeline_mode<synchronous>, transform_indices = @transform_15, window_bounds = array<i64: 1, 32>}, {transform_indices = @transform_16, window_bounds = array<i64: 1, 8, 32>}]} {
    %c0_i32 = arith.constant 0 : i32
    %0 = arith.cmpi eq, %arg1, %c0_i32 : i32
    %1 = arith.extui %0 : i1 to i32
    %c0_i32_0 = arith.constant 0 : i32
    %2 = arith.cmpi ne, %1, %c0_i32_0 : i32
    scf.if %2 {
      %c0_44 = arith.constant 0 : index
      %c0_45 = arith.constant 0 : index
      %c0_46 = arith.constant 0 : index
      %80 = vector.load %arg3[%c0_44, %c0_45, %c0_46] : memref<1x8x32xf32, #tpu.memory_space<vmem>>, vector<1x8x32xf32>
      %81 = vector.shape_cast %80 : vector<1x8x32xf32> to vector<8x32xf32>
      %c0_47 = arith.constant 0 : index
      %c0_48 = arith.constant 0 : index
      %c0_49 = arith.constant 0 : index
      %82 = vector.load %arg4[%c0_47, %c0_48, %c0_49] : memref<1x8x32xf32, #tpu.memory_space<vmem>>, vector<1x8x32xf32>
      %83 = vector.shape_cast %82 : vector<1x8x32xf32> to vector<8x32xf32>
      %c0_50 = arith.constant 0 : index
      %c0_51 = arith.constant 0 : index
      %84 = vector.load %arg8[%c0_50, %c0_51] : memref<32x32xf32, #tpu.memory_space<vmem>>, vector<32x32xf32>
      %cst_52 = arith.constant dense<0.000000e+00> : vector<32x8xf32>
      %85 = tpu.matmul %84, %81, %cst_52 {dimension_numbers = #tpu.dot_dimension_numbers<[1], [1], [0], [0], [0, 0, 1, 0], [], []>, precision = #tpu.contract_precision<fp32>} : vector<32x32xf32>, vector<8x32xf32>, vector<32x8xf32> -> vector<32x8xf32>
      %c0_53 = arith.constant 0 : index
      %c0_54 = arith.constant 0 : index
      %86 = vector.load %arg9[%c0_53, %c0_54] : memref<32x1xf32, #tpu.memory_space<vmem>>, vector<32x1xf32>
      %87 = vector.broadcast %86 : vector<32x1xf32> to vector<32x8xf32>
      %88 = arith.addf %85, %87 : vector<32x8xf32>
      %c0_55 = arith.constant 0 : index
      %c0_56 = arith.constant 0 : index
      %89 = vector.load %arg19[%c0_55, %c0_56] : memref<32x8xf32, #tpu.memory_space<vmem>>, vector<32x8xf32>
      tpu.vector_store %arg19[%c0_55, %c0_56], %88 {strides = array<i32>} : memref<32x8xf32, #tpu.memory_space<vmem>>, vector<32x8xf32>,
      %c0_57 = arith.constant 0 : index
      %c0_58 = arith.constant 0 : index
      %90 = vector.load %arg10[%c0_57, %c0_58] : memref<32x32xf32, #tpu.memory_space<vmem>>, vector<32x32xf32>
      %cst_59 = arith.constant dense<0.000000e+00> : vector<8x32xf32>
      %91 = tpu.matmul %83, %90, %cst_59 {dimension_numbers = #tpu.dot_dimension_numbers<[1], [0], [0], [1], [0, 0, 1, 1], [], []>, precision = #tpu.contract_precision<fp32>} : vector<8x32xf32>, vector<32x32xf32>, vector<8x32xf32> -> vector<8x32xf32>
      %c0_60 = arith.constant 0 : index
      %c0_61 = arith.constant 0 : index
      %92 = vector.load %arg11[%c0_60, %c0_61] : memref<1x32xf32, #tpu.memory_space<vmem>>, vector<1x32xf32>
      %93 = vector.broadcast %92 : vector<1x32xf32> to vector<8x32xf32>
      %94 = arith.addf %91, %93 : vector<8x32xf32>
      %c0_62 = arith.constant 0 : index
      %c0_63 = arith.constant 0 : index
      %95 = vector.load %arg20[%c0_62, %c0_63] : memref<8x32xf32, #tpu.memory_space<vmem>>, vector<8x32xf32>
      tpu.vector_store %arg20[%c0_62, %c0_63], %94 {strides = array<i32>} : memref<8x32xf32, #tpu.memory_space<vmem>>, vector<8x32xf32>,
    } else {
    }
    %c0 = arith.constant 0 : index
    %c0_1 = arith.constant 0 : index
    %c0_2 = arith.constant 0 : index
    %3 = vector.load %arg2[%c0, %c0_1, %c0_2] : memref<1x8x32xf32, #tpu.memory_space<vmem>>, vector<1x8x32xf32>
    %4 = vector.shape_cast %3 : vector<1x8x32xf32> to vector<8x32xf32>
    %c0_3 = arith.constant 0 : index
    %c0_4 = arith.constant 0 : index
    %5 = vector.load %arg6[%c0_3, %c0_4] : memref<32x32xf32, #tpu.memory_space<vmem>>, vector<32x32xf32>
    %cst = arith.constant dense<0.000000e+00> : vector<8x32xf32>
    %6 = tpu.matmul %4, %5, %cst {dimension_numbers = #tpu.dot_dimension_numbers<[1], [0], [0], [1], [0, 0, 1, 1], [], []>, precision = #tpu.contract_precision<fp32>} : vector<8x32xf32>, vector<32x32xf32>, vector<8x32xf32> -> vector<8x32xf32>
    %c0_5 = arith.constant 0 : index
    %c0_6 = arith.constant 0 : index
    %7 = vector.load %arg7[%c0_5, %c0_6] : memref<1x32xf32, #tpu.memory_space<vmem>>, vector<1x32xf32>
    %8 = vector.broadcast %7 : vector<1x32xf32> to vector<8x32xf32>
    %9 = arith.addf %6, %8 : vector<8x32xf32>
    %cst_7 = arith.constant 0.176776692 : f32
    %10 = vector.broadcast %cst_7 : f32 to vector<8x32xf32>
    %11 = arith.mulf %9, %10 : vector<8x32xf32>
    %c0_8 = arith.constant 0 : index
    %c0_9 = arith.constant 0 : index
    %12 = vector.load %arg19[%c0_8, %c0_9] : memref<32x8xf32, #tpu.memory_space<vmem>>, vector<32x8xf32>
    %cst_10 = arith.constant dense<0.000000e+00> : vector<8x8xf32>
    %13 = tpu.matmul %11, %12, %cst_10 {dimension_numbers = #tpu.dot_dimension_numbers<[1], [0], [0], [1], [0, 0, 1, 1], [], []>, precision = #tpu.contract_precision<fp32>} : vector<8x32xf32>, vector<32x8xf32>, vector<8x8xf32> -> vector<8x8xf32>
    %cst_11 = arith.constant dense<0xFF800000> : vector<8xf32>
    %14 = vector.multi_reduction <maximumf>, %13, %cst_11 [1] : vector<8x8xf32> to vector<8xf32>
    %15 = vector.shape_cast %14 : vector<8xf32> to vector<8x1xf32>
    %16 = vector.broadcast %15 : vector<8x1xf32> to vector<8x8xf32>
    %17 = arith.subf %13, %16 : vector<8x8xf32>
    %18 = math.exp %17 : vector<8x8xf32>
    %cst_12 = arith.constant dense<0.000000e+00> : vector<8xf32>
    %19 = vector.multi_reduction <add>, %18, %cst_12 [1] : vector<8x8xf32> to vector<8xf32>
    %20 = vector.shape_cast %19 : vector<8xf32> to vector<8x1xf32>
    %21 = tpu.reciprocal %20 : vector<8x1xf32> -> vector<8x1xf32>
    %c0_13 = arith.constant 0 : index
    %c0_14 = arith.constant 0 : index
    %c0_15 = arith.constant 0 : index
    %22 = vector.load %arg5[%c0_13, %c0_14, %c0_15] : memref<1x8x8xf32, #tpu.memory_space<vmem>>, vector<1x8x8xf32>
    %23 = vector.shape_cast %22 : vector<1x8x8xf32> to vector<8x8xf32>
    %cst_16 = arith.constant dense<0xFF800000> : vector<8xf32>
    %24 = vector.multi_reduction <maximumf>, %23, %cst_16 [1] : vector<8x8xf32> to vector<8xf32>
    %25 = vector.shape_cast %24 : vector<8xf32> to vector<8x1xf32>
    %26 = vector.broadcast %25 : vector<8x1xf32> to vector<8x8xf32>
    %27 = arith.subf %23, %26 : vector<8x8xf32>
    %28 = math.exp %27 : vector<8x8xf32>
    %cst_17 = arith.constant dense<0.000000e+00> : vector<8xf32>
    %29 = vector.multi_reduction <add>, %28, %cst_17 [1] : vector<8x8xf32> to vector<8xf32>
    %30 = vector.shape_cast %29 : vector<8xf32> to vector<8x1xf32>
    %31 = tpu.reciprocal %30 : vector<8x1xf32> -> vector<8x1xf32>
    %32 = vector.broadcast %21 : vector<8x1xf32> to vector<8x8xf32>
    %33 = arith.mulf %18, %32 : vector<8x8xf32>
    %34 = vector.broadcast %31 : vector<8x1xf32> to vector<8x8xf32>
    %35 = arith.mulf %28, %34 : vector<8x8xf32>
    %36 = arith.addf %33, %35 : vector<8x8xf32>
    %c0_18 = arith.constant 0 : index
    %c0_19 = arith.constant 0 : index
    %37 = vector.load %arg20[%c0_18, %c0_19] : memref<8x32xf32, #tpu.memory_space<vmem>>, vector<8x32xf32>
    %cst_20 = arith.constant dense<0.000000e+00> : vector<8x32xf32>
    %38 = tpu.matmul %36, %37, %cst_20 {dimension_numbers = #tpu.dot_dimension_numbers<[1], [0], [0], [1], [0, 0, 1, 1], [], []>, precision = #tpu.contract_precision<fp32>} : vector<8x8xf32>, vector<8x32xf32>, vector<8x32xf32> -> vector<8x32xf32>
    %39 = arith.addf %9, %38 : vector<8x32xf32>
    %c0_21 = arith.constant 0 : index
    %c0_22 = arith.constant 0 : index
    %40 = vector.load %arg12[%c0_21, %c0_22] : memref<32x128xf32, #tpu.memory_space<vmem>>, vector<32x128xf32>
    %cst_23 = arith.constant dense<0.000000e+00> : vector<8x128xf32>
    %41 = tpu.matmul %39, %40, %cst_23 {dimension_numbers = #tpu.dot_dimension_numbers<[1], [0], [0], [1], [0, 0, 1, 1], [], []>, precision = #tpu.contract_precision<fp32>} : vector<8x32xf32>, vector<32x128xf32>, vector<8x128xf32> -> vector<8x128xf32>
    %c0_24 = arith.constant 0 : index
    %c0_25 = arith.constant 0 : index
    %42 = vector.load %arg13[%c0_24, %c0_25] : memref<1x128xf32, #tpu.memory_space<vmem>>, vector<1x128xf32>
    %43 = vector.broadcast %42 : vector<1x128xf32> to vector<8x128xf32>
    %44 = arith.addf %41, %43 : vector<8x128xf32>
    %cst_26 = arith.constant 0.000000e+00 : f32
    %45 = vector.broadcast %cst_26 : f32 to vector<8x128xf32>
    %46 = arith.maximumf %44, %45 : vector<8x128xf32>
    %c0_27 = arith.constant 0 : index
    %c0_28 = arith.constant 0 : index
    %47 = vector.load %arg14[%c0_27, %c0_28] : memref<128x32xf32, #tpu.memory_space<vmem>>, vector<128x32xf32>
    %cst_29 = arith.constant dense<0.000000e+00> : vector<8x32xf32>
    %48 = tpu.matmul %46, %47, %cst_29 {dimension_numbers = #tpu.dot_dimension_numbers<[1], [0], [0], [1], [0, 0, 1, 1], [], []>, precision = #tpu.contract_precision<fp32>} : vector<8x128xf32>, vector<128x32xf32>, vector<8x32xf32> -> vector<8x32xf32>
    %c0_30 = arith.constant 0 : index
    %c0_31 = arith.constant 0 : index
    %49 = vector.load %arg15[%c0_30, %c0_31] : memref<1x32xf32, #tpu.memory_space<vmem>>, vector<1x32xf32>
    %50 = vector.broadcast %49 : vector<1x32xf32> to vector<8x32xf32>
    %51 = arith.addf %48, %50 : vector<8x32xf32>
    %52 = arith.addf %39, %51 : vector<8x32xf32>
    %cst_32 = arith.constant dense<0.000000e+00> : vector<8xf32>
    %53 = vector.multi_reduction <add>, %52, %cst_32 [1] : vector<8x32xf32> to vector<8xf32>
    %54 = vector.shape_cast %53 : vector<8xf32> to vector<8x1xf32>
    %cst_33 = arith.constant 3.200000e+01 : f32
    %55 = vector.broadcast %cst_33 : f32 to vector<8x1xf32>
    %56 = arith.divf %54, %55 : vector<8x1xf32>
    %57 = vector.broadcast %56 : vector<8x1xf32> to vector<8x32xf32>
    %58 = arith.subf %52, %57 : vector<8x32xf32>
    %59 = arith.mulf %58, %58 : vector<8x32xf32>
    %cst_34 = arith.constant dense<0.000000e+00> : vector<8xf32>
    %60 = vector.multi_reduction <add>, %59, %cst_34 [1] : vector<8x32xf32> to vector<8xf32>
    %61 = vector.shape_cast %60 : vector<8xf32> to vector<8x1xf32>
    %cst_35 = arith.constant 3.200000e+01 : f32
    %62 = vector.broadcast %cst_35 : f32 to vector<8x1xf32>
    %63 = arith.divf %61, %62 : vector<8x1xf32>
    %64 = vector.broadcast %56 : vector<8x1xf32> to vector<8x32xf32>
    %65 = arith.subf %52, %64 : vector<8x32xf32>
    %cst_36 = arith.constant 9.99999974E-6 : f32
    %66 = vector.broadcast %cst_36 : f32 to vector<8x1xf32>
    %67 = arith.addf %63, %66 : vector<8x1xf32>
    %68 = math.rsqrt %67 : vector<8x1xf32>
    %69 = vector.broadcast %68 : vector<8x1xf32> to vector<8x32xf32>
    %70 = arith.mulf %65, %69 : vector<8x32xf32>
    %c0_37 = arith.constant 0 : index
    %c0_38 = arith.constant 0 : index
    %71 = vector.load %arg16[%c0_37, %c0_38] : memref<1x32xf32, #tpu.memory_space<vmem>>, vector<1x32xf32>
    %72 = vector.broadcast %71 : vector<1x32xf32> to vector<8x32xf32>
    %73 = arith.mulf %70, %72 : vector<8x32xf32>
    %c0_39 = arith.constant 0 : index
    %c0_40 = arith.constant 0 : index
    %74 = vector.load %arg17[%c0_39, %c0_40] : memref<1x32xf32, #tpu.memory_space<vmem>>, vector<1x32xf32>
    %75 = vector.broadcast %74 : vector<1x32xf32> to vector<8x32xf32>
    %76 = arith.addf %73, %75 : vector<8x32xf32>
    %c0_41 = arith.constant 0 : index
    %c0_42 = arith.constant 0 : index
    %c0_43 = arith.constant 0 : index
    %77 = vector.load %arg18[%c0_41, %c0_42, %c0_43] : memref<1x8x32xf32, #tpu.memory_space<vmem>>, vector<1x8x32xf32>
    %78 = vector.shape_cast %77 : vector<1x8x32xf32> to vector<8x32xf32>
    %79 = vector.shape_cast %76 : vector<8x32xf32> to vector<1x8x32xf32>
    tpu.vector_store %arg18[%c0_41, %c0_42, %c0_43], %79 {strides = array<i32>} : memref<1x8x32xf32, #tpu.memory_space<vmem>>, vector<1x8x32xf32>,
    return
  }
  func.func @transform_0(%arg0: i32, %arg1: i32) -> (i32, i32, i32) {
    %c0_i32 = arith.constant 0 : i32
    %c0_i32_0 = arith.constant 0 : i32
    return %arg0, %arg1, %c0_i32 : i32, i32, i32
  }
  func.func @transform_1(%arg0: i32, %arg1: i32) -> (i32, i32, i32) {
    %c0_i32 = arith.constant 0 : i32
    %c0_i32_0 = arith.constant 0 : i32
    %c0_i32_1 = arith.constant 0 : i32
    return %arg0, %c0_i32, %c0_i32_0 : i32, i32, i32
  }
  func.func @transform_2(%arg0: i32, %arg1: i32) -> (i32, i32, i32) {
    %c0_i32 = arith.constant 0 : i32
    %c0_i32_0 = arith.constant 0 : i32
    %c0_i32_1 = arith.constant 0 : i32
    return %arg0, %c0_i32, %c0_i32_0 : i32, i32, i32
  }
  func.func @transform_3(%arg0: i32, %arg1: i32) -> (i32, i32, i32) {
    %c0_i32 = arith.constant 0 : i32
    %c0_i32_0 = arith.constant 0 : i32
    return %arg0, %arg1, %c0_i32 : i32, i32, i32
  }
  func.func @transform_4(%arg0: i32, %arg1: i32) -> (i32, i32) {
    %c0_i32 = arith.constant 0 : i32
    %c0_i32_0 = arith.constant 0 : i32
    %c0_i32_1 = arith.constant 0 : i32
    return %c0_i32, %c0_i32_0 : i32, i32
  }
  func.func @transform_5(%arg0: i32, %arg1: i32) -> (i32, i32) {
    %c0_i32 = arith.constant 0 : i32
    %c0_i32_0 = arith.constant 0 : i32
    %c0_i32_1 = arith.constant 0 : i32
    return %c0_i32, %c0_i32_0 : i32, i32
  }
  func.func @transform_6(%arg0: i32, %arg1: i32) -> (i32, i32) {
    %c0_i32 = arith.constant 0 : i32
    %c0_i32_0 = arith.constant 0 : i32
    %c0_i32_1 = arith.constant 0 : i32
    return %c0_i32, %c0_i32_0 : i32, i32
  }
  func.func @transform_7(%arg0: i32, %arg1: i32) -> (i32, i32) {
    %c0_i32 = arith.constant 0 : i32
    %c0_i32_0 = arith.constant 0 : i32
    %c0_i32_1 = arith.constant 0 : i32
    return %c0_i32, %c0_i32_0 : i32, i32
  }
  func.func @transform_8(%arg0: i32, %arg1: i32) -> (i32, i32) {
    %c0_i32 = arith.constant 0 : i32
    %c0_i32_0 = arith.constant 0 : i32
    %c0_i32_1 = arith.constant 0 : i32
    return %c0_i32, %c0_i32_0 : i32, i32
  }
  func.func @transform_9(%arg0: i32, %arg1: i32) -> (i32, i32) {
    %c0_i32 = arith.constant 0 : i32
    %c0_i32_0 = arith.constant 0 : i32
    %c0_i32_1 = arith.constant 0 : i32
    return %c0_i32, %c0_i32_0 : i32, i32
  }
  func.func @transform_10(%arg0: i32, %arg1: i32) -> (i32, i32) {
    %c0_i32 = arith.constant 0 : i32
    %c0_i32_0 = arith.constant 0 : i32
    %c0_i32_1 = arith.constant 0 : i32
    return %c0_i32, %c0_i32_0 : i32, i32
  }
  func.func @transform_11(%arg0: i32, %arg1: i32) -> (i32, i32) {
    %c0_i32 = arith.constant 0 : i32
    %c0_i32_0 = arith.constant 0 : i32
    %c0_i32_1 = arith.constant 0 : i32
    return %c0_i32, %c0_i32_0 : i32, i32
  }
  func.func @transform_12(%arg0: i32, %arg1: i32) -> (i32, i32) {
    %c0_i32 = arith.constant 0 : i32
    %c0_i32_0 = arith.constant 0 : i32
    %c0_i32_1 = arith.constant 0 : i32
    return %c0_i32, %c0_i32_0 : i32, i32
  }
  func.func @transform_13(%arg0: i32, %arg1: i32) -> (i32, i32) {
    %c0_i32 = arith.constant 0 : i32
    %c0_i32_0 = arith.constant 0 : i32
    %c0_i32_1 = arith.constant 0 : i32
    return %c0_i32, %c0_i32_0 : i32, i32
  }
  func.func @transform_14(%arg0: i32, %arg1: i32) -> (i32, i32) {
    %c0_i32 = arith.constant 0 : i32
    %c0_i32_0 = arith.constant 0 : i32
    %c0_i32_1 = arith.constant 0 : i32
    return %c0_i32, %c0_i32_0 : i32, i32
  }
  func.func @transform_15(%arg0: i32, %arg1: i32) -> (i32, i32) {
    %c0_i32 = arith.constant 0 : i32
    %c0_i32_0 = arith.constant 0 : i32
    %c0_i32_1 = arith.constant 0 : i32
    return %c0_i32, %c0_i32_0 : i32, i32
  }
  func.func @transform_16(%arg0: i32, %arg1: i32) -> (i32, i32, i32) {
    %c0_i32 = arith.constant 0 : i32
    %c0_i32_0 = arith.constant 0 : i32
    return %arg0, %arg1, %c0_i32 : i32, i32, i32
  }
}

module attributes {stable_mosaic.version = 11 : i64} {
  func.func @kernel(%arg0: i32, %arg1: i32, %arg2: memref<1x8x32xf32, #tpu.memory_space<vmem>>, %arg3: memref<1x8x32xf32, #tpu.memory_space<vmem>>, %arg4: memref<1x8x32xf32, #tpu.memory_space<vmem>>, %arg5: memref<1x8x8xf32, #tpu.memory_space<vmem>>, %arg6: memref<32x32xf32, #tpu.memory_space<vmem>>, %arg7: memref<1x32xf32, #tpu.memory_space<vmem>>, %arg8: memref<32x32xf32, #tpu.memory_space<vmem>>, %arg9: memref<32x1xf32, #tpu.memory_space<vmem>>, %arg10: memref<32x32xf32, #tpu.memory_space<vmem>>, %arg11: memref<1x32xf32, #tpu.memory_space<vmem>>, %arg12: memref<32x128xf32, #tpu.memory_space<vmem>>, %arg13: memref<1x128xf32, #tpu.memory_space<vmem>>, %arg14: memref<128x32xf32, #tpu.memory_space<vmem>>, %arg15: memref<1x32xf32, #tpu.memory_space<vmem>>, %arg16: memref<1x32xf32, #tpu.memory_space<vmem>>, %arg17: memref<1x32xf32, #tpu.memory_space<vmem>>, %arg18: memref<1x8x32xf32, #tpu.memory_space<vmem>>, %arg19: memref<32x8xf32, #tpu.memory_space<vmem>>, %arg20: memref<8x32xf32, #tpu.memory_space<vmem>>) attributes {dimension_semantics = [#tpu.dimension_semantics<parallel>, #tpu.dimension_semantics<arbitrary>], iteration_bounds = array<i64: 2, 1>, scalar_prefetch = 0 : i64, scratch_operands = 2 : i64, tpu.core_type = #tpu.core_type<tc>, window_params = [{transform_indices = @transform_0, window_bounds = array<i64: 1, 8, 32>}, {transform_indices = @transform_1, window_bounds = array<i64: 1, 8, 32>}, {transform_indices = @transform_2, window_bounds = array<i64: 1, 8, 32>}, {transform_indices = @transform_3, window_bounds = array<i64: 1, 8, 8>}, {pipeline_mode = #tpu.pipeline_mode<synchronous>, transform_indices = @transform_4, window_bounds = array<i64: 32, 32>}, {pipeline_mode = #tpu.pipeline_mode<synchronous>, transform_indices = @transform_5, window_bounds = array<i64: 1, 32>}, {pipeline_mode = #tpu.pipeline_mode<synchronous>, transform_indices = @transform_6, window_bounds = array<i64: 32, 32>}, {pipeline_mode = #tpu.pipeline_mode<synchronous>, transform_indices = @transform_7, window_bounds = array<i64: 32, 1>}, {pipeline_mode = #tpu.pipeline_mode<synchronous>, transform_indices = @transform_8, window_bounds = array<i64: 32, 32>}, {pipeline_mode = #tpu.pipeline_mode<synchronous>, transform_indices = @transform_9, window_bounds = array<i64: 1, 32>}, {pipeline_mode = #tpu.pipeline_mode<synchronous>, transform_indices = @transform_10, window_bounds = array<i64: 32, 128>}, {pipeline_mode = #tpu.pipeline_mode<synchronous>, transform_indices = @transform_11, window_bounds = array<i64: 1, 128>}, {pipeline_mode = #tpu.pipeline_mode<synchronous>, transform_indices = @transform_12, window_bounds = array<i64: 128, 32>}, {pipeline_mode = #tpu.pipeline_mode<synchronous>, transform_indices = @transform_13, window_bounds = array<i64: 1, 32>}, {pipeline_mode = #tpu.pipeline_mode<synchronous>, transform_indices = @transform_14, window_bounds = array<i64: 1, 32>}, {pipeline_mode = #tpu.pipeline_mode<synchronous>, transform_indices = @transform_15, window_bounds = array<i64: 1, 32>}, {transform_indices = @transform_16, window_bounds = array<i64: 1, 8, 32>}]} {
    %c0_i32 = arith.constant 0 : i32
    %0 = arith.cmpi eq, %arg1, %c0_i32 : i32
    %1 = arith.extui %0 : i1 to i32
    %c0_i32_0 = arith.constant 0 : i32
    %2 = arith.cmpi ne, %1, %c0_i32_0 : i32
    scf.if %2 {
      %c0_44 = arith.constant 0 : index
      %c0_45 = arith.constant 0 : index
      %c0_46 = arith.constant 0 : index
      %80 = vector.load %arg3[%c0_44, %c0_45, %c0_46] : memref<1x8x32xf32, #tpu.memory_space<vmem>>, vector<1x8x32xf32>
      %81 = vector.shape_cast %80 : vector<1x8x32xf32> to vector<8x32xf32>
      %c0_47 = arith.constant 0 : index
      %c0_48 = arith.constant 0 : index
      %c0_49 = arith.constant 0 : index
      %82 = vector.load %arg4[%c0_47, %c0_48, %c0_49] : memref<1x8x32xf32, #tpu.memory_space<vmem>>, vector<1x8x32xf32>
      %83 = vector.shape_cast %82 : vector<1x8x32xf32> to vector<8x32xf32>
      %c0_50 = arith.constant 0 : index
      %c0_51 = arith.constant 0 : index
      %84 = vector.load %arg8[%c0_50, %c0_51] : memref<32x32xf32, #tpu.memory_space<vmem>>, vector<32x32xf32>
      %cst_52 = arith.constant dense<0.000000e+00> : vector<32x8xf32>
      %85 = tpu.matmul %84, %81, %cst_52 {dimension_numbers = #tpu.dot_dimension_numbers<[1], [1], [0], [0], [0, 0, 1, 0], [], []>, precision = #tpu.contract_precision<fp32>} : vector<32x32xf32>, vector<8x32xf32>, vector<32x8xf32> -> vector<32x8xf32>
      %c0_53 = arith.constant 0 : index
      %c0_54 = arith.constant 0 : index
      %86 = vector.load %arg9[%c0_53, %c0_54] : memref<32x1xf32, #tpu.memory_space<vmem>>, vector<32x1xf32>
      %87 = vector.broadcast %86 : vector<32x1xf32> to vector<32x8xf32>
      %88 = arith.addf %85, %87 : vector<32x8xf32>
      %c0_55 = arith.constant 0 : index
      %c0_56 = arith.constant 0 : index
      %89 = vector.load %arg19[%c0_55, %c0_56] : memref<32x8xf32, #tpu.memory_space<vmem>>, vector<32x8xf32>
      tpu.vector_store %arg19[%c0_55, %c0_56], %88 {strides = array<i32>} : memref<32x8xf32, #tpu.memory_space<vmem>>, vector<32x8xf32>,
      %c0_57 = arith.constant 0 : index
      %c0_58 = arith.constant 0 : index
      %90 = vector.load %arg10[%c0_57, %c0_58] : memref<32x32xf32, #tpu.memory_space<vmem>>, vector<32x32xf32>
      %cst_59 = arith.constant dense<0.000000e+00> : vector<8x32xf32>
      %91 = tpu.matmul %83, %90, %cst_59 {dimension_numbers = #tpu.dot_dimension_numbers<[1], [0], [0], [1], [0, 0, 1, 1], [], []>, precision = #tpu.contract_precision<fp32>} : vector<8x32xf32>, vector<32x32xf32>, vector<8x32xf32> -> vector<8x32xf32>
      %c0_60 = arith.constant 0 : index
      %c0_61 = arith.constant 0 : index
      %92 = vector.load %arg11[%c0_60, %c0_61] : memref<1x32xf32, #tpu.memory_space<vmem>>, vector<1x32xf32>
      %93 = vector.broadcast %92 : vector<1x32xf32> to vector<8x32xf32>
      %94 = arith.addf %91, %93 : vector<8x32xf32>
      %c0_62 = arith.constant 0 : index
      %c0_63 = arith.constant 0 : index
      %95 = vector.load %arg20[%c0_62, %c0_63] : memref<8x32xf32, #tpu.memory_space<vmem>>, vector<8x32xf32>
      tpu.vector_store %arg20[%c0_62, %c0_63], %94 {strides = array<i32>} : memref<8x32xf32, #tpu.memory_space<vmem>>, vector<8x32xf32>,
    } else {
    }
    %c0 = arith.constant 0 : index
    %c0_1 = arith.constant 0 : index
    %c0_2 = arith.constant 0 : index
    %3 = vector.load %arg2[%c0, %c0_1, %c0_2] : memref<1x8x32xf32, #tpu.memory_space<vmem>>, vector<1x8x32xf32>
    %4 = vector.shape_cast %3 : vector<1x8x32xf32> to vector<8x32xf32>
    %c0_3 = arith.constant 0 : index
    %c0_4 = arith.constant 0 : index
    %5 = vector.load %arg6[%c0_3, %c0_4] : memref<32x32xf32, #tpu.memory_space<vmem>>, vector<32x32xf32>
    %cst = arith.constant dense<0.000000e+00> : vector<8x32xf32>
    %6 = tpu.matmul %4, %5, %cst {dimension_numbers = #tpu.dot_dimension_numbers<[1], [0], [0], [1], [0, 0, 1, 1], [], []>, precision = #tpu.contract_precision<fp32>} : vector<8x32xf32>, vector<32x32xf32>, vector<8x32xf32> -> vector<8x32xf32>
    %c0_5 = arith.constant 0 : index
    %c0_6 = arith.constant 0 : index
    %7 = vector.load %arg7[%c0_5, %c0_6] : memref<1x32xf32, #tpu.memory_space<vmem>>, vector<1x32xf32>
    %8 = vector.broadcast %7 : vector<1x32xf32> to vector<8x32xf32>
    %9 = arith.addf %6, %8 : vector<8x32xf32>
    %cst_7 = arith.constant 0.176776692 : f32
    %10 = vector.broadcast %cst_7 : f32 to vector<8x32xf32>
    %11 = arith.mulf %9, %10 : vector<8x32xf32>
    %c0_8 = arith.constant 0 : index
    %c0_9 = arith.constant 0 : index
    %12 = vector.load %arg19[%c0_8, %c0_9] : memref<32x8xf32, #tpu.memory_space<vmem>>, vector<32x8xf32>
    %cst_10 = arith.constant dense<0.000000e+00> : vector<8x8xf32>
    %13 = tpu.matmul %11, %12, %cst_10 {dimension_numbers = #tpu.dot_dimension_numbers<[1], [0], [0], [1], [0, 0, 1, 1], [], []>, precision = #tpu.contract_precision<fp32>} : vector<8x32xf32>, vector<32x8xf32>, vector<8x8xf32> -> vector<8x8xf32>
    %cst_11 = arith.constant dense<0xFF800000> : vector<8xf32>
    %14 = vector.multi_reduction <maximumf>, %13, %cst_11 [1] : vector<8x8xf32> to vector<8xf32>
    %15 = vector.shape_cast %14 : vector<8xf32> to vector<8x1xf32>
    %16 = vector.broadcast %15 : vector<8x1xf32> to vector<8x8xf32>
    %17 = arith.subf %13, %16 : vector<8x8xf32>
    %18 = math.exp %17 : vector<8x8xf32>
    %cst_12 = arith.constant dense<0.000000e+00> : vector<8xf32>
    %19 = vector.multi_reduction <add>, %18, %cst_12 [1] : vector<8x8xf32> to vector<8xf32>
    %20 = vector.shape_cast %19 : vector<8xf32> to vector<8x1xf32>
    %21 = tpu.reciprocal %20 : vector<8x1xf32> -> vector<8x1xf32>
    %c0_13 = arith.constant 0 : index
    %c0_14 = arith.constant 0 : index
    %c0_15 = arith.constant 0 : index
    %22 = vector.load %arg5[%c0_13, %c0_14, %c0_15] : memref<1x8x8xf32, #tpu.memory_space<vmem>>, vector<1x8x8xf32>
    %23 = vector.shape_cast %22 : vector<1x8x8xf32> to vector<8x8xf32>
    %cst_16 = arith.constant dense<0xFF800000> : vector<8xf32>
    %24 = vector.multi_reduction <maximumf>, %23, %cst_16 [1] : vector<8x8xf32> to vector<8xf32>
    %25 = vector.shape_cast %24 : vector<8xf32> to vector<8x1xf32>
    %26 = vector.broadcast %25 : vector<8x1xf32> to vector<8x8xf32>
    %27 = arith.subf %23, %26 : vector<8x8xf32>
    %28 = math.exp %27 : vector<8x8xf32>
    %cst_17 = arith.constant dense<0.000000e+00> : vector<8xf32>
    %29 = vector.multi_reduction <add>, %28, %cst_17 [1] : vector<8x8xf32> to vector<8xf32>
    %30 = vector.shape_cast %29 : vector<8xf32> to vector<8x1xf32>
    %31 = tpu.reciprocal %30 : vector<8x1xf32> -> vector<8x1xf32>
    %32 = vector.broadcast %21 : vector<8x1xf32> to vector<8x8xf32>
    %33 = arith.mulf %18, %32 : vector<8x8xf32>
    %34 = vector.broadcast %31 : vector<8x1xf32> to vector<8x8xf32>
    %35 = arith.mulf %28, %34 : vector<8x8xf32>
    %36 = arith.addf %33, %35 : vector<8x8xf32>
    %c0_18 = arith.constant 0 : index
    %c0_19 = arith.constant 0 : index
    %37 = vector.load %arg20[%c0_18, %c0_19] : memref<8x32xf32, #tpu.memory_space<vmem>>, vector<8x32xf32>
    %cst_20 = arith.constant dense<0.000000e+00> : vector<8x32xf32>
    %38 = tpu.matmul %36, %37, %cst_20 {dimension_numbers = #tpu.dot_dimension_numbers<[1], [0], [0], [1], [0, 0, 1, 1], [], []>, precision = #tpu.contract_precision<fp32>} : vector<8x8xf32>, vector<8x32xf32>, vector<8x32xf32> -> vector<8x32xf32>
    %39 = arith.addf %9, %38 : vector<8x32xf32>
    %c0_21 = arith.constant 0 : index
    %c0_22 = arith.constant 0 : index
    %40 = vector.load %arg12[%c0_21, %c0_22] : memref<32x128xf32, #tpu.memory_space<vmem>>, vector<32x128xf32>
    %cst_23 = arith.constant dense<0.000000e+00> : vector<8x128xf32>
    %41 = tpu.matmul %39, %40, %cst_23 {dimension_numbers = #tpu.dot_dimension_numbers<[1], [0], [0], [1], [0, 0, 1, 1], [], []>, precision = #tpu.contract_precision<fp32>} : vector<8x32xf32>, vector<32x128xf32>, vector<8x128xf32> -> vector<8x128xf32>
    %c0_24 = arith.constant 0 : index
    %c0_25 = arith.constant 0 : index
    %42 = vector.load %arg13[%c0_24, %c0_25] : memref<1x128xf32, #tpu.memory_space<vmem>>, vector<1x128xf32>
    %43 = vector.broadcast %42 : vector<1x128xf32> to vector<8x128xf32>
    %44 = arith.addf %41, %43 : vector<8x128xf32>
    %cst_26 = arith.constant 0.000000e+00 : f32
    %45 = vector.broadcast %cst_26 : f32 to vector<8x128xf32>
    %46 = arith.maximumf %44, %45 : vector<8x128xf32>
    %c0_27 = arith.constant 0 : index
    %c0_28 = arith.constant 0 : index
    %47 = vector.load %arg14[%c0_27, %c0_28] : memref<128x32xf32, #tpu.memory_space<vmem>>, vector<128x32xf32>
    %cst_29 = arith.constant dense<0.000000e+00> : vector<8x32xf32>
    %48 = tpu.matmul %46, %47, %cst_29 {dimension_numbers = #tpu.dot_dimension_numbers<[1], [0], [0], [1], [0, 0, 1, 1], [], []>, precision = #tpu.contract_precision<fp32>} : vector<8x128xf32>, vector<128x32xf32>, vector<8x32xf32> -> vector<8x32xf32>
    %c0_30 = arith.constant 0 : index
    %c0_31 = arith.constant 0 : index
    %49 = vector.load %arg15[%c0_30, %c0_31] : memref<1x32xf32, #tpu.memory_space<vmem>>, vector<1x32xf32>
    %50 = vector.broadcast %49 : vector<1x32xf32> to vector<8x32xf32>
    %51 = arith.addf %48, %50 : vector<8x32xf32>
    %52 = arith.addf %39, %51 : vector<8x32xf32>
    %cst_32 = arith.constant dense<0.000000e+00> : vector<8xf32>
    %53 = vector.multi_reduction <add>, %52, %cst_32 [1] : vector<8x32xf32> to vector<8xf32>
    %54 = vector.shape_cast %53 : vector<8xf32> to vector<8x1xf32>
    %cst_33 = arith.constant 3.200000e+01 : f32
    %55 = vector.broadcast %cst_33 : f32 to vector<8x1xf32>
    %56 = arith.divf %54, %55 : vector<8x1xf32>
    %57 = vector.broadcast %56 : vector<8x1xf32> to vector<8x32xf32>
    %58 = arith.subf %52, %57 : vector<8x32xf32>
    %59 = arith.mulf %58, %58 : vector<8x32xf32>
    %cst_34 = arith.constant dense<0.000000e+00> : vector<8xf32>
    %60 = vector.multi_reduction <add>, %59, %cst_34 [1] : vector<8x32xf32> to vector<8xf32>
    %61 = vector.shape_cast %60 : vector<8xf32> to vector<8x1xf32>
    %cst_35 = arith.constant 3.200000e+01 : f32
    %62 = vector.broadcast %cst_35 : f32 to vector<8x1xf32>
    %63 = arith.divf %61, %62 : vector<8x1xf32>
    %64 = vector.broadcast %56 : vector<8x1xf32> to vector<8x32xf32>
    %65 = arith.subf %52, %64 : vector<8x32xf32>
    %cst_36 = arith.constant 9.99999974E-6 : f32
    %66 = vector.broadcast %cst_36 : f32 to vector<8x1xf32>
    %67 = arith.addf %63, %66 : vector<8x1xf32>
    %68 = math.rsqrt %67 : vector<8x1xf32>
    %69 = vector.broadcast %68 : vector<8x1xf32> to vector<8x32xf32>
    %70 = arith.mulf %65, %69 : vector<8x32xf32>
    %c0_37 = arith.constant 0 : index
    %c0_38 = arith.constant 0 : index
    %71 = vector.load %arg16[%c0_37, %c0_38] : memref<1x32xf32, #tpu.memory_space<vmem>>, vector<1x32xf32>
    %72 = vector.broadcast %71 : vector<1x32xf32> to vector<8x32xf32>
    %73 = arith.mulf %70, %72 : vector<8x32xf32>
    %c0_39 = arith.constant 0 : index
    %c0_40 = arith.constant 0 : index
    %74 = vector.load %arg17[%c0_39, %c0_40] : memref<1x32xf32, #tpu.memory_space<vmem>>, vector<1x32xf32>
    %75 = vector.broadcast %74 : vector<1x32xf32> to vector<8x32xf32>
    %76 = arith.addf %73, %75 : vector<8x32xf32>
    %c0_41 = arith.constant 0 : index
    %c0_42 = arith.constant 0 : index
    %c0_43 = arith.constant 0 : index
    %77 = vector.load %arg18[%c0_41, %c0_42, %c0_43] : memref<1x8x32xf32, #tpu.memory_space<vmem>>, vector<1x8x32xf32>
    %78 = vector.shape_cast %77 : vector<1x8x32xf32> to vector<8x32xf32>
    %79 = vector.shape_cast %76 : vector<8x32xf32> to vector<1x8x32xf32>
    tpu.vector_store %arg18[%c0_41, %c0_42, %c0_43], %79 {strides = array<i32>} : memref<1x8x32xf32, #tpu.memory_space<vmem>>, vector<1x8x32xf32>,
    return
  }
  func.func @transform_0(%arg0: i32, %arg1: i32) -> (i32, i32, i32) {
    %c0_i32 = arith.constant 0 : i32
    %c0_i32_0 = arith.constant 0 : i32
    return %arg0, %arg1, %c0_i32 : i32, i32, i32
  }
  func.func @transform_1(%arg0: i32, %arg1: i32) -> (i32, i32, i32) {
    %c0_i32 = arith.constant 0 : i32
    %c0_i32_0 = arith.constant 0 : i32
    %c0_i32_1 = arith.constant 0 : i32
    return %arg0, %c0_i32, %c0_i32_0 : i32, i32, i32
  }
  func.func @transform_2(%arg0: i32, %arg1: i32) -> (i32, i32, i32) {
    %c0_i32 = arith.constant 0 : i32
    %c0_i32_0 = arith.constant 0 : i32
    %c0_i32_1 = arith.constant 0 : i32
    return %arg0, %c0_i32, %c0_i32_0 : i32, i32, i32
  }
  func.func @transform_3(%arg0: i32, %arg1: i32) -> (i32, i32, i32) {
    %c0_i32 = arith.constant 0 : i32
    %c0_i32_0 = arith.constant 0 : i32
    return %arg0, %arg1, %c0_i32 : i32, i32, i32
  }
  func.func @transform_4(%arg0: i32, %arg1: i32) -> (i32, i32) {
    %c0_i32 = arith.constant 0 : i32
    %c0_i32_0 = arith.constant 0 : i32
    %c0_i32_1 = arith.constant 0 : i32
    return %c0_i32, %c0_i32_0 : i32, i32
  }
  func.func @transform_5(%arg0: i32, %arg1: i32) -> (i32, i32) {
    %c0_i32 = arith.constant 0 : i32
    %c0_i32_0 = arith.constant 0 : i32
    %c0_i32_1 = arith.constant 0 : i32
    return %c0_i32, %c0_i32_0 : i32, i32
  }
  func.func @transform_6(%arg0: i32, %arg1: i32) -> (i32, i32) {
    %c0_i32 = arith.constant 0 : i32
    %c0_i32_0 = arith.constant 0 : i32
    %c0_i32_1 = arith.constant 0 : i32
    return %c0_i32, %c0_i32_0 : i32, i32
  }
  func.func @transform_7(%arg0: i32, %arg1: i32) -> (i32, i32) {
    %c0_i32 = arith.constant 0 : i32
    %c0_i32_0 = arith.constant 0 : i32
    %c0_i32_1 = arith.constant 0 : i32
    return %c0_i32, %c0_i32_0 : i32, i32
  }
  func.func @transform_8(%arg0: i32, %arg1: i32) -> (i32, i32) {
    %c0_i32 = arith.constant 0 : i32
    %c0_i32_0 = arith.constant 0 : i32
    %c0_i32_1 = arith.constant 0 : i32
    return %c0_i32, %c0_i32_0 : i32, i32
  }
  func.func @transform_9(%arg0: i32, %arg1: i32) -> (i32, i32) {
    %c0_i32 = arith.constant 0 : i32
    %c0_i32_0 = arith.constant 0 : i32
    %c0_i32_1 = arith.constant 0 : i32
    return %c0_i32, %c0_i32_0 : i32, i32
  }
  func.func @transform_10(%arg0: i32, %arg1: i32) -> (i32, i32) {
    %c0_i32 = arith.constant 0 : i32
    %c0_i32_0 = arith.constant 0 : i32
    %c0_i32_1 = arith.constant 0 : i32
    return %c0_i32, %c0_i32_0 : i32, i32
  }
  func.func @transform_11(%arg0: i32, %arg1: i32) -> (i32, i32) {
    %c0_i32 = arith.constant 0 : i32
    %c0_i32_0 = arith.constant 0 : i32
    %c0_i32_1 = arith.constant 0 : i32
    return %c0_i32, %c0_i32_0 : i32, i32
  }
  func.func @transform_12(%arg0: i32, %arg1: i32) -> (i32, i32) {
    %c0_i32 = arith.constant 0 : i32
    %c0_i32_0 = arith.constant 0 : i32
    %c0_i32_1 = arith.constant 0 : i32
    return %c0_i32, %c0_i32_0 : i32, i32
  }
  func.func @transform_13(%arg0: i32, %arg1: i32) -> (i32, i32) {
    %c0_i32 = arith.constant 0 : i32
    %c0_i32_0 = arith.constant 0 : i32
    %c0_i32_1 = arith.constant 0 : i32
    return %c0_i32, %c0_i32_0 : i32, i32
  }
  func.func @transform_14(%arg0: i32, %arg1: i32) -> (i32, i32) {
    %c0_i32 = arith.constant 0 : i32
    %c0_i32_0 = arith.constant 0 : i32
    %c0_i32_1 = arith.constant 0 : i32
    return %c0_i32, %c0_i32_0 : i32, i32
  }
  func.func @transform_15(%arg0: i32, %arg1: i32) -> (i32, i32) {
    %c0_i32 = arith.constant 0 : i32
    %c0_i32_0 = arith.constant 0 : i32
    %c0_i32_1 = arith.constant 0 : i32
    return %c0_i32, %c0_i32_0 : i32, i32
  }
  func.func @transform_16(%arg0: i32, %arg1: i32) -> (i32, i32, i32) {
    %c0_i32 = arith.constant 0 : i32
    %c0_i32_0 = arith.constant 0 : i32
    return %arg0, %arg1, %c0_i32 : i32, i32, i32
  }
}

</mosaic_0001>

<llo_original>
// kernel: tpu_custom_call.1
$region0: #{tpu_custom_call.1}
  #allocation0 [shape = 'u32[]', space=smem, size = 0x4, offset = 0x4, fixed_abs, tag = 'smem constant byte address 0x4 - core index']
  #allocation1 [shape = 'u32[72,128]{1,0:T(1,128)}', space=vmem, size = 0x9000, scoped, tag = 'internal scratch']
  #allocation2 [shape = 'f32[32,8]{1,0:T(8,128)}', space=vmem, size = 0x4000, scoped, tag = 'scratch operand']
  #allocation3 [shape = 'f32[8,32]{1,0:T(8,128)}', space=vmem, size = 0x1000, scoped, tag = 'scratch operand']
  %s0 = inlined_call_operand.vmem [shape: f32[2,8,32], index: 0, kind: input, shape index: {}]
  %s1 = inlined_call_operand.vmem [shape: f32[2,8,32], index: 1, kind: input, shape index: {}]
  %s2 = inlined_call_operand.hbm [shape: f32[2,8,32], index: 2, kind: input, shape index: {}]
  %s3 = inlined_call_operand.hbm [shape: f32[2,8,8], index: 3, kind: input, shape index: {}]
  %s4 = inlined_call_operand.vmem [shape: f32[32,32], index: 4, kind: input, shape index: {}]
  %s5 = inlined_call_operand.vmem [shape: f32[1,32], index: 5, kind: input, shape index: {}]
  %s6 = inlined_call_operand.vmem [shape: f32[32,32], index: 6, kind: input, shape index: {}]
  %s7 = inlined_call_operand.vmem [shape: f32[32,1], index: 7, kind: input, shape index: {}]
  %s8 = inlined_call_operand.vmem [shape: f32[32,32], index: 8, kind: input, shape index: {}]
  %s9 = inlined_call_operand.vmem [shape: f32[1,32], index: 9, kind: input, shape index: {}]
  %s10 = inlined_call_operand.vmem [shape: f32[32,128], index: 10, kind: input, shape index: {}]
  %s11 = inlined_call_operand.vmem [shape: f32[1,128], index: 11, kind: input, shape index: {}]
  %s12 = inlined_call_operand.vmem [shape: f32[128,32], index: 12, kind: input, shape index: {}]
  %s13 = inlined_call_operand.vmem [shape: f32[1,32], index: 13, kind: input, shape index: {}]
  %s14 = inlined_call_operand.vmem [shape: f32[1,32], index: 14, kind: input, shape index: {}]
  %s15 = inlined_call_operand.vmem [shape: f32[1,32], index: 15, kind: input, shape index: {}]
  %s16 = inlined_call_operand.hbm [shape: f32[2,8,32], index: 16, kind: output, shape index: {}]
  %s17 = sld [smem:[#allocation0]]
  $region109: #{tpu_custom_call.1} parent=0
    _
  %s19 = ssub.s32 1, %s17
  %s20 = scalar_select 0, %s19, %s17
  $region1: #{tpu_custom_call.1} parent=0
    #allocation4 [shape = 'u8[8192]{0}', space=vmem, size = 0x2000, scoped, tag = 'input window, operand 2']
    #allocation5 [shape = 's32[2]{0}', space=sflag, size = 0x8, scoped, tag = 'scoped memory for tpu_custom_call.1']
    #allocation6 [shape = 's32[2]{0}', space=sflag, size = 0x8, scoped, tag = 'scoped memory for tpu_custom_call.1']
    #allocation7 [shape = 'u8[8192]{0}', space=vmem, size = 0x2000, scoped, tag = 'input window, operand 3']
    #allocation8 [shape = 's32[2]{0}', space=sflag, size = 0x8, scoped, tag = 'scoped memory for tpu_custom_call.1']
    #allocation9 [shape = 'u8[8192]{0}', space=vmem, size = 0x2000, scoped, tag = 'output window, operand 0']
    %21 = vsyncpa [#allocation5], 0
    %s22 = scalar_lea.sflag [#allocation5], 1
    %23 = vsyncpa %s22, 0
    %24 = vsyncpa [#allocation8], 0
    %s25 = scalar_lea.sflag [#allocation8], 1
    %26 = vsyncpa %s25, 0
    %27 = vsyncpa [#allocation6], 0
    %s28 = scalar_lea.sflag [#allocation6], 1
    %29 = vsyncpa %s28, 0
    loop: start=0, step=1, limit=4
    $region2: #{tpu_custom_call.1} parent=1 // loop_pre_header
      _
    $region3: #{tpu_custom_call.1} parent=1 // loop_header
      %s31 = sphi 0, %s35
      %p32 = scmp.ge.s32.totalorder %s31, 4
      %s38 = sphi 0, %s50
      %s39 = sphi 0, %s46
      %s40 = sphi 0, %s38
      %s41 = sphi 0, %s39
      %s42 = sphi 0, %s40
      %s43 = sphi 0, %s41
      %s55 = sphi 0, %s57
      %s58 = sphi 0, %s55
      %s59 = sphi 0, %s58
      %s75 = sphi 0, %s59
      %s81 = sphi 0, %s83
      %s84 = sphi 0, %s81
      %s85 = sphi 0, %s84
      %s101 = sphi 0, %s85
      %s107 = sphi 0, %s109
      %s110 = sphi 0, %s107
      %s111 = sphi 0, %s110
      %s127 = sphi 0, %s111
      %s135 = sphi 0, %s137
      %s138 = sphi 0, %s135
      %s139 = sphi 0, %s138
      %s155 = sphi 0, %s139
      %s159 = sphi 0, %s159
      %s161 = sphi 0, %s159
      %s162 = sphi 0, %s161
      %s176 = sphi 0, %s162
      %s180 = sphi 0, %s180
      %s182 = sphi 0, %s180
      %s183 = sphi 0, %s182
      %s197 = sphi 0, %s183
      %s201 = sphi 0, %s201
      %s203 = sphi 0, %s201
      %s204 = sphi 0, %s203
      %s218 = sphi 0, %s204
      %s222 = sphi 0, %s222
      %s224 = sphi 0, %s222
      %s225 = sphi 0, %s224
      %s239 = sphi 0, %s225
      %s243 = sphi 0, %s243
      %s245 = sphi 0, %s243
      %s246 = sphi 0, %s245
      %s260 = sphi 0, %s246
      %s264 = sphi 0, %s264
      %s266 = sphi 0, %s264
      %s267 = sphi 0, %s266
      %s281 = sphi 0, %s267
      %s285 = sphi 0, %s285
      %s287 = sphi 0, %s285
      %s288 = sphi 0, %s287
      %s302 = sphi 0, %s288
      %s306 = sphi 0, %s306
      %s308 = sphi 0, %s306
      %s309 = sphi 0, %s308
      %s323 = sphi 0, %s309
      %s327 = sphi 0, %s327
      %s329 = sphi 0, %s327
      %s330 = sphi 0, %s329
      %s344 = sphi 0, %s330
      %s348 = sphi 0, %s348
      %s350 = sphi 0, %s348
      %s351 = sphi 0, %s350
      %s365 = sphi 0, %s351
      %s369 = sphi 0, %s369
      %s371 = sphi 0, %s369
      %s372 = sphi 0, %s371
      %s386 = sphi 0, %s372
      %s390 = sphi 0, %s390
      %s392 = sphi 0, %s390
      %s393 = sphi 0, %s392
      %s407 = sphi 0, %s393
      %s415 = sphi 0, %s417
      %s418 = sphi 0, %s415
      %s419 = sphi 0, %s418
      %s435 = sphi 0, %s419
    $region4: #{tpu_custom_call.1} parent=1 // loop_header_branch
      %34 = sbr.rel (%p32) target = $region8
    $region5: #{tpu_custom_call.1} parent=1 // loop_body
      %s36 = ssub.s32 %s31, 1
      %s37 = ssub.s32 %s31, 2
      %s44 = sadd.s32 1, %s39
      %p45 = scmp.ge.s32.totalorder %s44, 1
      %s46 = scalar_select %p45, 0, %s44
      %s47 = sadd.s32 1, %s38
      %s48 = scalar_select %p45, %s47, %s38
      %p49 = scmp.ge.s32.totalorder %s48, 2
      %s50 = scalar_select %p49, 0, %s48
      %s51 = ssub.s32 %s38, %s50
      %s52 = ssub.s32 %s39, %s46
      %s53 = sor.u32 %s51, %s52
      %p54 = scmp.eq.s32.totalorder %s53, 0
      %s56 = sadd.s32 %s55, 1
      %s57 = scalar_select %p54, %s55, %s56
      %p60 = pneg %p54
      %p61 = scmp.eq.s32.totalorder %s31, 1
      %p62 = por %p60, %p61
      %p63 = scmp.ne.s32.totalorder %s55, %s58
      %p64 = scmp.eq.s32.totalorder %s31, 0
      %p65 = por %p63, %p64
      %p66 = scmp.ne.s32.totalorder %s55, %s58
      %p67 = scmp.eq.s32.totalorder %s36, 1
      %p68 = por %p66, %p67
      %p69 = scmp.ne.s32.totalorder %s58, %s59
      %p70 = scmp.eq.s32.totalorder %s36, 0
      %p71 = por %p69, %p70
      %p72 = scmp.ne.s32.totalorder %s58, %s59
      %p73 = scmp.eq.s32.totalorder %s37, 1
      %p74 = por %p72, %p73
      %p76 = scmp.ne.s32.totalorder %s59, %s75
      %p77 = scmp.eq.s32.totalorder %s37, 0
      %p78 = por %p76, %p77
      %s79 = ssub.s32 %s38, %s50
      %p80 = scmp.eq.s32.totalorder %s79, 0
      %s82 = sadd.s32 %s81, 1
      %s83 = scalar_select %p80, %s81, %s82
      %p86 = pneg %p80
      %p87 = scmp.eq.s32.totalorder %s31, 1
      %p88 = por %p86, %p87
      %p89 = scmp.ne.s32.totalorder %s81, %s84
      %p90 = scmp.eq.s32.totalorder %s31, 0
      %p91 = por %p89, %p90
      %p92 = scmp.ne.s32.totalorder %s81, %s84
      %p93 = scmp.eq.s32.totalorder %s36, 1
      %p94 = por %p92, %p93
      %p95 = scmp.ne.s32.totalorder %s84, %s85
      %p96 = scmp.eq.s32.totalorder %s36, 0
      %p97 = por %p95, %p96
      %p98 = scmp.ne.s32.totalorder %s84, %s85
      %p99 = scmp.eq.s32.totalorder %s37, 1
      %p100 = por %p98, %p99
      %p102 = scmp.ne.s32.totalorder %s85, %s101
      %p103 = scmp.eq.s32.totalorder %s37, 0
      %p104 = por %p102, %p103
      %s105 = ssub.s32 %s38, %s50
      %p106 = scmp.eq.s32.totalorder %s105, 0
      %s108 = sadd.s32 %s107, 1
      %s109 = scalar_select %p106, %s107, %s108
      %p112 = pneg %p106
      %p113 = scmp.eq.s32.totalorder %s31, 1
      %p114 = por %p112, %p113
      %p115 = scmp.ne.s32.totalorder %s107, %s110
      %p116 = scmp.eq.s32.totalorder %s31, 0
      %p117 = por %p115, %p116
      %p118 = scmp.ne.s32.totalorder %s107, %s110
      %p119 = scmp.eq.s32.totalorder %s36, 1
      %p120 = por %p118, %p119
      %p121 = scmp.ne.s32.totalorder %s110, %s111
      %p122 = scmp.eq.s32.totalorder %s36, 0
      %p123 = por %p121, %p122
      %p124 = scmp.ne.s32.totalorder %s110, %s111
      %p125 = scmp.eq.s32.totalorder %s37, 1
      %p126 = por %p124, %p125
      %p128 = scmp.ne.s32.totalorder %s111, %s127
      %p129 = scmp.eq.s32.totalorder %s37, 0
      %p130 = por %p128, %p129
      %s131 = ssub.s32 %s38, %s50
      %s132 = ssub.s32 %s39, %s46
      %s133 = sor.u32 %s131, %s132
      %p134 = scmp.eq.s32.totalorder %s133, 0
      %s136 = sadd.s32 %s135, 1
      %s137 = scalar_select %p134, %s135, %s136
      %p140 = pneg %p134
      %p141 = scmp.eq.s32.totalorder %s31, 1
      %p142 = por %p140, %p141
      %p143 = scmp.ne.s32.totalorder %s135, %s138
      %p144 = scmp.eq.s32.totalorder %s31, 0
      %p145 = por %p143, %p144
      %p146 = scmp.ne.s32.totalorder %s135, %s138
      %p147 = scmp.eq.s32.totalorder %s36, 1
      %p148 = por %p146, %p147
      %p149 = scmp.ne.s32.totalorder %s138, %s139
      %p150 = scmp.eq.s32.totalorder %s36, 0
      %p151 = por %p149, %p150
      %p152 = scmp.ne.s32.totalorder %s138, %s139
      %p153 = scmp.eq.s32.totalorder %s37, 1
      %p154 = por %p152, %p153
      %p156 = scmp.ne.s32.totalorder %s139, %s155
      %p157 = scmp.eq.s32.totalorder %s37, 0
      %p158 = por %p156, %p157
      %s160 = sadd.s32 %s159, 1
      %p163 = scmp.eq.s32.totalorder %s31, 1
      %p164 = scmp.ne.s32.totalorder %s159, %s161
      %p165 = scmp.eq.s32.totalorder %s31, 0
      %p166 = por %p164, %p165
      %p167 = scmp.ne.s32.totalorder %s159, %s161
      %p168 = scmp.eq.s32.totalorder %s36, 1
      %p169 = por %p167, %p168
      %p170 = scmp.ne.s32.totalorder %s161, %s162
      %p171 = scmp.eq.s32.totalorder %s36, 0
      %p172 = por %p170, %p171
      %p173 = scmp.ne.s32.totalorder %s161, %s162
      %p174 = scmp.eq.s32.totalorder %s37, 1
      %p175 = por %p173, %p174
      %p177 = scmp.ne.s32.totalorder %s162, %s176
      %p178 = scmp.eq.s32.totalorder %s37, 0
      %p179 = por %p177, %p178
      %s181 = sadd.s32 %s180, 1
      %p184 = scmp.eq.s32.totalorder %s31, 1
      %p185 = scmp.ne.s32.totalorder %s180, %s182
      %p186 = scmp.eq.s32.totalorder %s31, 0
      %p187 = por %p185, %p186
      %p188 = scmp.ne.s32.totalorder %s180, %s182
      %p189 = scmp.eq.s32.totalorder %s36, 1
      %p190 = por %p188, %p189
      %p191 = scmp.ne.s32.totalorder %s182, %s183
      %p192 = scmp.eq.s32.totalorder %s36, 0
      %p193 = por %p191, %p192
      %p194 = scmp.ne.s32.totalorder %s182, %s183
      %p195 = scmp.eq.s32.totalorder %s37, 1
      %p196 = por %p194, %p195
      %p198 = scmp.ne.s32.totalorder %s183, %s197
      %p199 = scmp.eq.s32.totalorder %s37, 0
      %p200 = por %p198, %p199
      %s202 = sadd.s32 %s201, 1
      %p205 = scmp.eq.s32.totalorder %s31, 1
      %p206 = scmp.ne.s32.totalorder %s201, %s203
      %p207 = scmp.eq.s32.totalorder %s31, 0
      %p208 = por %p206, %p207
      %p209 = scmp.ne.s32.totalorder %s201, %s203
      %p210 = scmp.eq.s32.totalorder %s36, 1
      %p211 = por %p209, %p210
      %p212 = scmp.ne.s32.totalorder %s203, %s204
      %p213 = scmp.eq.s32.totalorder %s36, 0
      %p214 = por %p212, %p213
      %p215 = scmp.ne.s32.totalorder %s203, %s204
      %p216 = scmp.eq.s32.totalorder %s37, 1
      %p217 = por %p215, %p216
      %p219 = scmp.ne.s32.totalorder %s204, %s218
      %p220 = scmp.eq.s32.totalorder %s37, 0
      %p221 = por %p219, %p220
      %s223 = sadd.s32 %s222, 1
      %p226 = scmp.eq.s32.totalorder %s31, 1
      %p227 = scmp.ne.s32.totalorder %s222, %s224
      %p228 = scmp.eq.s32.totalorder %s31, 0
      %p229 = por %p227, %p228
      %p230 = scmp.ne.s32.totalorder %s222, %s224
      %p231 = scmp.eq.s32.totalorder %s36, 1
      %p232 = por %p230, %p231
      %p233 = scmp.ne.s32.totalorder %s224, %s225
      %p234 = scmp.eq.s32.totalorder %s36, 0
      %p235 = por %p233, %p234
      %p236 = scmp.ne.s32.totalorder %s224, %s225
      %p237 = scmp.eq.s32.totalorder %s37, 1
      %p238 = por %p236, %p237
      %p240 = scmp.ne.s32.totalorder %s225, %s239
      %p241 = scmp.eq.s32.totalorder %s37, 0
      %p242 = por %p240, %p241
      %s244 = sadd.s32 %s243, 1
      %p247 = scmp.eq.s32.totalorder %s31, 1
      %p248 = scmp.ne.s32.totalorder %s243, %s245
      %p249 = scmp.eq.s32.totalorder %s31, 0
      %p250 = por %p248, %p249
      %p251 = scmp.ne.s32.totalorder %s243, %s245
      %p252 = scmp.eq.s32.totalorder %s36, 1
      %p253 = por %p251, %p252
      %p254 = scmp.ne.s32.totalorder %s245, %s246
      %p255 = scmp.eq.s32.totalorder %s36, 0
      %p256 = por %p254, %p255
      %p257 = scmp.ne.s32.totalorder %s245, %s246
      %p258 = scmp.eq.s32.totalorder %s37, 1
      %p259 = por %p257, %p258
      %p261 = scmp.ne.s32.totalorder %s246, %s260
      %p262 = scmp.eq.s32.totalorder %s37, 0
      %p263 = por %p261, %p262
      %s265 = sadd.s32 %s264, 1
      %p268 = scmp.eq.s32.totalorder %s31, 1
      %p269 = scmp.ne.s32.totalorder %s264, %s266
      %p270 = scmp.eq.s32.totalorder %s31, 0
      %p271 = por %p269, %p270
      %p272 = scmp.ne.s32.totalorder %s264, %s266
      %p273 = scmp.eq.s32.totalorder %s36, 1
      %p274 = por %p272, %p273
      %p275 = scmp.ne.s32.totalorder %s266, %s267
      %p276 = scmp.eq.s32.totalorder %s36, 0
      %p277 = por %p275, %p276
      %p278 = scmp.ne.s32.totalorder %s266, %s267
      %p279 = scmp.eq.s32.totalorder %s37, 1
      %p280 = por %p278, %p279
      %p282 = scmp.ne.s32.totalorder %s267, %s281
      %p283 = scmp.eq.s32.totalorder %s37, 0
      %p284 = por %p282, %p283
      %s286 = sadd.s32 %s285, 1
      %p289 = scmp.eq.s32.totalorder %s31, 1
      %p290 = scmp.ne.s32.totalorder %s285, %s287
      %p291 = scmp.eq.s32.totalorder %s31, 0
      %p292 = por %p290, %p291
      %p293 = scmp.ne.s32.totalorder %s285, %s287
      %p294 = scmp.eq.s32.totalorder %s36, 1
      %p295 = por %p293, %p294
      %p296 = scmp.ne.s32.totalorder %s287, %s288
      %p297 = scmp.eq.s32.totalorder %s36, 0
      %p298 = por %p296, %p297
      %p299 = scmp.ne.s32.totalorder %s287, %s288
      %p300 = scmp.eq.s32.totalorder %s37, 1
      %p301 = por %p299, %p300
      %p303 = scmp.ne.s32.totalorder %s288, %s302
      %p304 = scmp.eq.s32.totalorder %s37, 0
      %p305 = por %p303, %p304
      %s307 = sadd.s32 %s306, 1
      %p310 = scmp.eq.s32.totalorder %s31, 1
      %p311 = scmp.ne.s32.totalorder %s306, %s308
      %p312 = scmp.eq.s32.totalorder %s31, 0
      %p313 = por %p311, %p312
      %p314 = scmp.ne.s32.totalorder %s306, %s308
      %p315 = scmp.eq.s32.totalorder %s36, 1
      %p316 = por %p314, %p315
      %p317 = scmp.ne.s32.totalorder %s308, %s309
      %p318 = scmp.eq.s32.totalorder %s36, 0
      %p319 = por %p317, %p318
      %p320 = scmp.ne.s32.totalorder %s308, %s309
      %p321 = scmp.eq.s32.totalorder %s37, 1
      %p322 = por %p320, %p321
      %p324 = scmp.ne.s32.totalorder %s309, %s323
      %p325 = scmp.eq.s32.totalorder %s37, 0
      %p326 = por %p324, %p325
      %s328 = sadd.s32 %s327, 1
      %p331 = scmp.eq.s32.totalorder %s31, 1
      %p332 = scmp.ne.s32.totalorder %s327, %s329
      %p333 = scmp.eq.s32.totalorder %s31, 0
      %p334 = por %p332, %p333
      %p335 = scmp.ne.s32.totalorder %s327, %s329
      %p336 = scmp.eq.s32.totalorder %s36, 1
      %p337 = por %p335, %p336
      %p338 = scmp.ne.s32.totalorder %s329, %s330
      %p339 = scmp.eq.s32.totalorder %s36, 0
      %p340 = por %p338, %p339
      %p341 = scmp.ne.s32.totalorder %s329, %s330
      %p342 = scmp.eq.s32.totalorder %s37, 1
      %p343 = por %p341, %p342
      %p345 = scmp.ne.s32.totalorder %s330, %s344
      %p346 = scmp.eq.s32.totalorder %s37, 0
      %p347 = por %p345, %p346
      %s349 = sadd.s32 %s348, 1
      %p352 = scmp.eq.s32.totalorder %s31, 1
      %p353 = scmp.ne.s32.totalorder %s348, %s350
      %p354 = scmp.eq.s32.totalorder %s31, 0
      %p355 = por %p353, %p354
      %p356 = scmp.ne.s32.totalorder %s348, %s350
      %p357 = scmp.eq.s32.totalorder %s36, 1
      %p358 = por %p356, %p357
      %p359 = scmp.ne.s32.totalorder %s350, %s351
      %p360 = scmp.eq.s32.totalorder %s36, 0
      %p361 = por %p359, %p360
      %p362 = scmp.ne.s32.totalorder %s350, %s351
      %p363 = scmp.eq.s32.totalorder %s37, 1
      %p364 = por %p362, %p363
      %p366 = scmp.ne.s32.totalorder %s351, %s365
      %p367 = scmp.eq.s32.totalorder %s37, 0
      %p368 = por %p366, %p367
      %s370 = sadd.s32 %s369, 1
      %p373 = scmp.eq.s32.totalorder %s31, 1
      %p374 = scmp.ne.s32.totalorder %s369, %s371
      %p375 = scmp.eq.s32.totalorder %s31, 0
      %p376 = por %p374, %p375
      %p377 = scmp.ne.s32.totalorder %s369, %s371
      %p378 = scmp.eq.s32.totalorder %s36, 1
      %p379 = por %p377, %p378
      %p380 = scmp.ne.s32.totalorder %s371, %s372
      %p381 = scmp.eq.s32.totalorder %s36, 0
      %p382 = por %p380, %p381
      %p383 = scmp.ne.s32.totalorder %s371, %s372
      %p384 = scmp.eq.s32.totalorder %s37, 1
      %p385 = por %p383, %p384
      %p387 = scmp.ne.s32.totalorder %s372, %s386
      %p388 = scmp.eq.s32.totalorder %s37, 0
      %p389 = por %p387, %p388
      %s391 = sadd.s32 %s390, 1
      %p394 = scmp.eq.s32.totalorder %s31, 1
      %p395 = scmp.ne.s32.totalorder %s390, %s392
      %p396 = scmp.eq.s32.totalorder %s31, 0
      %p397 = por %p395, %p396
      %p398 = scmp.ne.s32.totalorder %s390, %s392
      %p399 = scmp.eq.s32.totalorder %s36, 1
      %p400 = por %p398, %p399
      %p401 = scmp.ne.s32.totalorder %s392, %s393
      %p402 = scmp.eq.s32.totalorder %s36, 0
      %p403 = por %p401, %p402
      %p404 = scmp.ne.s32.totalorder %s392, %s393
      %p405 = scmp.eq.s32.totalorder %s37, 1
      %p406 = por %p404, %p405
      %p408 = scmp.ne.s32.totalorder %s393, %s407
      %p409 = scmp.eq.s32.totalorder %s37, 0
      %p410 = por %p408, %p409
      %s411 = ssub.s32 %s38, %s50
      %s412 = ssub.s32 %s39, %s46
      %s413 = sor.u32 %s411, %s412
      %p414 = scmp.eq.s32.totalorder %s413, 0
      %s416 = sadd.s32 %s415, 1
      %s417 = scalar_select %p414, %s415, %s416
      %p420 = pneg %p414
      %p421 = scmp.eq.s32.totalorder %s31, 1
      %p422 = por %p420, %p421
      %p423 = scmp.ne.s32.totalorder %s415, %s418
      %p424 = scmp.eq.s32.totalorder %s31, 0
      %p425 = por %p423, %p424
      %p426 = scmp.ne.s32.totalorder %s415, %s418
      %p427 = scmp.eq.s32.totalorder %s36, 1
      %p428 = por %p426, %p427
      %p429 = scmp.ne.s32.totalorder %s418, %s419
      %p430 = scmp.eq.s32.totalorder %s36, 0
      %p431 = por %p429, %p430
      %p432 = scmp.ne.s32.totalorder %s418, %s419
      %p433 = scmp.eq.s32.totalorder %s37, 1
      %p434 = por %p432, %p433
      %p436 = scmp.ne.s32.totalorder %s419, %s435
      %p437 = scmp.eq.s32.totalorder %s37, 0
      %p438 = por %p436, %p437
      %p439 = scmp.le.s32.totalorder 1, %s31
      %p440 = scmp.lt.s32.totalorder %s31, 3
      %p441 = pnand %p439, %p440
      %p442 = pneg %p441
      // Predicated region
      $region9: #{tpu_custom_call.1} parent=5 // pred_check
        _
      $region10: #{tpu_custom_call.1} parent=5 // pred_check_branch
        %444 = sbr.rel (%p441) target = $region12
      $region11: #{tpu_custom_call.1} parent=5 // pred_region
        %s445 = ssub.s32 %s31, 1
        // Predicated region
        $region13: #{tpu_custom_call.1} parent=11 // pred_check
          %p446 = pneg %p172
        $region14: #{tpu_custom_call.1} parent=11 // pred_check_branch
          %448 = sbr.rel (%p446) target = $region16
        $region15: #{tpu_custom_call.1} parent=11 // pred_region
          _
        $region16: #{tpu_custom_call.1} parent=11 // pred_fallthru
          _
        // Predicated region
        $region17: #{tpu_custom_call.1} parent=11 // pred_check
          %p449 = pneg %p193
        $region18: #{tpu_custom_call.1} parent=11 // pred_check_branch
          %451 = sbr.rel (%p449) target = $region20
        $region19: #{tpu_custom_call.1} parent=11 // pred_region
          _
        $region20: #{tpu_custom_call.1} parent=11 // pred_fallthru
          _
        // Predicated region
        $region21: #{tpu_custom_call.1} parent=11 // pred_check
          %p452 = pneg %p214
        $region22: #{tpu_custom_call.1} parent=11 // pred_check_branch
          %454 = sbr.rel (%p452) target = $region24
        $region23: #{tpu_custom_call.1} parent=11 // pred_region
          _
        $region24: #{tpu_custom_call.1} parent=11 // pred_fallthru
          _
        // Predicated region
        $region25: #{tpu_custom_call.1} parent=11 // pred_check
          %p455 = pneg %p235
        $region26: #{tpu_custom_call.1} parent=11 // pred_check_branch
          %457 = sbr.rel (%p455) target = $region28
        $region27: #{tpu_custom_call.1} parent=11 // pred_region
          _
        $region28: #{tpu_custom_call.1} parent=11 // pred_fallthru
          _
        // Predicated region
        $region29: #{tpu_custom_call.1} parent=11 // pred_check
          %p458 = pneg %p256
        $region30: #{tpu_custom_call.1} parent=11 // pred_check_branch
          %460 = sbr.rel (%p458) target = $region32
        $region31: #{tpu_custom_call.1} parent=11 // pred_region
          _
        $region32: #{tpu_custom_call.1} parent=11 // pred_fallthru
          _
        // Predicated region
        $region33: #{tpu_custom_call.1} parent=11 // pred_check
          %p461 = pneg %p277
        $region34: #{tpu_custom_call.1} parent=11 // pred_check_branch
          %463 = sbr.rel (%p461) target = $region36
        $region35: #{tpu_custom_call.1} parent=11 // pred_region
          _
        $region36: #{tpu_custom_call.1} parent=11 // pred_fallthru
          _
        // Predicated region
        $region37: #{tpu_custom_call.1} parent=11 // pred_check
          %p464 = pneg %p298
        $region38: #{tpu_custom_call.1} parent=11 // pred_check_branch
          %466 = sbr.rel (%p464) target = $region40
        $region39: #{tpu_custom_call.1} parent=11 // pred_region
          _
        $region40: #{tpu_custom_call.1} parent=11 // pred_fallthru
          _
        // Predicated region
        $region41: #{tpu_custom_call.1} parent=11 // pred_check
          %p467 = pneg %p319
        $region42: #{tpu_custom_call.1} parent=11 // pred_check_branch
          %469 = sbr.rel (%p467) target = $region44
        $region43: #{tpu_custom_call.1} parent=11 // pred_region
          _
        $region44: #{tpu_custom_call.1} parent=11 // pred_fallthru
          _
        // Predicated region
        $region45: #{tpu_custom_call.1} parent=11 // pred_check
          %p470 = pneg %p340
        $region46: #{tpu_custom_call.1} parent=11 // pred_check_branch
          %472 = sbr.rel (%p470) target = $region48
        $region47: #{tpu_custom_call.1} parent=11 // pred_region
          _
        $region48: #{tpu_custom_call.1} parent=11 // pred_fallthru
          _
        // Predicated region
        $region49: #{tpu_custom_call.1} parent=11 // pred_check
          %p473 = pneg %p361
        $region50: #{tpu_custom_call.1} parent=11 // pred_check_branch
          %475 = sbr.rel (%p473) target = $region52
        $region51: #{tpu_custom_call.1} parent=11 // pred_region
          _
        $region52: #{tpu_custom_call.1} parent=11 // pred_fallthru
          _
        // Predicated region
        $region53: #{tpu_custom_call.1} parent=11 // pred_check
          %p476 = pneg %p382
        $region54: #{tpu_custom_call.1} parent=11 // pred_check_branch
          %478 = sbr.rel (%p476) target = $region56
        $region55: #{tpu_custom_call.1} parent=11 // pred_region
          _
        $region56: #{tpu_custom_call.1} parent=11 // pred_fallthru
          _
        // Predicated region
        $region57: #{tpu_custom_call.1} parent=11 // pred_check
          %p479 = pneg %p403
        $region58: #{tpu_custom_call.1} parent=11 // pred_check_branch
          %481 = sbr.rel (%p479) target = $region60
        $region59: #{tpu_custom_call.1} parent=11 // pred_region
          _
        $region60: #{tpu_custom_call.1} parent=11 // pred_fallthru
          _
      $region12: #{tpu_custom_call.1} parent=5 // pred_fallthru
        _
      %p482 = scmp.lt.s32.totalorder %s31, 2
      // Predicated region
      $region61: #{tpu_custom_call.1} parent=5 // pred_check
        %p483 = pneg %p482
      $region62: #{tpu_custom_call.1} parent=5 // pred_check_branch
        %485 = sbr.rel (%p483) target = $region64
      $region63: #{tpu_custom_call.1} parent=5 // pred_region
        // Predicated region
        $region65: #{tpu_custom_call.1} parent=63 // pred_check
          %p486 = pneg %p65
        $region66: #{tpu_custom_call.1} parent=63 // pred_check_branch
          %488 = sbr.rel (%p486) target = $region68
        $region67: #{tpu_custom_call.1} parent=63 // pred_region
          %p489 = scmp.lt.s32.totalorder %s38, 1
          %s490 = scalar_select %p489, %s38, 1
          %p491 = scmp.lt.s32.totalorder %s39, 0
          %s492 = scalar_select %p491, %s39, 0
          %s493 = sadd.s32 %s492, %s490
          %s494 = smul.addr %s493, 8
          %s495 = scalar_lea.vmem %s0, %s494
        $region68: #{tpu_custom_call.1} parent=63 // pred_fallthru
          _
        // Predicated region
        $region69: #{tpu_custom_call.1} parent=63 // pred_check
          %p496 = pneg %p91
        $region70: #{tpu_custom_call.1} parent=63 // pred_check_branch
          %498 = sbr.rel (%p496) target = $region72
        $region71: #{tpu_custom_call.1} parent=63 // pred_region
          %p499 = scmp.lt.s32.totalorder %s38, 1
          %s500 = scalar_select %p499, %s38, 1
          %s501 = smul.addr %s500, 8
          %s502 = scalar_lea.vmem %s1, %s501
        $region72: #{tpu_custom_call.1} parent=63 // pred_fallthru
          _
        // Predicated region
        $region73: #{tpu_custom_call.1} parent=63 // pred_check
          %p503 = pneg %p117
        $region74: #{tpu_custom_call.1} parent=63 // pred_check_branch
          %505 = sbr.rel (%p503) target = $region76
        $region75: #{tpu_custom_call.1} parent=63 // pred_region
          %s506 = sand.u32 %s107, 1
          %s507 = scalar_lea.sflag [#allocation5], %s506
          %s508 = sand.u32 %s107, 1
          %s509 = smul.addr %s508, 8
          %s510 = scalar_lea.vmem [#allocation4], %s509
          %512 = vsyncadd %s507, 0
          %s513 = smul.addr %s38, 8
          %s514 = scalar_lea.hbm %s2, %s513
          %s516 = sshll.u32 %s514, 4
          %s517 = int_to_ptr.hbm [resolvable:$true] %s516
          %s518 = sshll.u32 %s510, 4
          %s519 = int_to_ptr.vmem [resolvable:$true] %s518
          %521 = dma.hbm_to_vmem [thread:$0]  %s517, 128, %s519, %s507
        $region76: #{tpu_custom_call.1} parent=63 // pred_fallthru
          _
        // Predicated region
        $region77: #{tpu_custom_call.1} parent=63 // pred_check
          %p522 = pneg %p145
        $region78: #{tpu_custom_call.1} parent=63 // pred_check_branch
          %524 = sbr.rel (%p522) target = $region80
        $region79: #{tpu_custom_call.1} parent=63 // pred_region
          %s525 = sand.u32 %s135, 1
          %s526 = scalar_lea.sflag [#allocation8], %s525
          %s527 = sand.u32 %s135, 1
          %s528 = smul.addr %s527, 8
          %s529 = scalar_lea.vmem [#allocation7], %s528
          %531 = vsyncadd %s526, 0
          %s532 = sadd.s32 %s39, %s38
          %s533 = smul.addr %s532, 8
          %s534 = scalar_lea.hbm %s3, %s533
          %s536 = sshll.u32 %s534, 4
          %s537 = int_to_ptr.hbm [resolvable:$true] %s536
          %s538 = sshll.u32 %s529, 4
          %s539 = int_to_ptr.vmem [resolvable:$true] %s538
          %541 = dma.hbm_to_vmem [thread:$0]  %s537, 128, %s539, %s526
        $region80: #{tpu_custom_call.1} parent=63 // pred_fallthru
          _
      $region64: #{tpu_custom_call.1} parent=5 // pred_fallthru
        _
      %p542 = scmp.le.s32.totalorder 1, %s31
      %p543 = scmp.lt.s32.totalorder %s31, 3
      %p544 = pnand %p542, %p543
      %p545 = pneg %p544
      // Predicated region
      $region81: #{tpu_custom_call.1} parent=5 // pred_check
        _
      $region82: #{tpu_custom_call.1} parent=5 // pred_check_branch
        %547 = sbr.rel (%p544) target = $region84
      $region83: #{tpu_custom_call.1} parent=5 // pred_region
        %s548 = ssub.s32 %s31, 1
        %s549 = sand.u32 %s110, 1
        %s550 = scalar_lea.sflag [#allocation5], %s549
        %s551 = sand.u32 %s110, 1
        %s552 = smul.addr %s551, 8
        %s553 = scalar_lea.vmem [#allocation4], %s552
        // Predicated region
        $region85: #{tpu_custom_call.1} parent=83 // pred_check
          %p554 = pneg %p123
        $region86: #{tpu_custom_call.1} parent=83 // pred_check_branch
          %556 = sbr.rel (%p554) target = $region88
        $region87: #{tpu_custom_call.1} parent=83 // pred_region
          %558 = dma.done %s550, 128
        $region88: #{tpu_custom_call.1} parent=83 // pred_fallthru
          _
        %s559 = sand.u32 %s138, 1
        %s560 = scalar_lea.sflag [#allocation8], %s559
        %s561 = sand.u32 %s138, 1
        %s562 = smul.addr %s561, 8
        %s563 = scalar_lea.vmem [#allocation7], %s562
        // Predicated region
        $region89: #{tpu_custom_call.1} parent=83 // pred_check
          %p564 = pneg %p151
        $region90: #{tpu_custom_call.1} parent=83 // pred_check_branch
          %566 = sbr.rel (%p564) target = $region92
        $region91: #{tpu_custom_call.1} parent=83 // pred_region
          %568 = dma.done %s560, 128
        $region92: #{tpu_custom_call.1} parent=83 // pred_fallthru
          _
        %p569 = scmp.lt.s32.totalorder %s40, 1
        %s570 = scalar_select %p569, %s40, 1
        %p571 = scmp.lt.s32.totalorder %s41, 0
        %s572 = scalar_select %p571, %s41, 0
        %s573 = sadd.s32 %s572, %s570
        %s574 = smul.addr %s573, 8
        %s575 = scalar_lea.vmem %s0, %s574
        %p576 = pneg %p71
        %p577 = pneg %p68
        %p578 = scmp.lt.s32.totalorder %s40, 1
        %s579 = scalar_select %p578, %s40, 1
        %s580 = smul.addr %s579, 8
        %s581 = scalar_lea.vmem %s1, %s580
        %p582 = pneg %p97
        %p583 = pneg %p94
        %s584 = sand.u32 %s110, 1
        %s585 = scalar_lea.sflag [#allocation5], %s584
        %s586 = sand.u32 %s110, 1
        %s587 = smul.addr %s586, 8
        %s588 = scalar_lea.vmem [#allocation4], %s587
        %p589 = pneg %p123
        %p590 = pneg %p120
        %s591 = sand.u32 %s138, 1
        %s592 = scalar_lea.sflag [#allocation8], %s591
        %s593 = sand.u32 %s138, 1
        %s594 = smul.addr %s593, 8
        %s595 = scalar_lea.vmem [#allocation7], %s594
        %p596 = pneg %p151
        %p597 = pneg %p148
        %p598 = pneg %p172
        %p599 = pneg %p169
        %p600 = pneg %p193
        %p601 = pneg %p190
        %p602 = pneg %p214
        %p603 = pneg %p211
        %p604 = pneg %p235
        %p605 = pneg %p232
        %p606 = pneg %p256
        %p607 = pneg %p253
        %p608 = pneg %p277
        %p609 = pneg %p274
        %p610 = pneg %p298
        %p611 = pneg %p295
        %p612 = pneg %p319
        %p613 = pneg %p316
        %p614 = pneg %p340
        %p615 = pneg %p337
        %p616 = pneg %p361
        %p617 = pneg %p358
        %p618 = pneg %p382
        %p619 = pneg %p379
        %p620 = pneg %p403
        %p621 = pneg %p400
        %p622 = pneg %p431
        %p623 = pneg %p428
        %s624 = sand.u32 %s418, 1
        %s625 = scalar_lea.sflag [#allocation6], %s624
        %s626 = sand.u32 %s418, 1
        %s627 = smul.addr %s626, 8
        %s628 = scalar_lea.vmem [#allocation9], %s627
        %p629 = scmp.lt.s32.totalorder %s40, 1
        %s630 = scalar_select %p629, %s40, 1
        %p631 = scmp.lt.s32.totalorder %s41, 0
        %s632 = scalar_select %p631, %s41, 0
        %s633 = sadd.s32 %s632, %s630
        %s634 = smul.addr %s633, 8
        %s635 = scalar_lea.vmem %s0, %s634
        %p636 = scmp.lt.s32.totalorder %s40, 1
        %s637 = scalar_select %p636, %s40, 1
        %s638 = smul.addr %s637, 8
        %s639 = scalar_lea.vmem %s1, %s638
        %p640 = scmp.eq.s32.totalorder %s41, 0
        // Predicated region
        $region93: #{tpu_custom_call.1} parent=83 // pred_check
          %p641 = pneg %p640
        $region94: #{tpu_custom_call.1} parent=83 // pred_check_branch
          %643 = sbr.rel (%p641) target = $region96
        $region95: #{tpu_custom_call.1} parent=83 // pred_region
          %v644 = vld [vmem:[%s639] sm:$0xff]
          %v645 = vld [vmem:[%s553] sm:$0xff]
          %v646 = vld [vmem:[%s6] sm:$0xff]
          %v647 = vld [vmem:[%s6 + $0x8] sm:$0xff]
          %v648 = vld [vmem:[%s6 + $0x10] sm:$0xff]
          %v649 = vld [vmem:[%s6 + $0x18] sm:$0xff]
          %v650 = vld [vmem:[%s7] sm:$0xff]
          %v651 = vld [vmem:[%s7 + $0x8] sm:$0xff]
          %v652 = vld [vmem:[%s7 + $0x10] sm:$0xff]
          %v653 = vld [vmem:[%s7 + $0x18] sm:$0xff]
          %655 = vset.pattern.permute.xlu0 0
          %656 = vperm.xlu0 %655, %v650
          %v657 = vpop.permute.xlu0 %656
          %660 = vset.pattern.permute.xlu0 0
          %661 = vperm.xlu0 %660, %v651
          %v662 = vpop.permute.xlu0 %661
          %665 = vset.pattern.permute.xlu0 0
          %666 = vperm.xlu0 %665, %v652
          %v667 = vpop.permute.xlu0 %666
          %670 = vset.pattern.permute.xlu0 0
          %671 = vperm.xlu0 %670, %v653
          %v672 = vpop.permute.xlu0 %671
          %vm674 = vcmask 261120
          %v676 = vsel %vm674, %v646, 0
          %v679 = vsel %vm674, %v647, 0
          %v682 = vsel %vm674, %v648, 0
          %v685 = vsel %vm674, %v649, 0
          %v688 = vsel %vm674, %v644, 0
          %690 = vmatpush.xpose.msra.mxu0 0.0
          %691 = vmatpush.xpose.msra.mxu0 0.0
          %692 = vmatpush.xpose.msra.mxu0 0.0
          %693 = vmatpush.xpose.msra.mxu0 0.0
          %694 = vmatpush.xpose.msra.mxu0 0.0
          %695 = vmatpush.xpose.msra.mxu0 0.0
          %696 = vmatpush.xpose.msra.mxu0 0.0
          %697 = vmatpush.xpose.msra.mxu0 0.0
          %698 = vmatpush.xpose.msra.mxu0 0.0
          %699 = vmatpush.xpose.msra.mxu0 0.0
          %700 = vmatpush.xpose.msra.mxu0 0.0
          %701 = vmatpush.xpose.msra.mxu0 0.0
          %702 = vmatpush.xpose.msra.mxu0 0.0
          %703 = vmatpush.xpose.msra.mxu0 0.0
          %704 = vmatpush.xpose.msra.mxu0 0.0
          %v705 = vand.u32 %v688, 4294901760
          %706 = vmatpush.xpose.msra.mxu0 %v705
          %v707 = vand.u32 %v676, 4294901760
          %v708 = vsub.f32 %v676, %v707
          %v709 = vand.u32 %v708, 4294901760
          %v710 = vsub.f32 %v708, %v709
          %v711 = vand.u32 %v710, 4294901760
          %712 = vmatmul.f32.gmra.mxu0 %v711
          %v713 = vpop.f32.mrf.mxu0
          %v714 = vadd.f32 %v657, %v713
          %v715 = vand.u32 %v679, 4294901760
          %v716 = vsub.f32 %v679, %v715
          %v717 = vand.u32 %v716, 4294901760
          %v718 = vsub.f32 %v716, %v717
          %v719 = vand.u32 %v718, 4294901760
          %720 = vmatmul.f32.gmra.mxu0 %v719
          %v721 = vpop.f32.mrf.mxu0
          %v722 = vadd.f32 %v662, %v721
          %v723 = vand.u32 %v682, 4294901760
          %v724 = vsub.f32 %v682, %v723
          %v725 = vand.u32 %v724, 4294901760
          %v726 = vsub.f32 %v724, %v725
          %v727 = vand.u32 %v726, 4294901760
          %728 = vmatmul.f32.gmra.mxu0 %v727
          %v729 = vpop.f32.mrf.mxu0
          %v730 = vadd.f32 %v667, %v729
          %v731 = vand.u32 %v685, 4294901760
          %v732 = vsub.f32 %v685, %v731
          %v733 = vand.u32 %v732, 4294901760
          %v734 = vsub.f32 %v732, %v733
          %v735 = vand.u32 %v734, 4294901760
          %736 = vmatmul.f32.gmra.mxu0 %v735
          %v737 = vpop.f32.mrf.mxu0
          %v738 = vadd.f32 %v672, %v737
          %739 = vdwg.mxu0
          %740 = vmatpush.xpose.msra.mxu0 0.0
          %741 = vmatpush.xpose.msra.mxu0 0.0
          %742 = vmatpush.xpose.msra.mxu0 0.0
          %743 = vmatpush.xpose.msra.mxu0 0.0
          %744 = vmatpush.xpose.msra.mxu0 0.0
          %745 = vmatpush.xpose.msra.mxu0 0.0
          %746 = vmatpush.xpose.msra.mxu0 0.0
          %747 = vmatpush.xpose.msra.mxu0 0.0
          %748 = vmatpush.xpose.msra.mxu0 0.0
          %749 = vmatpush.xpose.msra.mxu0 0.0
          %750 = vmatpush.xpose.msra.mxu0 0.0
          %751 = vmatpush.xpose.msra.mxu0 0.0
          %752 = vmatpush.xpose.msra.mxu0 0.0
          %753 = vmatpush.xpose.msra.mxu0 0.0
          %754 = vmatpush.xpose.msra.mxu0 0.0
          %v755 = vand.u32 %v688, 4294901760
          %v756 = vsub.f32 %v688, %v755
          %v757 = vand.u32 %v756, 4294901760
          %v758 = vsub.f32 %v756, %v757
          %v759 = vand.u32 %v758, 4294901760
          %760 = vmatpush.xpose.msra.mxu0 %v759
          %v761 = vand.u32 %v676, 4294901760
          %762 = vmatmul.f32.gmra.mxu0 %v761
          %v763 = vpop.f32.mrf.mxu0
          %v764 = vadd.f32 %v714, %v763
          %v765 = vand.u32 %v679, 4294901760
          %766 = vmatmul.f32.gmra.mxu0 %v765
          %v767 = vpop.f32.mrf.mxu0
          %v768 = vadd.f32 %v722, %v767
          %v769 = vand.u32 %v682, 4294901760
          %770 = vmatmul.f32.gmra.mxu0 %v769
          %v771 = vpop.f32.mrf.mxu0
          %v772 = vadd.f32 %v730, %v771
          %v773 = vand.u32 %v685, 4294901760
          %774 = vmatmul.f32.gmra.mxu0 %v773
          %v775 = vpop.f32.mrf.mxu0
          %v776 = vadd.f32 %v738, %v775
          %777 = vdwg.mxu0
          %778 = vmatpush.xpose.msra.mxu0 0.0
          %779 = vmatpush.xpose.msra.mxu0 0.0
          %780 = vmatpush.xpose.msra.mxu0 0.0
          %781 = vmatpush.xpose.msra.mxu0 0.0
          %782 = vmatpush.xpose.msra.mxu0 0.0
          %783 = vmatpush.xpose.msra.mxu0 0.0
          %784 = vmatpush.xpose.msra.mxu0 0.0
          %785 = vmatpush.xpose.msra.mxu0 0.0
          %786 = vmatpush.xpose.msra.mxu0 0.0
          %787 = vmatpush.xpose.msra.mxu0 0.0
          %788 = vmatpush.xpose.msra.mxu0 0.0
          %789 = vmatpush.xpose.msra.mxu0 0.0
          %790 = vmatpush.xpose.msra.mxu0 0.0
          %791 = vmatpush.xpose.msra.mxu0 0.0
          %792 = vmatpush.xpose.msra.mxu0 0.0
          %v793 = vand.u32 %v688, 4294901760
          %v794 = vsub.f32 %v688, %v793
          %795 = vmatpush.xpose.msra.mxu0 %v794
          %v796 = vand.u32 %v676, 4294901760
          %v797 = vsub.f32 %v676, %v796
          %798 = vmatmul.f32.gmra.mxu0 %v797
          %v799 = vpop.f32.mrf.mxu0
          %v800 = vadd.f32 %v764, %v799
          %v801 = vand.u32 %v679, 4294901760
          %v802 = vsub.f32 %v679, %v801
          %803 = vmatmul.f32.gmra.mxu0 %v802
          %v804 = vpop.f32.mrf.mxu0
          %v805 = vadd.f32 %v768, %v804
          %v806 = vand.u32 %v682, 4294901760
          %v807 = vsub.f32 %v682, %v806
          %808 = vmatmul.f32.gmra.mxu0 %v807
          %v809 = vpop.f32.mrf.mxu0
          %v810 = vadd.f32 %v772, %v809
          %v811 = vand.u32 %v685, 4294901760
          %v812 = vsub.f32 %v685, %v811
          %813 = vmatmul.f32.gmra.mxu0 %v812
          %v814 = vpop.f32.mrf.mxu0
          %v815 = vadd.f32 %v776, %v814
          %816 = vdwg.mxu0
          %817 = vmatpush.xpose.msra.mxu0 0.0
          %818 = vmatpush.xpose.msra.mxu0 0.0
          %819 = vmatpush.xpose.msra.mxu0 0.0
          %820 = vmatpush.xpose.msra.mxu0 0.0
          %821 = vmatpush.xpose.msra.mxu0 0.0
          %822 = vmatpush.xpose.msra.mxu0 0.0
          %823 = vmatpush.xpose.msra.mxu0 0.0
          %824 = vmatpush.xpose.msra.mxu0 0.0
          %825 = vmatpush.xpose.msra.mxu0 0.0
          %826 = vmatpush.xpose.msra.mxu0 0.0
          %827 = vmatpush.xpose.msra.mxu0 0.0
          %828 = vmatpush.xpose.msra.mxu0 0.0
          %829 = vmatpush.xpose.msra.mxu0 0.0
          %830 = vmatpush.xpose.msra.mxu0 0.0
          %831 = vmatpush.xpose.msra.mxu0 0.0
          %v832 = vand.u32 %v688, 4294901760
          %833 = vmatpush.xpose.msra.mxu0 %v832
          %v834 = vand.u32 %v676, 4294901760
          %v835 = vsub.f32 %v676, %v834
          %v836 = vand.u32 %v835, 4294901760
          %837 = vmatmul.f32.gmra.mxu0 %v836
          %v838 = vpop.f32.mrf.mxu0
          %v839 = vadd.f32 %v800, %v838
          %v840 = vand.u32 %v679, 4294901760
          %v841 = vsub.f32 %v679, %v840
          %v842 = vand.u32 %v841, 4294901760
          %843 = vmatmul.f32.gmra.mxu0 %v842
          %v844 = vpop.f32.mrf.mxu0
          %v845 = vadd.f32 %v805, %v844
          %v846 = vand.u32 %v682, 4294901760
          %v847 = vsub.f32 %v682, %v846
          %v848 = vand.u32 %v847, 4294901760
          %849 = vmatmul.f32.gmra.mxu0 %v848
          %v850 = vpop.f32.mrf.mxu0
          %v851 = vadd.f32 %v810, %v850
          %v852 = vand.u32 %v685, 4294901760
          %v853 = vsub.f32 %v685, %v852
          %v854 = vand.u32 %v853, 4294901760
          %855 = vmatmul.f32.gmra.mxu0 %v854
          %v856 = vpop.f32.mrf.mxu0
          %v857 = vadd.f32 %v815, %v856
          %858 = vdwg.mxu0
          %859 = vmatpush.xpose.msra.mxu0 0.0
          %860 = vmatpush.xpose.msra.mxu0 0.0
          %861 = vmatpush.xpose.msra.mxu0 0.0
          %862 = vmatpush.xpose.msra.mxu0 0.0
          %863 = vmatpush.xpose.msra.mxu0 0.0
          %864 = vmatpush.xpose.msra.mxu0 0.0
          %865 = vmatpush.xpose.msra.mxu0 0.0
          %866 = vmatpush.xpose.msra.mxu0 0.0
          %867 = vmatpush.xpose.msra.mxu0 0.0
          %868 = vmatpush.xpose.msra.mxu0 0.0
          %869 = vmatpush.xpose.msra.mxu0 0.0
          %870 = vmatpush.xpose.msra.mxu0 0.0
          %871 = vmatpush.xpose.msra.mxu0 0.0
          %872 = vmatpush.xpose.msra.mxu0 0.0
          %873 = vmatpush.xpose.msra.mxu0 0.0
          %v874 = vand.u32 %v688, 4294901760
          %v875 = vsub.f32 %v688, %v874
          %v876 = vand.u32 %v875, 4294901760
          %877 = vmatpush.xpose.msra.mxu0 %v876
          %v878 = vand.u32 %v676, 4294901760
          %879 = vmatmul.f32.gmra.mxu0 %v878
          %v880 = vpop.f32.mrf.mxu0
          %v881 = vadd.f32 %v839, %v880
          %v882 = vand.u32 %v679, 4294901760
          %883 = vmatmul.f32.gmra.mxu0 %v882
          %v884 = vpop.f32.mrf.mxu0
          %v885 = vadd.f32 %v845, %v884
          %v886 = vand.u32 %v682, 4294901760
          %887 = vmatmul.f32.gmra.mxu0 %v886
          %v888 = vpop.f32.mrf.mxu0
          %v889 = vadd.f32 %v851, %v888
          %v890 = vand.u32 %v685, 4294901760
          %891 = vmatmul.f32.gmra.mxu0 %v890
          %v892 = vpop.f32.mrf.mxu0
          %v893 = vadd.f32 %v857, %v892
          %894 = vdwg.mxu0
          %895 = vmatpush.xpose.msra.mxu0 0.0
          %896 = vmatpush.xpose.msra.mxu0 0.0
          %897 = vmatpush.xpose.msra.mxu0 0.0
          %898 = vmatpush.xpose.msra.mxu0 0.0
          %899 = vmatpush.xpose.msra.mxu0 0.0
          %900 = vmatpush.xpose.msra.mxu0 0.0
          %901 = vmatpush.xpose.msra.mxu0 0.0
          %902 = vmatpush.xpose.msra.mxu0 0.0
          %903 = vmatpush.xpose.msra.mxu0 0.0
          %904 = vmatpush.xpose.msra.mxu0 0.0
          %905 = vmatpush.xpose.msra.mxu0 0.0
          %906 = vmatpush.xpose.msra.mxu0 0.0
          %907 = vmatpush.xpose.msra.mxu0 0.0
          %908 = vmatpush.xpose.msra.mxu0 0.0
          %909 = vmatpush.xpose.msra.mxu0 0.0
          %v910 = vand.u32 %v688, 4294901760
          %911 = vmatpush.xpose.msra.mxu0 %v910
          %v912 = vand.u32 %v676, 4294901760
          %913 = vmatmul.f32.gmra.mxu0 %v912
          %v914 = vpop.f32.mrf.mxu0
          %v915 = vadd.f32 %v881, %v914
          %v916 = vand.u32 %v679, 4294901760
          %917 = vmatmul.f32.gmra.mxu0 %v916
          %v918 = vpop.f32.mrf.mxu0
          %v919 = vadd.f32 %v885, %v918
          %v920 = vand.u32 %v682, 4294901760
          %921 = vmatmul.f32.gmra.mxu0 %v920
          %v922 = vpop.f32.mrf.mxu0
          %v923 = vadd.f32 %v889, %v922
          %v924 = vand.u32 %v685, 4294901760
          %925 = vmatmul.f32.gmra.mxu0 %v924
          %v926 = vpop.f32.mrf.mxu0
          %v927 = vadd.f32 %v893, %v926
          %928 = vdwg.mxu0
          %vm929 = vcmask 64512
          %930 = vst.msk [vmem:[#allocation2] sm:$0xff] %vm929, %v915
          %931 = vst.msk [vmem:[#allocation2 + $0x8] sm:$0xff] %vm929, %v919
          %932 = vst.msk [vmem:[#allocation2 + $0x10] sm:$0xff] %vm929, %v923
          %933 = vst.msk [vmem:[#allocation2 + $0x18] sm:$0xff] %vm929, %v927
          %v934 = vld [vmem:[%s8] sm:$0xff]
          %v935 = vld [vmem:[%s8 + $0x8] sm:$0xff]
          %v936 = vld [vmem:[%s8 + $0x10] sm:$0xff]
          %v937 = vld [vmem:[%s8 + $0x18] sm:$0xff]
          %v938 = vld [vmem:[%s9] sm:$0x1]
          %v940 = vperm.slane %v938, 0
          %v943 = vsel %vm674, %v645, 0
          %945 = vmatpush.msra.mxu0 0.0
          %946 = vmatpush.msra.mxu0 0.0
          %947 = vmatpush.msra.mxu0 0.0
          %948 = vmatpush.msra.mxu0 0.0
          %949 = vmatpush.msra.mxu0 0.0
          %950 = vmatpush.msra.mxu0 0.0
          %951 = vmatpush.msra.mxu0 0.0
          %952 = vmatpush.msra.mxu0 0.0
          %953 = vmatpush.msra.mxu0 0.0
          %954 = vmatpush.msra.mxu0 0.0
          %955 = vmatpush.msra.mxu0 0.0
          %956 = vmatpush.msra.mxu0 0.0
          %v957 = vand.u32 %v937, 4294901760
          %958 = vmatpush.msra.mxu0 %v957
          %v959 = vand.u32 %v936, 4294901760
          %960 = vmatpush.msra.mxu0 %v959
          %v961 = vand.u32 %v935, 4294901760
          %962 = vmatpush.msra.mxu0 %v961
          %v963 = vand.u32 %v934, 4294901760
          %964 = vmatpush.msra.mxu0 %v963
          %v965 = vand.u32 %v943, 4294901760
          %v966 = vsub.f32 %v943, %v965
          %v967 = vand.u32 %v966, 4294901760
          %v968 = vsub.f32 %v966, %v967
          %v969 = vand.u32 %v968, 4294901760
          %970 = vmatmul.f32.gmra.mxu0 %v969
          %v971 = vpop.f32.mrf.mxu0
          %v972 = vadd.f32 %v940, %v971
          %973 = vdwg.mxu0
          %974 = vmatpush.msra.mxu0 0.0
          %975 = vmatpush.msra.mxu0 0.0
          %976 = vmatpush.msra.mxu0 0.0
          %977 = vmatpush.msra.mxu0 0.0
          %978 = vmatpush.msra.mxu0 0.0
          %979 = vmatpush.msra.mxu0 0.0
          %980 = vmatpush.msra.mxu0 0.0
          %981 = vmatpush.msra.mxu0 0.0
          %982 = vmatpush.msra.mxu0 0.0
          %983 = vmatpush.msra.mxu0 0.0
          %984 = vmatpush.msra.mxu0 0.0
          %985 = vmatpush.msra.mxu0 0.0
          %v986 = vand.u32 %v937, 4294901760
          %v987 = vsub.f32 %v937, %v986
          %v988 = vand.u32 %v987, 4294901760
          %v989 = vsub.f32 %v987, %v988
          %v990 = vand.u32 %v989, 4294901760
          %991 = vmatpush.msra.mxu0 %v990
          %v992 = vand.u32 %v936, 4294901760
          %v993 = vsub.f32 %v936, %v992
          %v994 = vand.u32 %v993, 4294901760
          %v995 = vsub.f32 %v993, %v994
          %v996 = vand.u32 %v995, 4294901760
          %997 = vmatpush.msra.mxu0 %v996
          %v998 = vand.u32 %v935, 4294901760
          %v999 = vsub.f32 %v935, %v998
          %v1000 = vand.u32 %v999, 4294901760
          %v1001 = vsub.f32 %v999, %v1000
          %v1002 = vand.u32 %v1001, 4294901760
          %1003 = vmatpush.msra.mxu0 %v1002
          %v1004 = vand.u32 %v934, 4294901760
          %v1005 = vsub.f32 %v934, %v1004
          %v1006 = vand.u32 %v1005, 4294901760
          %v1007 = vsub.f32 %v1005, %v1006
          %v1008 = vand.u32 %v1007, 4294901760
          %1009 = vmatpush.msra.mxu0 %v1008
          %v1010 = vand.u32 %v943, 4294901760
          %1011 = vmatmul.f32.gmra.mxu0 %v1010
          %v1012 = vpop.f32.mrf.mxu0
          %v1013 = vadd.f32 %v972, %v1012
          %1014 = vdwg.mxu0
          %1015 = vmatpush.msra.mxu0 0.0
          %1016 = vmatpush.msra.mxu0 0.0
          %1017 = vmatpush.msra.mxu0 0.0
          %1018 = vmatpush.msra.mxu0 0.0
          %1019 = vmatpush.msra.mxu0 0.0
          %1020 = vmatpush.msra.mxu0 0.0
          %1021 = vmatpush.msra.mxu0 0.0
          %1022 = vmatpush.msra.mxu0 0.0
          %1023 = vmatpush.msra.mxu0 0.0
          %1024 = vmatpush.msra.mxu0 0.0
          %1025 = vmatpush.msra.mxu0 0.0
          %1026 = vmatpush.msra.mxu0 0.0
          %v1027 = vand.u32 %v937, 4294901760
          %v1028 = vsub.f32 %v937, %v1027
          %1029 = vmatpush.msra.mxu0 %v1028
          %v1030 = vand.u32 %v936, 4294901760
          %v1031 = vsub.f32 %v936, %v1030
          %1032 = vmatpush.msra.mxu0 %v1031
          %v1033 = vand.u32 %v935, 4294901760
          %v1034 = vsub.f32 %v935, %v1033
          %1035 = vmatpush.msra.mxu0 %v1034
          %v1036 = vand.u32 %v934, 4294901760
          %v1037 = vsub.f32 %v934, %v1036
          %1038 = vmatpush.msra.mxu0 %v1037
          %v1039 = vand.u32 %v943, 4294901760
          %v1040 = vsub.f32 %v943, %v1039
          %1041 = vmatmul.f32.gmra.mxu0 %v1040
          %v1042 = vpop.f32.mrf.mxu0
          %v1043 = vadd.f32 %v1013, %v1042
          %1044 = vdwg.mxu0
          %1045 = vmatpush.msra.mxu0 0.0
          %1046 = vmatpush.msra.mxu0 0.0
          %1047 = vmatpush.msra.mxu0 0.0
          %1048 = vmatpush.msra.mxu0 0.0
          %1049 = vmatpush.msra.mxu0 0.0
          %1050 = vmatpush.msra.mxu0 0.0
          %1051 = vmatpush.msra.mxu0 0.0
          %1052 = vmatpush.msra.mxu0 0.0
          %1053 = vmatpush.msra.mxu0 0.0
          %1054 = vmatpush.msra.mxu0 0.0
          %1055 = vmatpush.msra.mxu0 0.0
          %1056 = vmatpush.msra.mxu0 0.0
          %v1057 = vand.u32 %v937, 4294901760
          %1058 = vmatpush.msra.mxu0 %v1057
          %v1059 = vand.u32 %v936, 4294901760
          %1060 = vmatpush.msra.mxu0 %v1059
          %v1061 = vand.u32 %v935, 4294901760
          %1062 = vmatpush.msra.mxu0 %v1061
          %v1063 = vand.u32 %v934, 4294901760
          %1064 = vmatpush.msra.mxu0 %v1063
          %v1065 = vand.u32 %v943, 4294901760
          %v1066 = vsub.f32 %v943, %v1065
          %v1067 = vand.u32 %v1066, 4294901760
          %1068 = vmatmul.f32.gmra.mxu0 %v1067
          %v1069 = vpop.f32.mrf.mxu0
          %v1070 = vadd.f32 %v1043, %v1069
          %1071 = vdwg.mxu0
          %1072 = vmatpush.msra.mxu0 0.0
          %1073 = vmatpush.msra.mxu0 0.0
          %1074 = vmatpush.msra.mxu0 0.0
          %1075 = vmatpush.msra.mxu0 0.0
          %1076 = vmatpush.msra.mxu0 0.0
          %1077 = vmatpush.msra.mxu0 0.0
          %1078 = vmatpush.msra.mxu0 0.0
          %1079 = vmatpush.msra.mxu0 0.0
          %1080 = vmatpush.msra.mxu0 0.0
          %1081 = vmatpush.msra.mxu0 0.0
          %1082 = vmatpush.msra.mxu0 0.0
          %1083 = vmatpush.msra.mxu0 0.0
          %v1084 = vand.u32 %v937, 4294901760
          %v1085 = vsub.f32 %v937, %v1084
          %v1086 = vand.u32 %v1085, 4294901760
          %1087 = vmatpush.msra.mxu0 %v1086
          %v1088 = vand.u32 %v936, 4294901760
          %v1089 = vsub.f32 %v936, %v1088
          %v1090 = vand.u32 %v1089, 4294901760
          %1091 = vmatpush.msra.mxu0 %v1090
          %v1092 = vand.u32 %v935, 4294901760
          %v1093 = vsub.f32 %v935, %v1092
          %v1094 = vand.u32 %v1093, 4294901760
          %1095 = vmatpush.msra.mxu0 %v1094
          %v1096 = vand.u32 %v934, 4294901760
          %v1097 = vsub.f32 %v934, %v1096
          %v1098 = vand.u32 %v1097, 4294901760
          %1099 = vmatpush.msra.mxu0 %v1098
          %v1100 = vand.u32 %v943, 4294901760
          %1101 = vmatmul.f32.gmra.mxu0 %v1100
          %v1102 = vpop.f32.mrf.mxu0
          %v1103 = vadd.f32 %v1070, %v1102
          %1104 = vdwg.mxu0
          %1105 = vmatpush.msra.mxu0 0.0
          %1106 = vmatpush.msra.mxu0 0.0
          %1107 = vmatpush.msra.mxu0 0.0
          %1108 = vmatpush.msra.mxu0 0.0
          %1109 = vmatpush.msra.mxu0 0.0
          %1110 = vmatpush.msra.mxu0 0.0
          %1111 = vmatpush.msra.mxu0 0.0
          %1112 = vmatpush.msra.mxu0 0.0
          %1113 = vmatpush.msra.mxu0 0.0
          %1114 = vmatpush.msra.mxu0 0.0
          %1115 = vmatpush.msra.mxu0 0.0
          %1116 = vmatpush.msra.mxu0 0.0
          %v1117 = vand.u32 %v937, 4294901760
          %1118 = vmatpush.msra.mxu0 %v1117
          %v1119 = vand.u32 %v936, 4294901760
          %1120 = vmatpush.msra.mxu0 %v1119
          %v1121 = vand.u32 %v935, 4294901760
          %1122 = vmatpush.msra.mxu0 %v1121
          %v1123 = vand.u32 %v934, 4294901760
          %1124 = vmatpush.msra.mxu0 %v1123
          %v1125 = vand.u32 %v943, 4294901760
          %1126 = vmatmul.f32.gmra.mxu0 %v1125
          %v1127 = vpop.f32.mrf.mxu0
          %v1128 = vadd.f32 %v1103, %v1127
          %1129 = vdwg.mxu0
          %1130 = vst.msk [vmem:[#allocation3] sm:$0xff] %vm674, %v1128
        $region96: #{tpu_custom_call.1} parent=83 // pred_fallthru
          _
        %v1131 = vld [vmem:[%s635] sm:$0xff]
        %v1132 = vld [vmem:[%s4] sm:$0xff]
        %v1133 = vld [vmem:[%s4 + $0x8] sm:$0xff]
        %v1134 = vld [vmem:[%s4 + $0x10] sm:$0xff]
        %v1135 = vld [vmem:[%s4 + $0x18] sm:$0xff]
        %v1136 = vld [vmem:[%s5] sm:$0x1]
        %v1138 = vperm.slane %v1136, 0
        %vm1140 = vcmask 261120
        %v1142 = vsel %vm1140, %v1131, 0
        %1144 = vmatpush.msra.mxu0 0.0
        %1145 = vmatpush.msra.mxu0 0.0
        %1146 = vmatpush.msra.mxu0 0.0
        %1147 = vmatpush.msra.mxu0 0.0
        %1148 = vmatpush.msra.mxu0 0.0
        %1149 = vmatpush.msra.mxu0 0.0
        %1150 = vmatpush.msra.mxu0 0.0
        %1151 = vmatpush.msra.mxu0 0.0
        %1152 = vmatpush.msra.mxu0 0.0
        %1153 = vmatpush.msra.mxu0 0.0
        %1154 = vmatpush.msra.mxu0 0.0
        %1155 = vmatpush.msra.mxu0 0.0
        %v1156 = vand.u32 %v1135, 4294901760
        %1157 = vmatpush.msra.mxu0 %v1156
        %v1158 = vand.u32 %v1134, 4294901760
        %1159 = vmatpush.msra.mxu0 %v1158
        %v1160 = vand.u32 %v1133, 4294901760
        %1161 = vmatpush.msra.mxu0 %v1160
        %v1162 = vand.u32 %v1132, 4294901760
        %1163 = vmatpush.msra.mxu0 %v1162
        %v1164 = vand.u32 %v1142, 4294901760
        %v1165 = vsub.f32 %v1142, %v1164
        %v1166 = vand.u32 %v1165, 4294901760
        %v1167 = vsub.f32 %v1165, %v1166
        %v1168 = vand.u32 %v1167, 4294901760
        %1169 = vmatmul.f32.gmra.mxu0 %v1168
        %v1170 = vpop.f32.mrf.mxu0
        %v1171 = vadd.f32 %v1138, %v1170
        %1172 = vdwg.mxu0
        %1173 = vmatpush.msra.mxu0 0.0
        %1174 = vmatpush.msra.mxu0 0.0
        %1175 = vmatpush.msra.mxu0 0.0
        %1176 = vmatpush.msra.mxu0 0.0
        %1177 = vmatpush.msra.mxu0 0.0
        %1178 = vmatpush.msra.mxu0 0.0
        %1179 = vmatpush.msra.mxu0 0.0
        %1180 = vmatpush.msra.mxu0 0.0
        %1181 = vmatpush.msra.mxu0 0.0
        %1182 = vmatpush.msra.mxu0 0.0
        %1183 = vmatpush.msra.mxu0 0.0
        %1184 = vmatpush.msra.mxu0 0.0
        %v1185 = vand.u32 %v1135, 4294901760
        %v1186 = vsub.f32 %v1135, %v1185
        %v1187 = vand.u32 %v1186, 4294901760
        %v1188 = vsub.f32 %v1186, %v1187
        %v1189 = vand.u32 %v1188, 4294901760
        %1190 = vmatpush.msra.mxu0 %v1189
        %v1191 = vand.u32 %v1134, 4294901760
        %v1192 = vsub.f32 %v1134, %v1191
        %v1193 = vand.u32 %v1192, 4294901760
        %v1194 = vsub.f32 %v1192, %v1193
        %v1195 = vand.u32 %v1194, 4294901760
        %1196 = vmatpush.msra.mxu0 %v1195
        %v1197 = vand.u32 %v1133, 4294901760
        %v1198 = vsub.f32 %v1133, %v1197
        %v1199 = vand.u32 %v1198, 4294901760
        %v1200 = vsub.f32 %v1198, %v1199
        %v1201 = vand.u32 %v1200, 4294901760
        %1202 = vmatpush.msra.mxu0 %v1201
        %v1203 = vand.u32 %v1132, 4294901760
        %v1204 = vsub.f32 %v1132, %v1203
        %v1205 = vand.u32 %v1204, 4294901760
        %v1206 = vsub.f32 %v1204, %v1205
        %v1207 = vand.u32 %v1206, 4294901760
        %1208 = vmatpush.msra.mxu0 %v1207
        %v1209 = vand.u32 %v1142, 4294901760
        %1210 = vmatmul.f32.gmra.mxu0 %v1209
        %v1211 = vpop.f32.mrf.mxu0
        %v1212 = vadd.f32 %v1171, %v1211
        %1213 = vdwg.mxu0
        %1214 = vmatpush.msra.mxu0 0.0
        %1215 = vmatpush.msra.mxu0 0.0
        %1216 = vmatpush.msra.mxu0 0.0
        %1217 = vmatpush.msra.mxu0 0.0
        %1218 = vmatpush.msra.mxu0 0.0
        %1219 = vmatpush.msra.mxu0 0.0
        %1220 = vmatpush.msra.mxu0 0.0
        %1221 = vmatpush.msra.mxu0 0.0
        %1222 = vmatpush.msra.mxu0 0.0
        %1223 = vmatpush.msra.mxu0 0.0
        %1224 = vmatpush.msra.mxu0 0.0
        %1225 = vmatpush.msra.mxu0 0.0
        %v1226 = vand.u32 %v1135, 4294901760
        %v1227 = vsub.f32 %v1135, %v1226
        %1228 = vmatpush.msra.mxu0 %v1227
        %v1229 = vand.u32 %v1134, 4294901760
        %v1230 = vsub.f32 %v1134, %v1229
        %1231 = vmatpush.msra.mxu0 %v1230
        %v1232 = vand.u32 %v1133, 4294901760
        %v1233 = vsub.f32 %v1133, %v1232
        %1234 = vmatpush.msra.mxu0 %v1233
        %v1235 = vand.u32 %v1132, 4294901760
        %v1236 = vsub.f32 %v1132, %v1235
        %1237 = vmatpush.msra.mxu0 %v1236
        %v1238 = vand.u32 %v1142, 4294901760
        %v1239 = vsub.f32 %v1142, %v1238
        %1240 = vmatmul.f32.gmra.mxu0 %v1239
        %v1241 = vpop.f32.mrf.mxu0
        %v1242 = vadd.f32 %v1212, %v1241
        %1243 = vdwg.mxu0
        %1244 = vmatpush.msra.mxu0 0.0
        %1245 = vmatpush.msra.mxu0 0.0
        %1246 = vmatpush.msra.mxu0 0.0
        %1247 = vmatpush.msra.mxu0 0.0
        %1248 = vmatpush.msra.mxu0 0.0
        %1249 = vmatpush.msra.mxu0 0.0
        %1250 = vmatpush.msra.mxu0 0.0
        %1251 = vmatpush.msra.mxu0 0.0
        %1252 = vmatpush.msra.mxu0 0.0
        %1253 = vmatpush.msra.mxu0 0.0
        %1254 = vmatpush.msra.mxu0 0.0
        %1255 = vmatpush.msra.mxu0 0.0
        %v1256 = vand.u32 %v1135, 4294901760
        %1257 = vmatpush.msra.mxu0 %v1256
        %v1258 = vand.u32 %v1134, 4294901760
        %1259 = vmatpush.msra.mxu0 %v1258
        %v1260 = vand.u32 %v1133, 4294901760
        %1261 = vmatpush.msra.mxu0 %v1260
        %v1262 = vand.u32 %v1132, 4294901760
        %1263 = vmatpush.msra.mxu0 %v1262
        %v1264 = vand.u32 %v1142, 4294901760
        %v1265 = vsub.f32 %v1142, %v1264
        %v1266 = vand.u32 %v1265, 4294901760
        %1267 = vmatmul.f32.gmra.mxu0 %v1266
        %v1268 = vpop.f32.mrf.mxu0
        %v1269 = vadd.f32 %v1242, %v1268
        %1270 = vdwg.mxu0
        %1271 = vmatpush.msra.mxu0 0.0
        %1272 = vmatpush.msra.mxu0 0.0
        %1273 = vmatpush.msra.mxu0 0.0
        %1274 = vmatpush.msra.mxu0 0.0
        %1275 = vmatpush.msra.mxu0 0.0
        %1276 = vmatpush.msra.mxu0 0.0
        %1277 = vmatpush.msra.mxu0 0.0
        %1278 = vmatpush.msra.mxu0 0.0
        %1279 = vmatpush.msra.mxu0 0.0
        %1280 = vmatpush.msra.mxu0 0.0
        %1281 = vmatpush.msra.mxu0 0.0
        %1282 = vmatpush.msra.mxu0 0.0
        %v1283 = vand.u32 %v1135, 4294901760
        %v1284 = vsub.f32 %v1135, %v1283
        %v1285 = vand.u32 %v1284, 4294901760
        %1286 = vmatpush.msra.mxu0 %v1285
        %v1287 = vand.u32 %v1134, 4294901760
        %v1288 = vsub.f32 %v1134, %v1287
        %v1289 = vand.u32 %v1288, 4294901760
        %1290 = vmatpush.msra.mxu0 %v1289
        %v1291 = vand.u32 %v1133, 4294901760
        %v1292 = vsub.f32 %v1133, %v1291
        %v1293 = vand.u32 %v1292, 4294901760
        %1294 = vmatpush.msra.mxu0 %v1293
        %v1295 = vand.u32 %v1132, 4294901760
        %v1296 = vsub.f32 %v1132, %v1295
        %v1297 = vand.u32 %v1296, 4294901760
        %1298 = vmatpush.msra.mxu0 %v1297
        %v1299 = vand.u32 %v1142, 4294901760
        %1300 = vmatmul.f32.gmra.mxu0 %v1299
        %v1301 = vpop.f32.mrf.mxu0
        %v1302 = vadd.f32 %v1269, %v1301
        %1303 = vdwg.mxu0
        %1304 = vmatpush.msra.mxu0 0.0
        %1305 = vmatpush.msra.mxu0 0.0
        %1306 = vmatpush.msra.mxu0 0.0
        %1307 = vmatpush.msra.mxu0 0.0
        %1308 = vmatpush.msra.mxu0 0.0
        %1309 = vmatpush.msra.mxu0 0.0
        %1310 = vmatpush.msra.mxu0 0.0
        %1311 = vmatpush.msra.mxu0 0.0
        %1312 = vmatpush.msra.mxu0 0.0
        %1313 = vmatpush.msra.mxu0 0.0
        %1314 = vmatpush.msra.mxu0 0.0
        %1315 = vmatpush.msra.mxu0 0.0
        %v1316 = vand.u32 %v1135, 4294901760
        %1317 = vmatpush.msra.mxu0 %v1316
        %v1318 = vand.u32 %v1134, 4294901760
        %1319 = vmatpush.msra.mxu0 %v1318
        %v1320 = vand.u32 %v1133, 4294901760
        %1321 = vmatpush.msra.mxu0 %v1320
        %v1322 = vand.u32 %v1132, 4294901760
        %1323 = vmatpush.msra.mxu0 %v1322
        %v1324 = vand.u32 %v1142, 4294901760
        %1325 = vmatmul.f32.gmra.mxu0 %v1324
        %v1326 = vpop.f32.mrf.mxu0
        %v1327 = vadd.f32 %v1302, %v1326
        %1328 = vdwg.mxu0
        %v1329 = vmul.f32 %v1327, 0.17677669
        %v1330 = vld [vmem:[#allocation2] sm:$0xff]
        %v1331 = vld [vmem:[#allocation2 + $0x8] sm:$0xff]
        %v1332 = vld [vmem:[#allocation2 + $0x10] sm:$0xff]
        %v1333 = vld [vmem:[#allocation2 + $0x18] sm:$0xff]
        %v1335 = vsel %vm1140, %v1329, 0
        %1337 = vmatpush.msra.mxu0 0.0
        %1338 = vmatpush.msra.mxu0 0.0
        %1339 = vmatpush.msra.mxu0 0.0
        %1340 = vmatpush.msra.mxu0 0.0
        %1341 = vmatpush.msra.mxu0 0.0
        %1342 = vmatpush.msra.mxu0 0.0
        %1343 = vmatpush.msra.mxu0 0.0
        %1344 = vmatpush.msra.mxu0 0.0
        %1345 = vmatpush.msra.mxu0 0.0
        %1346 = vmatpush.msra.mxu0 0.0
        %1347 = vmatpush.msra.mxu0 0.0
        %1348 = vmatpush.msra.mxu0 0.0
        %v1349 = vand.u32 %v1333, 4294901760
        %1350 = vmatpush.msra.mxu0 %v1349
        %v1351 = vand.u32 %v1332, 4294901760
        %1352 = vmatpush.msra.mxu0 %v1351
        %v1353 = vand.u32 %v1331, 4294901760
        %1354 = vmatpush.msra.mxu0 %v1353
        %v1355 = vand.u32 %v1330, 4294901760
        %1356 = vmatpush.msra.mxu0 %v1355
        %v1357 = vand.u32 %v1335, 4294901760
        %v1358 = vsub.f32 %v1335, %v1357
        %v1359 = vand.u32 %v1358, 4294901760
        %v1360 = vsub.f32 %v1358, %v1359
        %v1361 = vand.u32 %v1360, 4294901760
        %1362 = vmatmul.f32.gmra.mxu0 %v1361
        %v1363 = vpop.f32.mrf.mxu0
        %v1364 = vadd.f32 0.0, %v1363
        %1365 = vdwg.mxu0
        %1366 = vmatpush.msra.mxu0 0.0
        %1367 = vmatpush.msra.mxu0 0.0
        %1368 = vmatpush.msra.mxu0 0.0
        %1369 = vmatpush.msra.mxu0 0.0
        %1370 = vmatpush.msra.mxu0 0.0
        %1371 = vmatpush.msra.mxu0 0.0
        %1372 = vmatpush.msra.mxu0 0.0
        %1373 = vmatpush.msra.mxu0 0.0
        %1374 = vmatpush.msra.mxu0 0.0
        %1375 = vmatpush.msra.mxu0 0.0
        %1376 = vmatpush.msra.mxu0 0.0
        %1377 = vmatpush.msra.mxu0 0.0
        %v1378 = vand.u32 %v1333, 4294901760
        %v1379 = vsub.f32 %v1333, %v1378
        %v1380 = vand.u32 %v1379, 4294901760
        %v1381 = vsub.f32 %v1379, %v1380
        %v1382 = vand.u32 %v1381, 4294901760
        %1383 = vmatpush.msra.mxu0 %v1382
        %v1384 = vand.u32 %v1332, 4294901760
        %v1385 = vsub.f32 %v1332, %v1384
        %v1386 = vand.u32 %v1385, 4294901760
        %v1387 = vsub.f32 %v1385, %v1386
        %v1388 = vand.u32 %v1387, 4294901760
        %1389 = vmatpush.msra.mxu0 %v1388
        %v1390 = vand.u32 %v1331, 4294901760
        %v1391 = vsub.f32 %v1331, %v1390
        %v1392 = vand.u32 %v1391, 4294901760
        %v1393 = vsub.f32 %v1391, %v1392
        %v1394 = vand.u32 %v1393, 4294901760
        %1395 = vmatpush.msra.mxu0 %v1394
        %v1396 = vand.u32 %v1330, 4294901760
        %v1397 = vsub.f32 %v1330, %v1396
        %v1398 = vand.u32 %v1397, 4294901760
        %v1399 = vsub.f32 %v1397, %v1398
        %v1400 = vand.u32 %v1399, 4294901760
        %1401 = vmatpush.msra.mxu0 %v1400
        %v1402 = vand.u32 %v1335, 4294901760
        %1403 = vmatmul.f32.gmra.mxu0 %v1402
        %v1404 = vpop.f32.mrf.mxu0
        %v1405 = vadd.f32 %v1364, %v1404
        %1406 = vdwg.mxu0
        %1407 = vmatpush.msra.mxu0 0.0
        %1408 = vmatpush.msra.mxu0 0.0
        %1409 = vmatpush.msra.mxu0 0.0
        %1410 = vmatpush.msra.mxu0 0.0
        %1411 = vmatpush.msra.mxu0 0.0
        %1412 = vmatpush.msra.mxu0 0.0
        %1413 = vmatpush.msra.mxu0 0.0
        %1414 = vmatpush.msra.mxu0 0.0
        %1415 = vmatpush.msra.mxu0 0.0
        %1416 = vmatpush.msra.mxu0 0.0
        %1417 = vmatpush.msra.mxu0 0.0
        %1418 = vmatpush.msra.mxu0 0.0
        %v1419 = vand.u32 %v1333, 4294901760
        %v1420 = vsub.f32 %v1333, %v1419
        %1421 = vmatpush.msra.mxu0 %v1420
        %v1422 = vand.u32 %v1332, 4294901760
        %v1423 = vsub.f32 %v1332, %v1422
        %1424 = vmatpush.msra.mxu0 %v1423
        %v1425 = vand.u32 %v1331, 4294901760
        %v1426 = vsub.f32 %v1331, %v1425
        %1427 = vmatpush.msra.mxu0 %v1426
        %v1428 = vand.u32 %v1330, 4294901760
        %v1429 = vsub.f32 %v1330, %v1428
        %1430 = vmatpush.msra.mxu0 %v1429
        %v1431 = vand.u32 %v1335, 4294901760
        %v1432 = vsub.f32 %v1335, %v1431
        %1433 = vmatmul.f32.gmra.mxu0 %v1432
        %v1434 = vpop.f32.mrf.mxu0
        %v1435 = vadd.f32 %v1405, %v1434
        %1436 = vdwg.mxu0
        %1437 = vmatpush.msra.mxu0 0.0
        %1438 = vmatpush.msra.mxu0 0.0
        %1439 = vmatpush.msra.mxu0 0.0
        %1440 = vmatpush.msra.mxu0 0.0
        %1441 = vmatpush.msra.mxu0 0.0
        %1442 = vmatpush.msra.mxu0 0.0
        %1443 = vmatpush.msra.mxu0 0.0
        %1444 = vmatpush.msra.mxu0 0.0
        %1445 = vmatpush.msra.mxu0 0.0
        %1446 = vmatpush.msra.mxu0 0.0
        %1447 = vmatpush.msra.mxu0 0.0
        %1448 = vmatpush.msra.mxu0 0.0
        %v1449 = vand.u32 %v1333, 4294901760
        %1450 = vmatpush.msra.mxu0 %v1449
        %v1451 = vand.u32 %v1332, 4294901760
        %1452 = vmatpush.msra.mxu0 %v1451
        %v1453 = vand.u32 %v1331, 4294901760
        %1454 = vmatpush.msra.mxu0 %v1453
        %v1455 = vand.u32 %v1330, 4294901760
        %1456 = vmatpush.msra.mxu0 %v1455
        %v1457 = vand.u32 %v1335, 4294901760
        %v1458 = vsub.f32 %v1335, %v1457
        %v1459 = vand.u32 %v1458, 4294901760
        %1460 = vmatmul.f32.gmra.mxu0 %v1459
        %v1461 = vpop.f32.mrf.mxu0
        %v1462 = vadd.f32 %v1435, %v1461
        %1463 = vdwg.mxu0
        %1464 = vmatpush.msra.mxu0 0.0
        %1465 = vmatpush.msra.mxu0 0.0
        %1466 = vmatpush.msra.mxu0 0.0
        %1467 = vmatpush.msra.mxu0 0.0
        %1468 = vmatpush.msra.mxu0 0.0
        %1469 = vmatpush.msra.mxu0 0.0
        %1470 = vmatpush.msra.mxu0 0.0
        %1471 = vmatpush.msra.mxu0 0.0
        %1472 = vmatpush.msra.mxu0 0.0
        %1473 = vmatpush.msra.mxu0 0.0
        %1474 = vmatpush.msra.mxu0 0.0
        %1475 = vmatpush.msra.mxu0 0.0
        %v1476 = vand.u32 %v1333, 4294901760
        %v1477 = vsub.f32 %v1333, %v1476
        %v1478 = vand.u32 %v1477, 4294901760
        %1479 = vmatpush.msra.mxu0 %v1478
        %v1480 = vand.u32 %v1332, 4294901760
        %v1481 = vsub.f32 %v1332, %v1480
        %v1482 = vand.u32 %v1481, 4294901760
        %1483 = vmatpush.msra.mxu0 %v1482
        %v1484 = vand.u32 %v1331, 4294901760
        %v1485 = vsub.f32 %v1331, %v1484
        %v1486 = vand.u32 %v1485, 4294901760
        %1487 = vmatpush.msra.mxu0 %v1486
        %v1488 = vand.u32 %v1330, 4294901760
        %v1489 = vsub.f32 %v1330, %v1488
        %v1490 = vand.u32 %v1489, 4294901760
        %1491 = vmatpush.msra.mxu0 %v1490
        %v1492 = vand.u32 %v1335, 4294901760
        %1493 = vmatmul.f32.gmra.mxu0 %v1492
        %v1494 = vpop.f32.mrf.mxu0
        %v1495 = vadd.f32 %v1462, %v1494
        %1496 = vdwg.mxu0
        %1497 = vmatpush.msra.mxu0 0.0
        %1498 = vmatpush.msra.mxu0 0.0
        %1499 = vmatpush.msra.mxu0 0.0
        %1500 = vmatpush.msra.mxu0 0.0
        %1501 = vmatpush.msra.mxu0 0.0
        %1502 = vmatpush.msra.mxu0 0.0
        %1503 = vmatpush.msra.mxu0 0.0
        %1504 = vmatpush.msra.mxu0 0.0
        %1505 = vmatpush.msra.mxu0 0.0
        %1506 = vmatpush.msra.mxu0 0.0
        %1507 = vmatpush.msra.mxu0 0.0
        %1508 = vmatpush.msra.mxu0 0.0
        %v1509 = vand.u32 %v1333, 4294901760
        %1510 = vmatpush.msra.mxu0 %v1509
        %v1511 = vand.u32 %v1332, 4294901760
        %1512 = vmatpush.msra.mxu0 %v1511
        %v1513 = vand.u32 %v1331, 4294901760
        %1514 = vmatpush.msra.mxu0 %v1513
        %v1515 = vand.u32 %v1330, 4294901760
        %1516 = vmatpush.msra.mxu0 %v1515
        %v1517 = vand.u32 %v1335, 4294901760
        %1518 = vmatmul.f32.gmra.mxu0 %v1517
        %v1519 = vpop.f32.mrf.mxu0
        %v1520 = vadd.f32 %v1495, %v1519
        %1521 = vdwg.mxu0
        %vm1522 = vcmask 64512
        %v1523 = vsel %vm1522, %v1520, -inf
        %1524 = vmax.xlane.f32.xlu0 %v1523
        %v1525 = vpop.xlane.xlu0 %1524
        %v1526 = vsub.f32 %v1520, %v1525
        %v1527 = vmul.f32 %v1526, 1.442695
        %v1528 = vpow.pop %v1527
        %v1529 = vsel %vm1522, %v1528, 0.0
        %1530 = vadd.xlane.f32.xlu0 %v1529
        %v1531 = vpop.xlane.xlu0 %1530
        %v1532 = vrcp.pop %v1531
        %v1533 = vmul.f32 %v1531, %v1532
        %v1534 = vsub.f32 1.0, %v1533
        %v1535 = vmul.f32 %v1532, %v1534
        %v1536 = vadd.f32 %v1532, %v1535
        %vm1537 = vweird.f32 %v1531
        %vm1538 = vweird.f32 %v1532
        %vm1539 = vmor %vm1537, %vm1538
        %v1540 = vsel %vm1539, %v1532, %v1536
        %v1541 = vand.u32 2147483647, %v1531
        %vm1542 = vcmp.eq.f32.partialorder %v1541, 8.507059e+37
        %v1543 = vand.u32 %v1531, 2147483648
        %v1544 = vor.u32 1.1754944e-38, %v1543
        %v1545 = vsel %vm1542, %v1544, %v1540
        %v1546 = vld [vmem:[%s563] sm:$0xff]
        %v1547 = vsel %vm1522, %v1546, -inf
        %1548 = vmax.xlane.f32.xlu0 %v1547
        %v1549 = vpop.xlane.xlu0 %1548
        %v1550 = vsub.f32 %v1546, %v1549
        %v1551 = vmul.f32 %v1550, 1.442695
        %v1552 = vpow.pop %v1551
        %v1553 = vsel %vm1522, %v1552, 0.0
        %1554 = vadd.xlane.f32.xlu0 %v1553
        %v1555 = vpop.xlane.xlu0 %1554
        %v1556 = vrcp.pop %v1555
        %v1557 = vmul.f32 %v1555, %v1556
        %v1558 = vsub.f32 1.0, %v1557
        %v1559 = vmul.f32 %v1556, %v1558
        %v1560 = vadd.f32 %v1556, %v1559
        %vm1561 = vweird.f32 %v1555
        %vm1562 = vweird.f32 %v1556
        %vm1563 = vmor %vm1561, %vm1562
        %v1564 = vsel %vm1563, %v1556, %v1560
        %v1565 = vand.u32 2147483647, %v1555
        %vm1566 = vcmp.eq.f32.partialorder %v1565, 8.507059e+37
        %v1567 = vand.u32 %v1555, 2147483648
        %v1568 = vor.u32 1.1754944e-38, %v1567
        %v1569 = vsel %vm1566, %v1568, %v1564
        %v1570 = vmul.f32 %v1528, %v1545
        %v1571 = vmul.f32 %v1552, %v1569
        %v1572 = vadd.f32 %v1570, %v1571
        %v1573 = vld [vmem:[#allocation3] sm:$0xff]
        %v1575 = vsel %vm1522, %v1572, 0
        %1577 = vmatpush.msra.mxu0 0.0
        %1578 = vmatpush.msra.mxu0 0.0
        %1579 = vmatpush.msra.mxu0 0.0
        %1580 = vmatpush.msra.mxu0 0.0
        %1581 = vmatpush.msra.mxu0 0.0
        %1582 = vmatpush.msra.mxu0 0.0
        %1583 = vmatpush.msra.mxu0 0.0
        %1584 = vmatpush.msra.mxu0 0.0
        %1585 = vmatpush.msra.mxu0 0.0
        %1586 = vmatpush.msra.mxu0 0.0
        %1587 = vmatpush.msra.mxu0 0.0
        %1588 = vmatpush.msra.mxu0 0.0
        %1589 = vmatpush.msra.mxu0 0.0
        %1590 = vmatpush.msra.mxu0 0.0
        %1591 = vmatpush.msra.mxu0 0.0
        %v1592 = vand.u32 %v1573, 4294901760
        %1593 = vmatpush.msra.mxu0 %v1592
        %v1594 = vand.u32 %v1575, 4294901760
        %v1595 = vsub.f32 %v1575, %v1594
        %v1596 = vand.u32 %v1595, 4294901760
        %v1597 = vsub.f32 %v1595, %v1596
        %v1598 = vand.u32 %v1597, 4294901760
        %1599 = vmatmul.f32.gmra.mxu0 %v1598
        %v1600 = vpop.f32.mrf.mxu0
        %v1601 = vadd.f32 0.0, %v1600
        %1602 = vdwg.mxu0
        %1603 = vmatpush.msra.mxu0 0.0
        %1604 = vmatpush.msra.mxu0 0.0
        %1605 = vmatpush.msra.mxu0 0.0
        %1606 = vmatpush.msra.mxu0 0.0
        %1607 = vmatpush.msra.mxu0 0.0
        %1608 = vmatpush.msra.mxu0 0.0
        %1609 = vmatpush.msra.mxu0 0.0
        %1610 = vmatpush.msra.mxu0 0.0
        %1611 = vmatpush.msra.mxu0 0.0
        %1612 = vmatpush.msra.mxu0 0.0
        %1613 = vmatpush.msra.mxu0 0.0
        %1614 = vmatpush.msra.mxu0 0.0
        %1615 = vmatpush.msra.mxu0 0.0
        %1616 = vmatpush.msra.mxu0 0.0
        %1617 = vmatpush.msra.mxu0 0.0
        %v1618 = vand.u32 %v1573, 4294901760
        %v1619 = vsub.f32 %v1573, %v1618
        %v1620 = vand.u32 %v1619, 4294901760
        %v1621 = vsub.f32 %v1619, %v1620
        %v1622 = vand.u32 %v1621, 4294901760
        %1623 = vmatpush.msra.mxu0 %v1622
        %v1624 = vand.u32 %v1575, 4294901760
        %1625 = vmatmul.f32.gmra.mxu0 %v1624
        %v1626 = vpop.f32.mrf.mxu0
        %v1627 = vadd.f32 %v1601, %v1626
        %1628 = vdwg.mxu0
        %1629 = vmatpush.msra.mxu0 0.0
        %1630 = vmatpush.msra.mxu0 0.0
        %1631 = vmatpush.msra.mxu0 0.0
        %1632 = vmatpush.msra.mxu0 0.0
        %1633 = vmatpush.msra.mxu0 0.0
        %1634 = vmatpush.msra.mxu0 0.0
        %1635 = vmatpush.msra.mxu0 0.0
        %1636 = vmatpush.msra.mxu0 0.0
        %1637 = vmatpush.msra.mxu0 0.0
        %1638 = vmatpush.msra.mxu0 0.0
        %1639 = vmatpush.msra.mxu0 0.0
        %1640 = vmatpush.msra.mxu0 0.0
        %1641 = vmatpush.msra.mxu0 0.0
        %1642 = vmatpush.msra.mxu0 0.0
        %1643 = vmatpush.msra.mxu0 0.0
        %v1644 = vand.u32 %v1573, 4294901760
        %v1645 = vsub.f32 %v1573, %v1644
        %1646 = vmatpush.msra.mxu0 %v1645
        %v1647 = vand.u32 %v1575, 4294901760
        %v1648 = vsub.f32 %v1575, %v1647
        %1649 = vmatmul.f32.gmra.mxu0 %v1648
        %v1650 = vpop.f32.mrf.mxu0
        %v1651 = vadd.f32 %v1627, %v1650
        %1652 = vdwg.mxu0
        %1653 = vmatpush.msra.mxu0 0.0
        %1654 = vmatpush.msra.mxu0 0.0
        %1655 = vmatpush.msra.mxu0 0.0
        %1656 = vmatpush.msra.mxu0 0.0
        %1657 = vmatpush.msra.mxu0 0.0
        %1658 = vmatpush.msra.mxu0 0.0
        %1659 = vmatpush.msra.mxu0 0.0
        %1660 = vmatpush.msra.mxu0 0.0
        %1661 = vmatpush.msra.mxu0 0.0
        %1662 = vmatpush.msra.mxu0 0.0
        %1663 = vmatpush.msra.mxu0 0.0
        %1664 = vmatpush.msra.mxu0 0.0
        %1665 = vmatpush.msra.mxu0 0.0
        %1666 = vmatpush.msra.mxu0 0.0
        %1667 = vmatpush.msra.mxu0 0.0
        %v1668 = vand.u32 %v1573, 4294901760
        %1669 = vmatpush.msra.mxu0 %v1668
        %v1670 = vand.u32 %v1575, 4294901760
        %v1671 = vsub.f32 %v1575, %v1670
        %v1672 = vand.u32 %v1671, 4294901760
        %1673 = vmatmul.f32.gmra.mxu0 %v1672
        %v1674 = vpop.f32.mrf.mxu0
        %v1675 = vadd.f32 %v1651, %v1674
        %1676 = vdwg.mxu0
        %1677 = vmatpush.msra.mxu0 0.0
        %1678 = vmatpush.msra.mxu0 0.0
        %1679 = vmatpush.msra.mxu0 0.0
        %1680 = vmatpush.msra.mxu0 0.0
        %1681 = vmatpush.msra.mxu0 0.0
        %1682 = vmatpush.msra.mxu0 0.0
        %1683 = vmatpush.msra.mxu0 0.0
        %1684 = vmatpush.msra.mxu0 0.0
        %1685 = vmatpush.msra.mxu0 0.0
        %1686 = vmatpush.msra.mxu0 0.0
        %1687 = vmatpush.msra.mxu0 0.0
        %1688 = vmatpush.msra.mxu0 0.0
        %1689 = vmatpush.msra.mxu0 0.0
        %1690 = vmatpush.msra.mxu0 0.0
        %1691 = vmatpush.msra.mxu0 0.0
        %v1692 = vand.u32 %v1573, 4294901760
        %v1693 = vsub.f32 %v1573, %v1692
        %v1694 = vand.u32 %v1693, 4294901760
        %1695 = vmatpush.msra.mxu0 %v1694
        %v1696 = vand.u32 %v1575, 4294901760
        %1697 = vmatmul.f32.gmra.mxu0 %v1696
        %v1698 = vpop.f32.mrf.mxu0
        %v1699 = vadd.f32 %v1675, %v1698
        %1700 = vdwg.mxu0
        %1701 = vmatpush.msra.mxu0 0.0
        %1702 = vmatpush.msra.mxu0 0.0
        %1703 = vmatpush.msra.mxu0 0.0
        %1704 = vmatpush.msra.mxu0 0.0
        %1705 = vmatpush.msra.mxu0 0.0
        %1706 = vmatpush.msra.mxu0 0.0
        %1707 = vmatpush.msra.mxu0 0.0
        %1708 = vmatpush.msra.mxu0 0.0
        %1709 = vmatpush.msra.mxu0 0.0
        %1710 = vmatpush.msra.mxu0 0.0
        %1711 = vmatpush.msra.mxu0 0.0
        %1712 = vmatpush.msra.mxu0 0.0
        %1713 = vmatpush.msra.mxu0 0.0
        %1714 = vmatpush.msra.mxu0 0.0
        %1715 = vmatpush.msra.mxu0 0.0
        %v1716 = vand.u32 %v1573, 4294901760
        %1717 = vmatpush.msra.mxu0 %v1716
        %v1718 = vand.u32 %v1575, 4294901760
        %1719 = vmatmul.f32.gmra.mxu0 %v1718
        %v1720 = vpop.f32.mrf.mxu0
        %v1721 = vadd.f32 %v1699, %v1720
        %1722 = vdwg.mxu0
        %v1723 = vadd.f32 %v1327, %v1721
        %v1724 = vld [vmem:[%s10] sm:$0xff]
        %v1725 = vld [vmem:[%s10 + $0x8] sm:$0xff]
        %v1726 = vld [vmem:[%s10 + $0x10] sm:$0xff]
        %v1727 = vld [vmem:[%s10 + $0x18] sm:$0xff]
        %v1728 = vld [vmem:[%s11] sm:$0x1]
        %v1730 = vperm.slane %v1728, 0
        %v1733 = vsel %vm1140, %v1723, 0
        %1735 = vmatpush.msra.mxu0 0.0
        %1736 = vmatpush.msra.mxu0 0.0
        %1737 = vmatpush.msra.mxu0 0.0
        %1738 = vmatpush.msra.mxu0 0.0
        %1739 = vmatpush.msra.mxu0 0.0
        %1740 = vmatpush.msra.mxu0 0.0
        %1741 = vmatpush.msra.mxu0 0.0
        %1742 = vmatpush.msra.mxu0 0.0
        %1743 = vmatpush.msra.mxu0 0.0
        %1744 = vmatpush.msra.mxu0 0.0
        %1745 = vmatpush.msra.mxu0 0.0
        %1746 = vmatpush.msra.mxu0 0.0
        %v1747 = vand.u32 %v1727, 4294901760
        %1748 = vmatpush.msra.mxu0 %v1747
        %v1749 = vand.u32 %v1726, 4294901760
        %1750 = vmatpush.msra.mxu0 %v1749
        %v1751 = vand.u32 %v1725, 4294901760
        %1752 = vmatpush.msra.mxu0 %v1751
        %v1753 = vand.u32 %v1724, 4294901760
        %1754 = vmatpush.msra.mxu0 %v1753
        %v1755 = vand.u32 %v1733, 4294901760
        %v1756 = vsub.f32 %v1733, %v1755
        %v1757 = vand.u32 %v1756, 4294901760
        %v1758 = vsub.f32 %v1756, %v1757
        %v1759 = vand.u32 %v1758, 4294901760
        %1760 = vmatmul.f32.gmra.mxu0 %v1759
        %v1761 = vpop.f32.mrf.mxu0
        %v1762 = vadd.f32 %v1730, %v1761
        %1763 = vdwg.mxu0
        %1764 = vmatpush.msra.mxu0 0.0
        %1765 = vmatpush.msra.mxu0 0.0
        %1766 = vmatpush.msra.mxu0 0.0
        %1767 = vmatpush.msra.mxu0 0.0
        %1768 = vmatpush.msra.mxu0 0.0
        %1769 = vmatpush.msra.mxu0 0.0
        %1770 = vmatpush.msra.mxu0 0.0
        %1771 = vmatpush.msra.mxu0 0.0
        %1772 = vmatpush.msra.mxu0 0.0
        %1773 = vmatpush.msra.mxu0 0.0
        %1774 = vmatpush.msra.mxu0 0.0
        %1775 = vmatpush.msra.mxu0 0.0
        %v1776 = vand.u32 %v1727, 4294901760
        %v1777 = vsub.f32 %v1727, %v1776
        %v1778 = vand.u32 %v1777, 4294901760
        %v1779 = vsub.f32 %v1777, %v1778
        %v1780 = vand.u32 %v1779, 4294901760
        %1781 = vmatpush.msra.mxu0 %v1780
        %v1782 = vand.u32 %v1726, 4294901760
        %v1783 = vsub.f32 %v1726, %v1782
        %v1784 = vand.u32 %v1783, 4294901760
        %v1785 = vsub.f32 %v1783, %v1784
        %v1786 = vand.u32 %v1785, 4294901760
        %1787 = vmatpush.msra.mxu0 %v1786
        %v1788 = vand.u32 %v1725, 4294901760
        %v1789 = vsub.f32 %v1725, %v1788
        %v1790 = vand.u32 %v1789, 4294901760
        %v1791 = vsub.f32 %v1789, %v1790
        %v1792 = vand.u32 %v1791, 4294901760
        %1793 = vmatpush.msra.mxu0 %v1792
        %v1794 = vand.u32 %v1724, 4294901760
        %v1795 = vsub.f32 %v1724, %v1794
        %v1796 = vand.u32 %v1795, 4294901760
        %v1797 = vsub.f32 %v1795, %v1796
        %v1798 = vand.u32 %v1797, 4294901760
        %1799 = vmatpush.msra.mxu0 %v1798
        %v1800 = vand.u32 %v1733, 4294901760
        %1801 = vmatmul.f32.gmra.mxu0 %v1800
        %v1802 = vpop.f32.mrf.mxu0
        %v1803 = vadd.f32 %v1762, %v1802
        %1804 = vdwg.mxu0
        %1805 = vmatpush.msra.mxu0 0.0
        %1806 = vmatpush.msra.mxu0 0.0
        %1807 = vmatpush.msra.mxu0 0.0
        %1808 = vmatpush.msra.mxu0 0.0
        %1809 = vmatpush.msra.mxu0 0.0
        %1810 = vmatpush.msra.mxu0 0.0
        %1811 = vmatpush.msra.mxu0 0.0
        %1812 = vmatpush.msra.mxu0 0.0
        %1813 = vmatpush.msra.mxu0 0.0
        %1814 = vmatpush.msra.mxu0 0.0
        %1815 = vmatpush.msra.mxu0 0.0
        %1816 = vmatpush.msra.mxu0 0.0
        %v1817 = vand.u32 %v1727, 4294901760
        %v1818 = vsub.f32 %v1727, %v1817
        %1819 = vmatpush.msra.mxu0 %v1818
        %v1820 = vand.u32 %v1726, 4294901760
        %v1821 = vsub.f32 %v1726, %v1820
        %1822 = vmatpush.msra.mxu0 %v1821
        %v1823 = vand.u32 %v1725, 4294901760
        %v1824 = vsub.f32 %v1725, %v1823
        %1825 = vmatpush.msra.mxu0 %v1824
        %v1826 = vand.u32 %v1724, 4294901760
        %v1827 = vsub.f32 %v1724, %v1826
        %1828 = vmatpush.msra.mxu0 %v1827
        %v1829 = vand.u32 %v1733, 4294901760
        %v1830 = vsub.f32 %v1733, %v1829
        %1831 = vmatmul.f32.gmra.mxu0 %v1830
        %v1832 = vpop.f32.mrf.mxu0
        %v1833 = vadd.f32 %v1803, %v1832
        %1834 = vdwg.mxu0
        %1835 = vmatpush.msra.mxu0 0.0
        %1836 = vmatpush.msra.mxu0 0.0
        %1837 = vmatpush.msra.mxu0 0.0
        %1838 = vmatpush.msra.mxu0 0.0
        %1839 = vmatpush.msra.mxu0 0.0
        %1840 = vmatpush.msra.mxu0 0.0
        %1841 = vmatpush.msra.mxu0 0.0
        %1842 = vmatpush.msra.mxu0 0.0
        %1843 = vmatpush.msra.mxu0 0.0
        %1844 = vmatpush.msra.mxu0 0.0
        %1845 = vmatpush.msra.mxu0 0.0
        %1846 = vmatpush.msra.mxu0 0.0
        %v1847 = vand.u32 %v1727, 4294901760
        %1848 = vmatpush.msra.mxu0 %v1847
        %v1849 = vand.u32 %v1726, 4294901760
        %1850 = vmatpush.msra.mxu0 %v1849
        %v1851 = vand.u32 %v1725, 4294901760
        %1852 = vmatpush.msra.mxu0 %v1851
        %v1853 = vand.u32 %v1724, 4294901760
        %1854 = vmatpush.msra.mxu0 %v1853
        %v1855 = vand.u32 %v1733, 4294901760
        %v1856 = vsub.f32 %v1733, %v1855
        %v1857 = vand.u32 %v1856, 4294901760
        %1858 = vmatmul.f32.gmra.mxu0 %v1857
        %v1859 = vpop.f32.mrf.mxu0
        %v1860 = vadd.f32 %v1833, %v1859
        %1861 = vdwg.mxu0
        %1862 = vmatpush.msra.mxu0 0.0
        %1863 = vmatpush.msra.mxu0 0.0
        %1864 = vmatpush.msra.mxu0 0.0
        %1865 = vmatpush.msra.mxu0 0.0
        %1866 = vmatpush.msra.mxu0 0.0
        %1867 = vmatpush.msra.mxu0 0.0
        %1868 = vmatpush.msra.mxu0 0.0
        %1869 = vmatpush.msra.mxu0 0.0
        %1870 = vmatpush.msra.mxu0 0.0
        %1871 = vmatpush.msra.mxu0 0.0
        %1872 = vmatpush.msra.mxu0 0.0
        %1873 = vmatpush.msra.mxu0 0.0
        %v1874 = vand.u32 %v1727, 4294901760
        %v1875 = vsub.f32 %v1727, %v1874
        %v1876 = vand.u32 %v1875, 4294901760
        %1877 = vmatpush.msra.mxu0 %v1876
        %v1878 = vand.u32 %v1726, 4294901760
        %v1879 = vsub.f32 %v1726, %v1878
        %v1880 = vand.u32 %v1879, 4294901760
        %1881 = vmatpush.msra.mxu0 %v1880
        %v1882 = vand.u32 %v1725, 4294901760
        %v1883 = vsub.f32 %v1725, %v1882
        %v1884 = vand.u32 %v1883, 4294901760
        %1885 = vmatpush.msra.mxu0 %v1884
        %v1886 = vand.u32 %v1724, 4294901760
        %v1887 = vsub.f32 %v1724, %v1886
        %v1888 = vand.u32 %v1887, 4294901760
        %1889 = vmatpush.msra.mxu0 %v1888
        %v1890 = vand.u32 %v1733, 4294901760
        %1891 = vmatmul.f32.gmra.mxu0 %v1890
        %v1892 = vpop.f32.mrf.mxu0
        %v1893 = vadd.f32 %v1860, %v1892
        %1894 = vdwg.mxu0
        %1895 = vmatpush.msra.mxu0 0.0
        %1896 = vmatpush.msra.mxu0 0.0
        %1897 = vmatpush.msra.mxu0 0.0
        %1898 = vmatpush.msra.mxu0 0.0
        %1899 = vmatpush.msra.mxu0 0.0
        %1900 = vmatpush.msra.mxu0 0.0
        %1901 = vmatpush.msra.mxu0 0.0
        %1902 = vmatpush.msra.mxu0 0.0
        %1903 = vmatpush.msra.mxu0 0.0
        %1904 = vmatpush.msra.mxu0 0.0
        %1905 = vmatpush.msra.mxu0 0.0
        %1906 = vmatpush.msra.mxu0 0.0
        %v1907 = vand.u32 %v1727, 4294901760
        %1908 = vmatpush.msra.mxu0 %v1907
        %v1909 = vand.u32 %v1726, 4294901760
        %1910 = vmatpush.msra.mxu0 %v1909
        %v1911 = vand.u32 %v1725, 4294901760
        %1912 = vmatpush.msra.mxu0 %v1911
        %v1913 = vand.u32 %v1724, 4294901760
        %1914 = vmatpush.msra.mxu0 %v1913
        %v1915 = vand.u32 %v1733, 4294901760
        %1916 = vmatmul.f32.gmra.mxu0 %v1915
        %v1917 = vpop.f32.mrf.mxu0
        %v1918 = vadd.f32 %v1893, %v1917
        %1919 = vdwg.mxu0
        %v1920 = vmax.f32 %v1918, 0.0
        %v1921 = vld [vmem:[%s12] sm:$0xff]
        %v1922 = vld [vmem:[%s12 + $0x8] sm:$0xff]
        %v1923 = vld [vmem:[%s12 + $0x10] sm:$0xff]
        %v1924 = vld [vmem:[%s12 + $0x18] sm:$0xff]
        %v1925 = vld [vmem:[%s12 + $0x20] sm:$0xff]
        %v1926 = vld [vmem:[%s12 + $0x28] sm:$0xff]
        %v1927 = vld [vmem:[%s12 + $0x30] sm:$0xff]
        %v1928 = vld [vmem:[%s12 + $0x38] sm:$0xff]
        %v1929 = vld [vmem:[%s12 + $0x40] sm:$0xff]
        %v1930 = vld [vmem:[%s12 + $0x48] sm:$0xff]
        %v1931 = vld [vmem:[%s12 + $0x50] sm:$0xff]
        %v1932 = vld [vmem:[%s12 + $0x58] sm:$0xff]
        %v1933 = vld [vmem:[%s12 + $0x60] sm:$0xff]
        %v1934 = vld [vmem:[%s12 + $0x68] sm:$0xff]
        %v1935 = vld [vmem:[%s12 + $0x70] sm:$0xff]
        %v1936 = vld [vmem:[%s12 + $0x78] sm:$0xff]
        %v1937 = vld [vmem:[%s13] sm:$0x1]
        %v1939 = vperm.slane %v1937, 0
        %v1941 = vand.u32 %v1936, 4294901760
        %1942 = vmatpush.msra.mxu0 %v1941
        %v1943 = vand.u32 %v1935, 4294901760
        %1944 = vmatpush.msra.mxu0 %v1943
        %v1945 = vand.u32 %v1934, 4294901760
        %1946 = vmatpush.msra.mxu0 %v1945
        %v1947 = vand.u32 %v1933, 4294901760
        %1948 = vmatpush.msra.mxu0 %v1947
        %v1949 = vand.u32 %v1932, 4294901760
        %1950 = vmatpush.msra.mxu0 %v1949
        %v1951 = vand.u32 %v1931, 4294901760
        %1952 = vmatpush.msra.mxu0 %v1951
        %v1953 = vand.u32 %v1930, 4294901760
        %1954 = vmatpush.msra.mxu0 %v1953
        %v1955 = vand.u32 %v1929, 4294901760
        %1956 = vmatpush.msra.mxu0 %v1955
        %v1957 = vand.u32 %v1928, 4294901760
        %1958 = vmatpush.msra.mxu0 %v1957
        %v1959 = vand.u32 %v1927, 4294901760
        %1960 = vmatpush.msra.mxu0 %v1959
        %v1961 = vand.u32 %v1926, 4294901760
        %1962 = vmatpush.msra.mxu0 %v1961
        %v1963 = vand.u32 %v1925, 4294901760
        %1964 = vmatpush.msra.mxu0 %v1963
        %v1965 = vand.u32 %v1924, 4294901760
        %1966 = vmatpush.msra.mxu0 %v1965
        %v1967 = vand.u32 %v1923, 4294901760
        %1968 = vmatpush.msra.mxu0 %v1967
        %v1969 = vand.u32 %v1922, 4294901760
        %1970 = vmatpush.msra.mxu0 %v1969
        %v1971 = vand.u32 %v1921, 4294901760
        %1972 = vmatpush.msra.mxu0 %v1971
        %v1973 = vand.u32 %v1920, 4294901760
        %v1974 = vsub.f32 %v1920, %v1973
        %v1975 = vand.u32 %v1974, 4294901760
        %v1976 = vsub.f32 %v1974, %v1975
        %v1977 = vand.u32 %v1976, 4294901760
        %1978 = vmatmul.f32.gmra.mxu0 %v1977
        %v1979 = vpop.f32.mrf.mxu0
        %v1980 = vadd.f32 %v1939, %v1979
        %1981 = vdwg.mxu0
        %v1982 = vand.u32 %v1936, 4294901760
        %v1983 = vsub.f32 %v1936, %v1982
        %v1984 = vand.u32 %v1983, 4294901760
        %v1985 = vsub.f32 %v1983, %v1984
        %v1986 = vand.u32 %v1985, 4294901760
        %1987 = vmatpush.msra.mxu0 %v1986
        %v1988 = vand.u32 %v1935, 4294901760
        %v1989 = vsub.f32 %v1935, %v1988
        %v1990 = vand.u32 %v1989, 4294901760
        %v1991 = vsub.f32 %v1989, %v1990
        %v1992 = vand.u32 %v1991, 4294901760
        %1993 = vmatpush.msra.mxu0 %v1992
        %v1994 = vand.u32 %v1934, 4294901760
        %v1995 = vsub.f32 %v1934, %v1994
        %v1996 = vand.u32 %v1995, 4294901760
        %v1997 = vsub.f32 %v1995, %v1996
        %v1998 = vand.u32 %v1997, 4294901760
        %1999 = vmatpush.msra.mxu0 %v1998
        %v2000 = vand.u32 %v1933, 4294901760
        %v2001 = vsub.f32 %v1933, %v2000
        %v2002 = vand.u32 %v2001, 4294901760
        %v2003 = vsub.f32 %v2001, %v2002
        %v2004 = vand.u32 %v2003, 4294901760
        %2005 = vmatpush.msra.mxu0 %v2004
        %v2006 = vand.u32 %v1932, 4294901760
        %v2007 = vsub.f32 %v1932, %v2006
        %v2008 = vand.u32 %v2007, 4294901760
        %v2009 = vsub.f32 %v2007, %v2008
        %v2010 = vand.u32 %v2009, 4294901760
        %2011 = vmatpush.msra.mxu0 %v2010
        %v2012 = vand.u32 %v1931, 4294901760
        %v2013 = vsub.f32 %v1931, %v2012
        %v2014 = vand.u32 %v2013, 4294901760
        %v2015 = vsub.f32 %v2013, %v2014
        %v2016 = vand.u32 %v2015, 4294901760
        %2017 = vmatpush.msra.mxu0 %v2016
        %v2018 = vand.u32 %v1930, 4294901760
        %v2019 = vsub.f32 %v1930, %v2018
        %v2020 = vand.u32 %v2019, 4294901760
        %v2021 = vsub.f32 %v2019, %v2020
        %v2022 = vand.u32 %v2021, 4294901760
        %2023 = vmatpush.msra.mxu0 %v2022
        %v2024 = vand.u32 %v1929, 4294901760
        %v2025 = vsub.f32 %v1929, %v2024
        %v2026 = vand.u32 %v2025, 4294901760
        %v2027 = vsub.f32 %v2025, %v2026
        %v2028 = vand.u32 %v2027, 4294901760
        %2029 = vmatpush.msra.mxu0 %v2028
        %v2030 = vand.u32 %v1928, 4294901760
        %v2031 = vsub.f32 %v1928, %v2030
        %v2032 = vand.u32 %v2031, 4294901760
        %v2033 = vsub.f32 %v2031, %v2032
        %v2034 = vand.u32 %v2033, 4294901760
        %2035 = vmatpush.msra.mxu0 %v2034
        %v2036 = vand.u32 %v1927, 4294901760
        %v2037 = vsub.f32 %v1927, %v2036
        %v2038 = vand.u32 %v2037, 4294901760
        %v2039 = vsub.f32 %v2037, %v2038
        %v2040 = vand.u32 %v2039, 4294901760
        %2041 = vmatpush.msra.mxu0 %v2040
        %v2042 = vand.u32 %v1926, 4294901760
        %v2043 = vsub.f32 %v1926, %v2042
        %v2044 = vand.u32 %v2043, 4294901760
        %v2045 = vsub.f32 %v2043, %v2044
        %v2046 = vand.u32 %v2045, 4294901760
        %2047 = vmatpush.msra.mxu0 %v2046
        %v2048 = vand.u32 %v1925, 4294901760
        %v2049 = vsub.f32 %v1925, %v2048
        %v2050 = vand.u32 %v2049, 4294901760
        %v2051 = vsub.f32 %v2049, %v2050
        %v2052 = vand.u32 %v2051, 4294901760
        %2053 = vmatpush.msra.mxu0 %v2052
        %v2054 = vand.u32 %v1924, 4294901760
        %v2055 = vsub.f32 %v1924, %v2054
        %v2056 = vand.u32 %v2055, 4294901760
        %v2057 = vsub.f32 %v2055, %v2056
        %v2058 = vand.u32 %v2057, 4294901760
        %2059 = vmatpush.msra.mxu0 %v2058
        %v2060 = vand.u32 %v1923, 4294901760
        %v2061 = vsub.f32 %v1923, %v2060
        %v2062 = vand.u32 %v2061, 4294901760
        %v2063 = vsub.f32 %v2061, %v2062
        %v2064 = vand.u32 %v2063, 4294901760
        %2065 = vmatpush.msra.mxu0 %v2064
        %v2066 = vand.u32 %v1922, 4294901760
        %v2067 = vsub.f32 %v1922, %v2066
        %v2068 = vand.u32 %v2067, 4294901760
        %v2069 = vsub.f32 %v2067, %v2068
        %v2070 = vand.u32 %v2069, 4294901760
        %2071 = vmatpush.msra.mxu0 %v2070
        %v2072 = vand.u32 %v1921, 4294901760
        %v2073 = vsub.f32 %v1921, %v2072
        %v2074 = vand.u32 %v2073, 4294901760
        %v2075 = vsub.f32 %v2073, %v2074
        %v2076 = vand.u32 %v2075, 4294901760
        %2077 = vmatpush.msra.mxu0 %v2076
        %v2078 = vand.u32 %v1920, 4294901760
        %2079 = vmatmul.f32.gmra.mxu0 %v2078
        %v2080 = vpop.f32.mrf.mxu0
        %v2081 = vadd.f32 %v1980, %v2080
        %2082 = vdwg.mxu0
        %v2083 = vand.u32 %v1936, 4294901760
        %v2084 = vsub.f32 %v1936, %v2083
        %2085 = vmatpush.msra.mxu0 %v2084
        %v2086 = vand.u32 %v1935, 4294901760
        %v2087 = vsub.f32 %v1935, %v2086
        %2088 = vmatpush.msra.mxu0 %v2087
        %v2089 = vand.u32 %v1934, 4294901760
        %v2090 = vsub.f32 %v1934, %v2089
        %2091 = vmatpush.msra.mxu0 %v2090
        %v2092 = vand.u32 %v1933, 4294901760
        %v2093 = vsub.f32 %v1933, %v2092
        %2094 = vmatpush.msra.mxu0 %v2093
        %v2095 = vand.u32 %v1932, 4294901760
        %v2096 = vsub.f32 %v1932, %v2095
        %2097 = vmatpush.msra.mxu0 %v2096
        %v2098 = vand.u32 %v1931, 4294901760
        %v2099 = vsub.f32 %v1931, %v2098
        %2100 = vmatpush.msra.mxu0 %v2099
        %v2101 = vand.u32 %v1930, 4294901760
        %v2102 = vsub.f32 %v1930, %v2101
        %2103 = vmatpush.msra.mxu0 %v2102
        %v2104 = vand.u32 %v1929, 4294901760
        %v2105 = vsub.f32 %v1929, %v2104
        %2106 = vmatpush.msra.mxu0 %v2105
        %v2107 = vand.u32 %v1928, 4294901760
        %v2108 = vsub.f32 %v1928, %v2107
        %2109 = vmatpush.msra.mxu0 %v2108
        %v2110 = vand.u32 %v1927, 4294901760
        %v2111 = vsub.f32 %v1927, %v2110
        %2112 = vmatpush.msra.mxu0 %v2111
        %v2113 = vand.u32 %v1926, 4294901760
        %v2114 = vsub.f32 %v1926, %v2113
        %2115 = vmatpush.msra.mxu0 %v2114
        %v2116 = vand.u32 %v1925, 4294901760
        %v2117 = vsub.f32 %v1925, %v2116
        %2118 = vmatpush.msra.mxu0 %v2117
        %v2119 = vand.u32 %v1924, 4294901760
        %v2120 = vsub.f32 %v1924, %v2119
        %2121 = vmatpush.msra.mxu0 %v2120
        %v2122 = vand.u32 %v1923, 4294901760
        %v2123 = vsub.f32 %v1923, %v2122
        %2124 = vmatpush.msra.mxu0 %v2123
        %v2125 = vand.u32 %v1922, 4294901760
        %v2126 = vsub.f32 %v1922, %v2125
        %2127 = vmatpush.msra.mxu0 %v2126
        %v2128 = vand.u32 %v1921, 4294901760
        %v2129 = vsub.f32 %v1921, %v2128
        %2130 = vmatpush.msra.mxu0 %v2129
        %v2131 = vand.u32 %v1920, 4294901760
        %v2132 = vsub.f32 %v1920, %v2131
        %2133 = vmatmul.f32.gmra.mxu0 %v2132
        %v2134 = vpop.f32.mrf.mxu0
        %v2135 = vadd.f32 %v2081, %v2134
        %2136 = vdwg.mxu0
        %v2137 = vand.u32 %v1936, 4294901760
        %2138 = vmatpush.msra.mxu0 %v2137
        %v2139 = vand.u32 %v1935, 4294901760
        %2140 = vmatpush.msra.mxu0 %v2139
        %v2141 = vand.u32 %v1934, 4294901760
        %2142 = vmatpush.msra.mxu0 %v2141
        %v2143 = vand.u32 %v1933, 4294901760
        %2144 = vmatpush.msra.mxu0 %v2143
        %v2145 = vand.u32 %v1932, 4294901760
        %2146 = vmatpush.msra.mxu0 %v2145
        %v2147 = vand.u32 %v1931, 4294901760
        %2148 = vmatpush.msra.mxu0 %v2147
        %v2149 = vand.u32 %v1930, 4294901760
        %2150 = vmatpush.msra.mxu0 %v2149
        %v2151 = vand.u32 %v1929, 4294901760
        %2152 = vmatpush.msra.mxu0 %v2151
        %v2153 = vand.u32 %v1928, 4294901760
        %2154 = vmatpush.msra.mxu0 %v2153
        %v2155 = vand.u32 %v1927, 4294901760
        %2156 = vmatpush.msra.mxu0 %v2155
        %v2157 = vand.u32 %v1926, 4294901760
        %2158 = vmatpush.msra.mxu0 %v2157
        %v2159 = vand.u32 %v1925, 4294901760
        %2160 = vmatpush.msra.mxu0 %v2159
        %v2161 = vand.u32 %v1924, 4294901760
        %2162 = vmatpush.msra.mxu0 %v2161
        %v2163 = vand.u32 %v1923, 4294901760
        %2164 = vmatpush.msra.mxu0 %v2163
        %v2165 = vand.u32 %v1922, 4294901760
        %2166 = vmatpush.msra.mxu0 %v2165
        %v2167 = vand.u32 %v1921, 4294901760
        %2168 = vmatpush.msra.mxu0 %v2167
        %v2169 = vand.u32 %v1920, 4294901760
        %v2170 = vsub.f32 %v1920, %v2169
        %v2171 = vand.u32 %v2170, 4294901760
        %2172 = vmatmul.f32.gmra.mxu0 %v2171
        %v2173 = vpop.f32.mrf.mxu0
        %v2174 = vadd.f32 %v2135, %v2173
        %2175 = vdwg.mxu0
        %v2176 = vand.u32 %v1936, 4294901760
        %v2177 = vsub.f32 %v1936, %v2176
        %v2178 = vand.u32 %v2177, 4294901760
        %2179 = vmatpush.msra.mxu0 %v2178
        %v2180 = vand.u32 %v1935, 4294901760
        %v2181 = vsub.f32 %v1935, %v2180
        %v2182 = vand.u32 %v2181, 4294901760
        %2183 = vmatpush.msra.mxu0 %v2182
        %v2184 = vand.u32 %v1934, 4294901760
        %v2185 = vsub.f32 %v1934, %v2184
        %v2186 = vand.u32 %v2185, 4294901760
        %2187 = vmatpush.msra.mxu0 %v2186
        %v2188 = vand.u32 %v1933, 4294901760
        %v2189 = vsub.f32 %v1933, %v2188
        %v2190 = vand.u32 %v2189, 4294901760
        %2191 = vmatpush.msra.mxu0 %v2190
        %v2192 = vand.u32 %v1932, 4294901760
        %v2193 = vsub.f32 %v1932, %v2192
        %v2194 = vand.u32 %v2193, 4294901760
        %2195 = vmatpush.msra.mxu0 %v2194
        %v2196 = vand.u32 %v1931, 4294901760
        %v2197 = vsub.f32 %v1931, %v2196
        %v2198 = vand.u32 %v2197, 4294901760
        %2199 = vmatpush.msra.mxu0 %v2198
        %v2200 = vand.u32 %v1930, 4294901760
        %v2201 = vsub.f32 %v1930, %v2200
        %v2202 = vand.u32 %v2201, 4294901760
        %2203 = vmatpush.msra.mxu0 %v2202
        %v2204 = vand.u32 %v1929, 4294901760
        %v2205 = vsub.f32 %v1929, %v2204
        %v2206 = vand.u32 %v2205, 4294901760
        %2207 = vmatpush.msra.mxu0 %v2206
        %v2208 = vand.u32 %v1928, 4294901760
        %v2209 = vsub.f32 %v1928, %v2208
        %v2210 = vand.u32 %v2209, 4294901760
        %2211 = vmatpush.msra.mxu0 %v2210
        %v2212 = vand.u32 %v1927, 4294901760
        %v2213 = vsub.f32 %v1927, %v2212
        %v2214 = vand.u32 %v2213, 4294901760
        %2215 = vmatpush.msra.mxu0 %v2214
        %v2216 = vand.u32 %v1926, 4294901760
        %v2217 = vsub.f32 %v1926, %v2216
        %v2218 = vand.u32 %v2217, 4294901760
        %2219 = vmatpush.msra.mxu0 %v2218
        %v2220 = vand.u32 %v1925, 4294901760
        %v2221 = vsub.f32 %v1925, %v2220
        %v2222 = vand.u32 %v2221, 4294901760
        %2223 = vmatpush.msra.mxu0 %v2222
        %v2224 = vand.u32 %v1924, 4294901760
        %v2225 = vsub.f32 %v1924, %v2224
        %v2226 = vand.u32 %v2225, 4294901760
        %2227 = vmatpush.msra.mxu0 %v2226
        %v2228 = vand.u32 %v1923, 4294901760
        %v2229 = vsub.f32 %v1923, %v2228
        %v2230 = vand.u32 %v2229, 4294901760
        %2231 = vmatpush.msra.mxu0 %v2230
        %v2232 = vand.u32 %v1922, 4294901760
        %v2233 = vsub.f32 %v1922, %v2232
        %v2234 = vand.u32 %v2233, 4294901760
        %2235 = vmatpush.msra.mxu0 %v2234
        %v2236 = vand.u32 %v1921, 4294901760
        %v2237 = vsub.f32 %v1921, %v2236
        %v2238 = vand.u32 %v2237, 4294901760
        %2239 = vmatpush.msra.mxu0 %v2238
        %v2240 = vand.u32 %v1920, 4294901760
        %2241 = vmatmul.f32.gmra.mxu0 %v2240
        %v2242 = vpop.f32.mrf.mxu0
        %v2243 = vadd.f32 %v2174, %v2242
        %2244 = vdwg.mxu0
        %v2245 = vand.u32 %v1936, 4294901760
        %2246 = vmatpush.msra.mxu0 %v2245
        %v2247 = vand.u32 %v1935, 4294901760
        %2248 = vmatpush.msra.mxu0 %v2247
        %v2249 = vand.u32 %v1934, 4294901760
        %2250 = vmatpush.msra.mxu0 %v2249
        %v2251 = vand.u32 %v1933, 4294901760
        %2252 = vmatpush.msra.mxu0 %v2251
        %v2253 = vand.u32 %v1932, 4294901760
        %2254 = vmatpush.msra.mxu0 %v2253
        %v2255 = vand.u32 %v1931, 4294901760
        %2256 = vmatpush.msra.mxu0 %v2255
        %v2257 = vand.u32 %v1930, 4294901760
        %2258 = vmatpush.msra.mxu0 %v2257
        %v2259 = vand.u32 %v1929, 4294901760
        %2260 = vmatpush.msra.mxu0 %v2259
        %v2261 = vand.u32 %v1928, 4294901760
        %2262 = vmatpush.msra.mxu0 %v2261
        %v2263 = vand.u32 %v1927, 4294901760
        %2264 = vmatpush.msra.mxu0 %v2263
        %v2265 = vand.u32 %v1926, 4294901760
        %2266 = vmatpush.msra.mxu0 %v2265
        %v2267 = vand.u32 %v1925, 4294901760
        %2268 = vmatpush.msra.mxu0 %v2267
        %v2269 = vand.u32 %v1924, 4294901760
        %2270 = vmatpush.msra.mxu0 %v2269
        %v2271 = vand.u32 %v1923, 4294901760
        %2272 = vmatpush.msra.mxu0 %v2271
        %v2273 = vand.u32 %v1922, 4294901760
        %2274 = vmatpush.msra.mxu0 %v2273
        %v2275 = vand.u32 %v1921, 4294901760
        %2276 = vmatpush.msra.mxu0 %v2275
        %v2277 = vand.u32 %v1920, 4294901760
        %2278 = vmatmul.f32.gmra.mxu0 %v2277
        %v2279 = vpop.f32.mrf.mxu0
        %v2280 = vadd.f32 %v2243, %v2279
        %2281 = vdwg.mxu0
        %v2282 = vadd.f32 %v1723, %v2280
        %v2283 = vsel %vm1140, %v2282, 0.0
        %2284 = vadd.xlane.f32.xlu0 %v2283
        %v2285 = vpop.xlane.xlu0 %2284
        %v2286 = vrcp.pop 32.0
        %v2287 = vmul.f32 32.0, %v2286
        %v2288 = vsub.f32 1.0, %v2287
        %v2289 = vmul.f32 %v2286, %v2288
        %v2290 = vadd.f32 %v2286, %v2289
        %vm2291 = vweird.f32 %v2286
        %v2292 = vsel %vm2291, %v2286, %v2290
        %v2293 = vmul.f32 %v2285, %v2292
        %v2294 = vsub.f32 %v2282, %v2293
        %v2295 = vmul.f32 %v2294, %v2294
        %v2296 = vsel %vm1140, %v2295, 0.0
        %2297 = vadd.xlane.f32.xlu0 %v2296
        %v2298 = vpop.xlane.xlu0 %2297
        %v2299 = vmul.f32 %v2298, %v2292
        %v2300 = vadd.f32 %v2299, 1e-05
        %v2301 = vrsqrt.pop %v2300
        %v2302 = vmul.f32 %v2301, %v2300
        %v2303 = vmul.f32 %v2302, %v2301
        %v2304 = vmul.f32 0.5, %v2303
        %v2305 = vsub.f32 1.5, %v2304
        %v2306 = vmul.f32 %v2301, %v2305
        %vm2307 = vweird.f32 %v2300
        %vm2308 = vweird.f32 %v2301
        %vm2309 = vmor %vm2307, %vm2308
        %v2310 = vsel %vm2309, %v2301, %v2306
        %v2311 = vmul.f32 %v2294, %v2310
        %v2312 = vld [vmem:[%s14] sm:$0x1]
        %v2314 = vperm.slane %v2312, 0
        %v2316 = vmul.f32 %v2311, %v2314
        %v2317 = vld [vmem:[%s15] sm:$0x1]
        %v2319 = vperm.slane %v2317, 0
        %v2321 = vadd.f32 %v2316, %v2319
        %2322 = vst.msk [vmem:[%s628] sm:$0xff] %vm1140, %v2321
        %s2323 = sand.u32 %s418, 1
        %s2324 = scalar_lea.sflag [#allocation6], %s2323
        %s2325 = sand.u32 %s418, 1
        %s2326 = smul.addr %s2325, 8
        %s2327 = scalar_lea.vmem [#allocation9], %s2326
        // Predicated region
        $region97: #{tpu_custom_call.1} parent=83 // pred_check
          %p2328 = pneg %p428
        $region98: #{tpu_custom_call.1} parent=83 // pred_check_branch
          %2330 = sbr.rel (%p2328) target = $region100
        $region99: #{tpu_custom_call.1} parent=83 // pred_region
          %2332 = vsyncadd %s2324, 0
          %s2333 = sadd.s32 %s41, %s40
          %s2334 = smul.addr %s2333, 8
          %s2335 = scalar_lea.hbm %s16, %s2334
          %s2337 = sshll.u32 %s2327, 4
          %s2338 = int_to_ptr.vmem [resolvable:$true] %s2337
          %s2339 = sshll.u32 %s2335, 4
          %s2340 = int_to_ptr.hbm [resolvable:$true] %s2339
          %2342 = dma.vmem_to_hbm [thread:$0]  %s2338, 128, %s2340, %s2324
        $region100: #{tpu_custom_call.1} parent=83 // pred_fallthru
          _
      $region84: #{tpu_custom_call.1} parent=5 // pred_fallthru
        _
      %p2343 = scmp.le.s32.totalorder 2, %s31
      // Predicated region
      $region101: #{tpu_custom_call.1} parent=5 // pred_check
        %p2344 = pneg %p2343
      $region102: #{tpu_custom_call.1} parent=5 // pred_check_branch
        %2346 = sbr.rel (%p2344) target = $region104
      $region103: #{tpu_custom_call.1} parent=5 // pred_region
        %s2347 = ssub.s32 %s31, 2
        // Predicated region
        $region105: #{tpu_custom_call.1} parent=103 // pred_check
          %p2348 = pneg %p434
        $region106: #{tpu_custom_call.1} parent=103 // pred_check_branch
          %2350 = sbr.rel (%p2348) target = $region108
        $region107: #{tpu_custom_call.1} parent=103 // pred_region
          %s2351 = sand.u32 %s419, 1
          %s2352 = scalar_lea.sflag [#allocation6], %s2351
          %s2353 = sand.u32 %s419, 1
          %s2354 = smul.addr %s2353, 8
          %s2355 = scalar_lea.vmem [#allocation9], %s2354
          %2357 = dma.done %s2352, 128
        $region108: #{tpu_custom_call.1} parent=103 // pred_fallthru
          _
      $region104: #{tpu_custom_call.1} parent=5 // pred_fallthru
        _
    $region6: #{tpu_custom_call.1} parent=1 // loop_footer
      %s35 = sadd.s32 1, %s31
    $region7: #{tpu_custom_call.1} parent=1 // loop_footer_branch
      %30 = sbr.rel target = $region3
    $region8: #{tpu_custom_call.1} parent=1 // loop_exit
      _
    %2358 = vsyncpa [#allocation5], 1
    %s2359 = scalar_lea.sflag [#allocation5], 1
    %2360 = vsyncpa %s2359, 1
    %2361 = vsyncpa [#allocation8], 1
    %s2362 = scalar_lea.sflag [#allocation8], 1
    %2363 = vsyncpa %s2362, 1
    %2364 = vsyncpa [#allocation6], 1
    %s2365 = scalar_lea.sflag [#allocation6], 1
    %2366 = vsyncpa %s2365, 1

// kernel: tpu_custom_call.1
$region0: #{tpu_custom_call.1}
  #allocation0 [shape = 'u32[]', space=smem, size = 0x4, offset = 0x4, fixed_abs, tag = 'smem constant byte address 0x4 - core index']
  #allocation1 [shape = 'u32[72,128]{1,0:T(1,128)}', space=vmem, size = 0x9000, scoped, tag = 'internal scratch']
  #allocation2 [shape = 'f32[32,8]{1,0:T(8,128)}', space=vmem, size = 0x4000, scoped, tag = 'scratch operand']
  #allocation3 [shape = 'f32[8,32]{1,0:T(8,128)}', space=vmem, size = 0x1000, scoped, tag = 'scratch operand']
  %s0 = inlined_call_operand.vmem [shape: f32[2,8,32], index: 0, kind: input, shape index: {}]
  %s1 = inlined_call_operand.vmem [shape: f32[2,8,32], index: 1, kind: input, shape index: {}]
  %s2 = inlined_call_operand.hbm [shape: f32[2,8,32], index: 2, kind: input, shape index: {}]
  %s3 = inlined_call_operand.hbm [shape: f32[2,8,8], index: 3, kind: input, shape index: {}]
  %s4 = inlined_call_operand.vmem [shape: f32[32,32], index: 4, kind: input, shape index: {}]
  %s5 = inlined_call_operand.vmem [shape: f32[1,32], index: 5, kind: input, shape index: {}]
  %s6 = inlined_call_operand.vmem [shape: f32[32,32], index: 6, kind: input, shape index: {}]
  %s7 = inlined_call_operand.vmem [shape: f32[32,1], index: 7, kind: input, shape index: {}]
  %s8 = inlined_call_operand.vmem [shape: f32[32,32], index: 8, kind: input, shape index: {}]
  %s9 = inlined_call_operand.vmem [shape: f32[1,32], index: 9, kind: input, shape index: {}]
  %s10 = inlined_call_operand.vmem [shape: f32[32,128], index: 10, kind: input, shape index: {}]
  %s11 = inlined_call_operand.vmem [shape: f32[1,128], index: 11, kind: input, shape index: {}]
  %s12 = inlined_call_operand.vmem [shape: f32[128,32], index: 12, kind: input, shape index: {}]
  %s13 = inlined_call_operand.vmem [shape: f32[1,32], index: 13, kind: input, shape index: {}]
  %s14 = inlined_call_operand.vmem [shape: f32[1,32], index: 14, kind: input, shape index: {}]
  %s15 = inlined_call_operand.vmem [shape: f32[1,32], index: 15, kind: input, shape index: {}]
  %s16 = inlined_call_operand.hbm [shape: f32[2,8,32], index: 16, kind: output, shape index: {}]
  %s17 = sld [smem:[#allocation0]]
  $region109: #{tpu_custom_call.1} parent=0
    _
  %s19 = ssub.s32 1, %s17
  %s20 = scalar_select 0, %s19, %s17
  $region1: #{tpu_custom_call.1} parent=0
    #allocation4 [shape = 'u8[8192]{0}', space=vmem, size = 0x2000, scoped, tag = 'input window, operand 2']
    #allocation5 [shape = 's32[2]{0}', space=sflag, size = 0x8, scoped, tag = 'scoped memory for tpu_custom_call.1']
    #allocation6 [shape = 's32[2]{0}', space=sflag, size = 0x8, scoped, tag = 'scoped memory for tpu_custom_call.1']
    #allocation7 [shape = 'u8[8192]{0}', space=vmem, size = 0x2000, scoped, tag = 'input window, operand 3']
    #allocation8 [shape = 's32[2]{0}', space=sflag, size = 0x8, scoped, tag = 'scoped memory for tpu_custom_call.1']
    #allocation9 [shape = 'u8[8192]{0}', space=vmem, size = 0x2000, scoped, tag = 'output window, operand 0']
    %21 = vsyncpa [#allocation5], 0
    %s22 = scalar_lea.sflag [#allocation5], 1
    %23 = vsyncpa %s22, 0
    %24 = vsyncpa [#allocation8], 0
    %s25 = scalar_lea.sflag [#allocation8], 1
    %26 = vsyncpa %s25, 0
    %27 = vsyncpa [#allocation6], 0
    %s28 = scalar_lea.sflag [#allocation6], 1
    %29 = vsyncpa %s28, 0
    loop: start=0, step=1, limit=4
    $region2: #{tpu_custom_call.1} parent=1 // loop_pre_header
      _
    $region3: #{tpu_custom_call.1} parent=1 // loop_header
      %s31 = sphi 0, %s35
      %p32 = scmp.ge.s32.totalorder %s31, 4
      %s38 = sphi 0, %s50
      %s39 = sphi 0, %s46
      %s40 = sphi 0, %s38
      %s41 = sphi 0, %s39
      %s42 = sphi 0, %s40
      %s43 = sphi 0, %s41
      %s55 = sphi 0, %s57
      %s58 = sphi 0, %s55
      %s59 = sphi 0, %s58
      %s75 = sphi 0, %s59
      %s81 = sphi 0, %s83
      %s84 = sphi 0, %s81
      %s85 = sphi 0, %s84
      %s101 = sphi 0, %s85
      %s107 = sphi 0, %s109
      %s110 = sphi 0, %s107
      %s111 = sphi 0, %s110
      %s127 = sphi 0, %s111
      %s135 = sphi 0, %s137
      %s138 = sphi 0, %s135
      %s139 = sphi 0, %s138
      %s155 = sphi 0, %s139
      %s159 = sphi 0, %s159
      %s161 = sphi 0, %s159
      %s162 = sphi 0, %s161
      %s176 = sphi 0, %s162
      %s180 = sphi 0, %s180
      %s182 = sphi 0, %s180
      %s183 = sphi 0, %s182
      %s197 = sphi 0, %s183
      %s201 = sphi 0, %s201
      %s203 = sphi 0, %s201
      %s204 = sphi 0, %s203
      %s218 = sphi 0, %s204
      %s222 = sphi 0, %s222
      %s224 = sphi 0, %s222
      %s225 = sphi 0, %s224
      %s239 = sphi 0, %s225
      %s243 = sphi 0, %s243
      %s245 = sphi 0, %s243
      %s246 = sphi 0, %s245
      %s260 = sphi 0, %s246
      %s264 = sphi 0, %s264
      %s266 = sphi 0, %s264
      %s267 = sphi 0, %s266
      %s281 = sphi 0, %s267
      %s285 = sphi 0, %s285
      %s287 = sphi 0, %s285
      %s288 = sphi 0, %s287
      %s302 = sphi 0, %s288
      %s306 = sphi 0, %s306
      %s308 = sphi 0, %s306
      %s309 = sphi 0, %s308
      %s323 = sphi 0, %s309
      %s327 = sphi 0, %s327
      %s329 = sphi 0, %s327
      %s330 = sphi 0, %s329
      %s344 = sphi 0, %s330
      %s348 = sphi 0, %s348
      %s350 = sphi 0, %s348
      %s351 = sphi 0, %s350
      %s365 = sphi 0, %s351
      %s369 = sphi 0, %s369
      %s371 = sphi 0, %s369
      %s372 = sphi 0, %s371
      %s386 = sphi 0, %s372
      %s390 = sphi 0, %s390
      %s392 = sphi 0, %s390
      %s393 = sphi 0, %s392
      %s407 = sphi 0, %s393
      %s415 = sphi 0, %s417
      %s418 = sphi 0, %s415
      %s419 = sphi 0, %s418
      %s435 = sphi 0, %s419
    $region4: #{tpu_custom_call.1} parent=1 // loop_header_branch
      %34 = sbr.rel (%p32) target = $region8
    $region5: #{tpu_custom_call.1} parent=1 // loop_body
      %s36 = ssub.s32 %s31, 1
      %s37 = ssub.s32 %s31, 2
      %s44 = sadd.s32 1, %s39
      %p45 = scmp.ge.s32.totalorder %s44, 1
      %s46 = scalar_select %p45, 0, %s44
      %s47 = sadd.s32 1, %s38
      %s48 = scalar_select %p45, %s47, %s38
      %p49 = scmp.ge.s32.totalorder %s48, 2
      %s50 = scalar_select %p49, 0, %s48
      %s51 = ssub.s32 %s38, %s50
      %s52 = ssub.s32 %s39, %s46
      %s53 = sor.u32 %s51, %s52
      %p54 = scmp.eq.s32.totalorder %s53, 0
      %s56 = sadd.s32 %s55, 1
      %s57 = scalar_select %p54, %s55, %s56
      %p60 = pneg %p54
      %p61 = scmp.eq.s32.totalorder %s31, 1
      %p62 = por %p60, %p61
      %p63 = scmp.ne.s32.totalorder %s55, %s58
      %p64 = scmp.eq.s32.totalorder %s31, 0
      %p65 = por %p63, %p64
      %p66 = scmp.ne.s32.totalorder %s55, %s58
      %p67 = scmp.eq.s32.totalorder %s36, 1
      %p68 = por %p66, %p67
      %p69 = scmp.ne.s32.totalorder %s58, %s59
      %p70 = scmp.eq.s32.totalorder %s36, 0
      %p71 = por %p69, %p70
      %p72 = scmp.ne.s32.totalorder %s58, %s59
      %p73 = scmp.eq.s32.totalorder %s37, 1
      %p74 = por %p72, %p73
      %p76 = scmp.ne.s32.totalorder %s59, %s75
      %p77 = scmp.eq.s32.totalorder %s37, 0
      %p78 = por %p76, %p77
      %s79 = ssub.s32 %s38, %s50
      %p80 = scmp.eq.s32.totalorder %s79, 0
      %s82 = sadd.s32 %s81, 1
      %s83 = scalar_select %p80, %s81, %s82
      %p86 = pneg %p80
      %p87 = scmp.eq.s32.totalorder %s31, 1
      %p88 = por %p86, %p87
      %p89 = scmp.ne.s32.totalorder %s81, %s84
      %p90 = scmp.eq.s32.totalorder %s31, 0
      %p91 = por %p89, %p90
      %p92 = scmp.ne.s32.totalorder %s81, %s84
      %p93 = scmp.eq.s32.totalorder %s36, 1
      %p94 = por %p92, %p93
      %p95 = scmp.ne.s32.totalorder %s84, %s85
      %p96 = scmp.eq.s32.totalorder %s36, 0
      %p97 = por %p95, %p96
      %p98 = scmp.ne.s32.totalorder %s84, %s85
      %p99 = scmp.eq.s32.totalorder %s37, 1
      %p100 = por %p98, %p99
      %p102 = scmp.ne.s32.totalorder %s85, %s101
      %p103 = scmp.eq.s32.totalorder %s37, 0
      %p104 = por %p102, %p103
      %s105 = ssub.s32 %s38, %s50
      %p106 = scmp.eq.s32.totalorder %s105, 0
      %s108 = sadd.s32 %s107, 1
      %s109 = scalar_select %p106, %s107, %s108
      %p112 = pneg %p106
      %p113 = scmp.eq.s32.totalorder %s31, 1
      %p114 = por %p112, %p113
      %p115 = scmp.ne.s32.totalorder %s107, %s110
      %p116 = scmp.eq.s32.totalorder %s31, 0
      %p117 = por %p115, %p116
      %p118 = scmp.ne.s32.totalorder %s107, %s110
      %p119 = scmp.eq.s32.totalorder %s36, 1
      %p120 = por %p118, %p119
      %p121 = scmp.ne.s32.totalorder %s110, %s111
      %p122 = scmp.eq.s32.totalorder %s36, 0
      %p123 = por %p121, %p122
      %p124 = scmp.ne.s32.totalorder %s110, %s111
      %p125 = scmp.eq.s32.totalorder %s37, 1
      %p126 = por %p124, %p125
      %p128 = scmp.ne.s32.totalorder %s111, %s127
      %p129 = scmp.eq.s32.totalorder %s37, 0
      %p130 = por %p128, %p129
      %s131 = ssub.s32 %s38, %s50
      %s132 = ssub.s32 %s39, %s46
      %s133 = sor.u32 %s131, %s132
      %p134 = scmp.eq.s32.totalorder %s133, 0
      %s136 = sadd.s32 %s135, 1
      %s137 = scalar_select %p134, %s135, %s136
      %p140 = pneg %p134
      %p141 = scmp.eq.s32.totalorder %s31, 1
      %p142 = por %p140, %p141
      %p143 = scmp.ne.s32.totalorder %s135, %s138
      %p144 = scmp.eq.s32.totalorder %s31, 0
      %p145 = por %p143, %p144
      %p146 = scmp.ne.s32.totalorder %s135, %s138
      %p147 = scmp.eq.s32.totalorder %s36, 1
      %p148 = por %p146, %p147
      %p149 = scmp.ne.s32.totalorder %s138, %s139
      %p150 = scmp.eq.s32.totalorder %s36, 0
      %p151 = por %p149, %p150
      %p152 = scmp.ne.s32.totalorder %s138, %s139
      %p153 = scmp.eq.s32.totalorder %s37, 1
      %p154 = por %p152, %p153
      %p156 = scmp.ne.s32.totalorder %s139, %s155
      %p157 = scmp.eq.s32.totalorder %s37, 0
      %p158 = por %p156, %p157
      %s160 = sadd.s32 %s159, 1
      %p163 = scmp.eq.s32.totalorder %s31, 1
      %p164 = scmp.ne.s32.totalorder %s159, %s161
      %p165 = scmp.eq.s32.totalorder %s31, 0
      %p166 = por %p164, %p165
      %p167 = scmp.ne.s32.totalorder %s159, %s161
      %p168 = scmp.eq.s32.totalorder %s36, 1
      %p169 = por %p167, %p168
      %p170 = scmp.ne.s32.totalorder %s161, %s162
      %p171 = scmp.eq.s32.totalorder %s36, 0
      %p172 = por %p170, %p171
      %p173 = scmp.ne.s32.totalorder %s161, %s162
      %p174 = scmp.eq.s32.totalorder %s37, 1
      %p175 = por %p173, %p174
      %p177 = scmp.ne.s32.totalorder %s162, %s176
      %p178 = scmp.eq.s32.totalorder %s37, 0
      %p179 = por %p177, %p178
      %s181 = sadd.s32 %s180, 1
      %p184 = scmp.eq.s32.totalorder %s31, 1
      %p185 = scmp.ne.s32.totalorder %s180, %s182
      %p186 = scmp.eq.s32.totalorder %s31, 0
      %p187 = por %p185, %p186
      %p188 = scmp.ne.s32.totalorder %s180, %s182
      %p189 = scmp.eq.s32.totalorder %s36, 1
      %p190 = por %p188, %p189
      %p191 = scmp.ne.s32.totalorder %s182, %s183
      %p192 = scmp.eq.s32.totalorder %s36, 0
      %p193 = por %p191, %p192
      %p194 = scmp.ne.s32.totalorder %s182, %s183
      %p195 = scmp.eq.s32.totalorder %s37, 1
      %p196 = por %p194, %p195
      %p198 = scmp.ne.s32.totalorder %s183, %s197
      %p199 = scmp.eq.s32.totalorder %s37, 0
      %p200 = por %p198, %p199
      %s202 = sadd.s32 %s201, 1
      %p205 = scmp.eq.s32.totalorder %s31, 1
      %p206 = scmp.ne.s32.totalorder %s201, %s203
      %p207 = scmp.eq.s32.totalorder %s31, 0
      %p208 = por %p206, %p207
      %p209 = scmp.ne.s32.totalorder %s201, %s203
      %p210 = scmp.eq.s32.totalorder %s36, 1
      %p211 = por %p209, %p210
      %p212 = scmp.ne.s32.totalorder %s203, %s204
      %p213 = scmp.eq.s32.totalorder %s36, 0
      %p214 = por %p212, %p213
      %p215 = scmp.ne.s32.totalorder %s203, %s204
      %p216 = scmp.eq.s32.totalorder %s37, 1
      %p217 = por %p215, %p216
      %p219 = scmp.ne.s32.totalorder %s204, %s218
      %p220 = scmp.eq.s32.totalorder %s37, 0
      %p221 = por %p219, %p220
      %s223 = sadd.s32 %s222, 1
      %p226 = scmp.eq.s32.totalorder %s31, 1
      %p227 = scmp.ne.s32.totalorder %s222, %s224
      %p228 = scmp.eq.s32.totalorder %s31, 0
      %p229 = por %p227, %p228
      %p230 = scmp.ne.s32.totalorder %s222, %s224
      %p231 = scmp.eq.s32.totalorder %s36, 1
      %p232 = por %p230, %p231
      %p233 = scmp.ne.s32.totalorder %s224, %s225
      %p234 = scmp.eq.s32.totalorder %s36, 0
      %p235 = por %p233, %p234
      %p236 = scmp.ne.s32.totalorder %s224, %s225
      %p237 = scmp.eq.s32.totalorder %s37, 1
      %p238 = por %p236, %p237
      %p240 = scmp.ne.s32.totalorder %s225, %s239
      %p241 = scmp.eq.s32.totalorder %s37, 0
      %p242 = por %p240, %p241
      %s244 = sadd.s32 %s243, 1
      %p247 = scmp.eq.s32.totalorder %s31, 1
      %p248 = scmp.ne.s32.totalorder %s243, %s245
      %p249 = scmp.eq.s32.totalorder %s31, 0
      %p250 = por %p248, %p249
      %p251 = scmp.ne.s32.totalorder %s243, %s245
      %p252 = scmp.eq.s32.totalorder %s36, 1
      %p253 = por %p251, %p252
      %p254 = scmp.ne.s32.totalorder %s245, %s246
      %p255 = scmp.eq.s32.totalorder %s36, 0
      %p256 = por %p254, %p255
      %p257 = scmp.ne.s32.totalorder %s245, %s246
      %p258 = scmp.eq.s32.totalorder %s37, 1
      %p259 = por %p257, %p258
      %p261 = scmp.ne.s32.totalorder %s246, %s260
      %p262 = scmp.eq.s32.totalorder %s37, 0
      %p263 = por %p261, %p262
      %s265 = sadd.s32 %s264, 1
      %p268 = scmp.eq.s32.totalorder %s31, 1
      %p269 = scmp.ne.s32.totalorder %s264, %s266
      %p270 = scmp.eq.s32.totalorder %s31, 0
      %p271 = por %p269, %p270
      %p272 = scmp.ne.s32.totalorder %s264, %s266
      %p273 = scmp.eq.s32.totalorder %s36, 1
      %p274 = por %p272, %p273
      %p275 = scmp.ne.s32.totalorder %s266, %s267
      %p276 = scmp.eq.s32.totalorder %s36, 0
      %p277 = por %p275, %p276
      %p278 = scmp.ne.s32.totalorder %s266, %s267
      %p279 = scmp.eq.s32.totalorder %s37, 1
      %p280 = por %p278, %p279
      %p282 = scmp.ne.s32.totalorder %s267, %s281
      %p283 = scmp.eq.s32.totalorder %s37, 0
      %p284 = por %p282, %p283
      %s286 = sadd.s32 %s285, 1
      %p289 = scmp.eq.s32.totalorder %s31, 1
      %p290 = scmp.ne.s32.totalorder %s285, %s287
      %p291 = scmp.eq.s32.totalorder %s31, 0
      %p292 = por %p290, %p291
      %p293 = scmp.ne.s32.totalorder %s285, %s287
      %p294 = scmp.eq.s32.totalorder %s36, 1
      %p295 = por %p293, %p294
      %p296 = scmp.ne.s32.totalorder %s287, %s288
      %p297 = scmp.eq.s32.totalorder %s36, 0
      %p298 = por %p296, %p297
      %p299 = scmp.ne.s32.totalorder %s287, %s288
      %p300 = scmp.eq.s32.totalorder %s37, 1
      %p301 = por %p299, %p300
      %p303 = scmp.ne.s32.totalorder %s288, %s302
      %p304 = scmp.eq.s32.totalorder %s37, 0
      %p305 = por %p303, %p304
      %s307 = sadd.s32 %s306, 1
      %p310 = scmp.eq.s32.totalorder %s31, 1
      %p311 = scmp.ne.s32.totalorder %s306, %s308
      %p312 = scmp.eq.s32.totalorder %s31, 0
      %p313 = por %p311, %p312
      %p314 = scmp.ne.s32.totalorder %s306, %s308
      %p315 = scmp.eq.s32.totalorder %s36, 1
      %p316 = por %p314, %p315
      %p317 = scmp.ne.s32.totalorder %s308, %s309
      %p318 = scmp.eq.s32.totalorder %s36, 0
      %p319 = por %p317, %p318
      %p320 = scmp.ne.s32.totalorder %s308, %s309
      %p321 = scmp.eq.s32.totalorder %s37, 1
      %p322 = por %p320, %p321
      %p324 = scmp.ne.s32.totalorder %s309, %s323
      %p325 = scmp.eq.s32.totalorder %s37, 0
      %p326 = por %p324, %p325
      %s328 = sadd.s32 %s327, 1
      %p331 = scmp.eq.s32.totalorder %s31, 1
      %p332 = scmp.ne.s32.totalorder %s327, %s329
      %p333 = scmp.eq.s32.totalorder %s31, 0
      %p334 = por %p332, %p333
      %p335 = scmp.ne.s32.totalorder %s327, %s329
      %p336 = scmp.eq.s32.totalorder %s36, 1
      %p337 = por %p335, %p336
      %p338 = scmp.ne.s32.totalorder %s329, %s330
      %p339 = scmp.eq.s32.totalorder %s36, 0
      %p340 = por %p338, %p339
      %p341 = scmp.ne.s32.totalorder %s329, %s330
      %p342 = scmp.eq.s32.totalorder %s37, 1
      %p343 = por %p341, %p342
      %p345 = scmp.ne.s32.totalorder %s330, %s344
      %p346 = scmp.eq.s32.totalorder %s37, 0
      %p347 = por %p345, %p346
      %s349 = sadd.s32 %s348, 1
      %p352 = scmp.eq.s32.totalorder %s31, 1
      %p353 = scmp.ne.s32.totalorder %s348, %s350
      %p354 = scmp.eq.s32.totalorder %s31, 0
      %p355 = por %p353, %p354
      %p356 = scmp.ne.s32.totalorder %s348, %s350
      %p357 = scmp.eq.s32.totalorder %s36, 1
      %p358 = por %p356, %p357
      %p359 = scmp.ne.s32.totalorder %s350, %s351
      %p360 = scmp.eq.s32.totalorder %s36, 0
      %p361 = por %p359, %p360
      %p362 = scmp.ne.s32.totalorder %s350, %s351
      %p363 = scmp.eq.s32.totalorder %s37, 1
      %p364 = por %p362, %p363
      %p366 = scmp.ne.s32.totalorder %s351, %s365
      %p367 = scmp.eq.s32.totalorder %s37, 0
      %p368 = por %p366, %p367
      %s370 = sadd.s32 %s369, 1
      %p373 = scmp.eq.s32.totalorder %s31, 1
      %p374 = scmp.ne.s32.totalorder %s369, %s371
      %p375 = scmp.eq.s32.totalorder %s31, 0
      %p376 = por %p374, %p375
      %p377 = scmp.ne.s32.totalorder %s369, %s371
      %p378 = scmp.eq.s32.totalorder %s36, 1
      %p379 = por %p377, %p378
      %p380 = scmp.ne.s32.totalorder %s371, %s372
      %p381 = scmp.eq.s32.totalorder %s36, 0
      %p382 = por %p380, %p381
      %p383 = scmp.ne.s32.totalorder %s371, %s372
      %p384 = scmp.eq.s32.totalorder %s37, 1
      %p385 = por %p383, %p384
      %p387 = scmp.ne.s32.totalorder %s372, %s386
      %p388 = scmp.eq.s32.totalorder %s37, 0
      %p389 = por %p387, %p388
      %s391 = sadd.s32 %s390, 1
      %p394 = scmp.eq.s32.totalorder %s31, 1
      %p395 = scmp.ne.s32.totalorder %s390, %s392
      %p396 = scmp.eq.s32.totalorder %s31, 0
      %p397 = por %p395, %p396
      %p398 = scmp.ne.s32.totalorder %s390, %s392
      %p399 = scmp.eq.s32.totalorder %s36, 1
      %p400 = por %p398, %p399
      %p401 = scmp.ne.s32.totalorder %s392, %s393
      %p402 = scmp.eq.s32.totalorder %s36, 0
      %p403 = por %p401, %p402
      %p404 = scmp.ne.s32.totalorder %s392, %s393
      %p405 = scmp.eq.s32.totalorder %s37, 1
      %p406 = por %p404, %p405
      %p408 = scmp.ne.s32.totalorder %s393, %s407
      %p409 = scmp.eq.s32.totalorder %s37, 0
      %p410 = por %p408, %p409
      %s411 = ssub.s32 %s38, %s50
      %s412 = ssub.s32 %s39, %s46
      %s413 = sor.u32 %s411, %s412
      %p414 = scmp.eq.s32.totalorder %s413, 0
      %s416 = sadd.s32 %s415, 1
      %s417 = scalar_select %p414, %s415, %s416
      %p420 = pneg %p414
      %p421 = scmp.eq.s32.totalorder %s31, 1
      %p422 = por %p420, %p421
      %p423 = scmp.ne.s32.totalorder %s415, %s418
      %p424 = scmp.eq.s32.totalorder %s31, 0
      %p425 = por %p423, %p424
      %p426 = scmp.ne.s32.totalorder %s415, %s418
      %p427 = scmp.eq.s32.totalorder %s36, 1
      %p428 = por %p426, %p427
      %p429 = scmp.ne.s32.totalorder %s418, %s419
      %p430 = scmp.eq.s32.totalorder %s36, 0
      %p431 = por %p429, %p430
      %p432 = scmp.ne.s32.totalorder %s418, %s419
      %p433 = scmp.eq.s32.totalorder %s37, 1
      %p434 = por %p432, %p433
      %p436 = scmp.ne.s32.totalorder %s419, %s435
      %p437 = scmp.eq.s32.totalorder %s37, 0
      %p438 = por %p436, %p437
      %p439 = scmp.le.s32.totalorder 1, %s31
      %p440 = scmp.lt.s32.totalorder %s31, 3
      %p441 = pnand %p439, %p440
      %p442 = pneg %p441
      // Predicated region
      $region9: #{tpu_custom_call.1} parent=5 // pred_check
        _
      $region10: #{tpu_custom_call.1} parent=5 // pred_check_branch
        %444 = sbr.rel (%p441) target = $region12
      $region11: #{tpu_custom_call.1} parent=5 // pred_region
        %s445 = ssub.s32 %s31, 1
        // Predicated region
        $region13: #{tpu_custom_call.1} parent=11 // pred_check
          %p446 = pneg %p172
        $region14: #{tpu_custom_call.1} parent=11 // pred_check_branch
          %448 = sbr.rel (%p446) target = $region16
        $region15: #{tpu_custom_call.1} parent=11 // pred_region
          _
        $region16: #{tpu_custom_call.1} parent=11 // pred_fallthru
          _
        // Predicated region
        $region17: #{tpu_custom_call.1} parent=11 // pred_check
          %p449 = pneg %p193
        $region18: #{tpu_custom_call.1} parent=11 // pred_check_branch
          %451 = sbr.rel (%p449) target = $region20
        $region19: #{tpu_custom_call.1} parent=11 // pred_region
          _
        $region20: #{tpu_custom_call.1} parent=11 // pred_fallthru
          _
        // Predicated region
        $region21: #{tpu_custom_call.1} parent=11 // pred_check
          %p452 = pneg %p214
        $region22: #{tpu_custom_call.1} parent=11 // pred_check_branch
          %454 = sbr.rel (%p452) target = $region24
        $region23: #{tpu_custom_call.1} parent=11 // pred_region
          _
        $region24: #{tpu_custom_call.1} parent=11 // pred_fallthru
          _
        // Predicated region
        $region25: #{tpu_custom_call.1} parent=11 // pred_check
          %p455 = pneg %p235
        $region26: #{tpu_custom_call.1} parent=11 // pred_check_branch
          %457 = sbr.rel (%p455) target = $region28
        $region27: #{tpu_custom_call.1} parent=11 // pred_region
          _
        $region28: #{tpu_custom_call.1} parent=11 // pred_fallthru
          _
        // Predicated region
        $region29: #{tpu_custom_call.1} parent=11 // pred_check
          %p458 = pneg %p256
        $region30: #{tpu_custom_call.1} parent=11 // pred_check_branch
          %460 = sbr.rel (%p458) target = $region32
        $region31: #{tpu_custom_call.1} parent=11 // pred_region
          _
        $region32: #{tpu_custom_call.1} parent=11 // pred_fallthru
          _
        // Predicated region
        $region33: #{tpu_custom_call.1} parent=11 // pred_check
          %p461 = pneg %p277
        $region34: #{tpu_custom_call.1} parent=11 // pred_check_branch
          %463 = sbr.rel (%p461) target = $region36
        $region35: #{tpu_custom_call.1} parent=11 // pred_region
          _
        $region36: #{tpu_custom_call.1} parent=11 // pred_fallthru
          _
        // Predicated region
        $region37: #{tpu_custom_call.1} parent=11 // pred_check
          %p464 = pneg %p298
        $region38: #{tpu_custom_call.1} parent=11 // pred_check_branch
          %466 = sbr.rel (%p464) target = $region40
        $region39: #{tpu_custom_call.1} parent=11 // pred_region
          _
        $region40: #{tpu_custom_call.1} parent=11 // pred_fallthru
          _
        // Predicated region
        $region41: #{tpu_custom_call.1} parent=11 // pred_check
          %p467 = pneg %p319
        $region42: #{tpu_custom_call.1} parent=11 // pred_check_branch
          %469 = sbr.rel (%p467) target = $region44
        $region43: #{tpu_custom_call.1} parent=11 // pred_region
          _
        $region44: #{tpu_custom_call.1} parent=11 // pred_fallthru
          _
        // Predicated region
        $region45: #{tpu_custom_call.1} parent=11 // pred_check
          %p470 = pneg %p340
        $region46: #{tpu_custom_call.1} parent=11 // pred_check_branch
          %472 = sbr.rel (%p470) target = $region48
        $region47: #{tpu_custom_call.1} parent=11 // pred_region
          _
        $region48: #{tpu_custom_call.1} parent=11 // pred_fallthru
          _
        // Predicated region
        $region49: #{tpu_custom_call.1} parent=11 // pred_check
          %p473 = pneg %p361
        $region50: #{tpu_custom_call.1} parent=11 // pred_check_branch
          %475 = sbr.rel (%p473) target = $region52
        $region51: #{tpu_custom_call.1} parent=11 // pred_region
          _
        $region52: #{tpu_custom_call.1} parent=11 // pred_fallthru
          _
        // Predicated region
        $region53: #{tpu_custom_call.1} parent=11 // pred_check
          %p476 = pneg %p382
        $region54: #{tpu_custom_call.1} parent=11 // pred_check_branch
          %478 = sbr.rel (%p476) target = $region56
        $region55: #{tpu_custom_call.1} parent=11 // pred_region
          _
        $region56: #{tpu_custom_call.1} parent=11 // pred_fallthru
          _
        // Predicated region
        $region57: #{tpu_custom_call.1} parent=11 // pred_check
          %p479 = pneg %p403
        $region58: #{tpu_custom_call.1} parent=11 // pred_check_branch
          %481 = sbr.rel (%p479) target = $region60
        $region59: #{tpu_custom_call.1} parent=11 // pred_region
          _
        $region60: #{tpu_custom_call.1} parent=11 // pred_fallthru
          _
      $region12: #{tpu_custom_call.1} parent=5 // pred_fallthru
        _
      %p482 = scmp.lt.s32.totalorder %s31, 2
      // Predicated region
      $region61: #{tpu_custom_call.1} parent=5 // pred_check
        %p483 = pneg %p482
      $region62: #{tpu_custom_call.1} parent=5 // pred_check_branch
        %485 = sbr.rel (%p483) target = $region64
      $region63: #{tpu_custom_call.1} parent=5 // pred_region
        // Predicated region
        $region65: #{tpu_custom_call.1} parent=63 // pred_check
          %p486 = pneg %p65
        $region66: #{tpu_custom_call.1} parent=63 // pred_check_branch
          %488 = sbr.rel (%p486) target = $region68
        $region67: #{tpu_custom_call.1} parent=63 // pred_region
          %p489 = scmp.lt.s32.totalorder %s38, 1
          %s490 = scalar_select %p489, %s38, 1
          %p491 = scmp.lt.s32.totalorder %s39, 0
          %s492 = scalar_select %p491, %s39, 0
          %s493 = sadd.s32 %s492, %s490
          %s494 = smul.addr %s493, 8
          %s495 = scalar_lea.vmem %s0, %s494
        $region68: #{tpu_custom_call.1} parent=63 // pred_fallthru
          _
        // Predicated region
        $region69: #{tpu_custom_call.1} parent=63 // pred_check
          %p496 = pneg %p91
        $region70: #{tpu_custom_call.1} parent=63 // pred_check_branch
          %498 = sbr.rel (%p496) target = $region72
        $region71: #{tpu_custom_call.1} parent=63 // pred_region
          %p499 = scmp.lt.s32.totalorder %s38, 1
          %s500 = scalar_select %p499, %s38, 1
          %s501 = smul.addr %s500, 8
          %s502 = scalar_lea.vmem %s1, %s501
        $region72: #{tpu_custom_call.1} parent=63 // pred_fallthru
          _
        // Predicated region
        $region73: #{tpu_custom_call.1} parent=63 // pred_check
          %p503 = pneg %p117
        $region74: #{tpu_custom_call.1} parent=63 // pred_check_branch
          %505 = sbr.rel (%p503) target = $region76
        $region75: #{tpu_custom_call.1} parent=63 // pred_region
          %s506 = sand.u32 %s107, 1
          %s507 = scalar_lea.sflag [#allocation5], %s506
          %s508 = sand.u32 %s107, 1
          %s509 = smul.addr %s508, 8
          %s510 = scalar_lea.vmem [#allocation4], %s509
          %512 = vsyncadd %s507, 0
          %s513 = smul.addr %s38, 8
          %s514 = scalar_lea.hbm %s2, %s513
          %s516 = sshll.u32 %s514, 4
          %s517 = int_to_ptr.hbm [resolvable:$true] %s516
          %s518 = sshll.u32 %s510, 4
          %s519 = int_to_ptr.vmem [resolvable:$true] %s518
          %521 = dma.hbm_to_vmem [thread:$0]  %s517, 128, %s519, %s507
        $region76: #{tpu_custom_call.1} parent=63 // pred_fallthru
          _
        // Predicated region
        $region77: #{tpu_custom_call.1} parent=63 // pred_check
          %p522 = pneg %p145
        $region78: #{tpu_custom_call.1} parent=63 // pred_check_branch
          %524 = sbr.rel (%p522) target = $region80
        $region79: #{tpu_custom_call.1} parent=63 // pred_region
          %s525 = sand.u32 %s135, 1
          %s526 = scalar_lea.sflag [#allocation8], %s525
          %s527 = sand.u32 %s135, 1
          %s528 = smul.addr %s527, 8
          %s529 = scalar_lea.vmem [#allocation7], %s528
          %531 = vsyncadd %s526, 0
          %s532 = sadd.s32 %s39, %s38
          %s533 = smul.addr %s532, 8
          %s534 = scalar_lea.hbm %s3, %s533
          %s536 = sshll.u32 %s534, 4
          %s537 = int_to_ptr.hbm [resolvable:$true] %s536
          %s538 = sshll.u32 %s529, 4
          %s539 = int_to_ptr.vmem [resolvable:$true] %s538
          %541 = dma.hbm_to_vmem [thread:$0]  %s537, 128, %s539, %s526
        $region80: #{tpu_custom_call.1} parent=63 // pred_fallthru
          _
      $region64: #{tpu_custom_call.1} parent=5 // pred_fallthru
        _
      %p542 = scmp.le.s32.totalorder 1, %s31
      %p543 = scmp.lt.s32.totalorder %s31, 3
      %p544 = pnand %p542, %p543
      %p545 = pneg %p544
      // Predicated region
      $region81: #{tpu_custom_call.1} parent=5 // pred_check
        _
      $region82: #{tpu_custom_call.1} parent=5 // pred_check_branch
        %547 = sbr.rel (%p544) target = $region84
      $region83: #{tpu_custom_call.1} parent=5 // pred_region
        %s548 = ssub.s32 %s31, 1
        %s549 = sand.u32 %s110, 1
        %s550 = scalar_lea.sflag [#allocation5], %s549
        %s551 = sand.u32 %s110, 1
        %s552 = smul.addr %s551, 8
        %s553 = scalar_lea.vmem [#allocation4], %s552
        // Predicated region
        $region85: #{tpu_custom_call.1} parent=83 // pred_check
          %p554 = pneg %p123
        $region86: #{tpu_custom_call.1} parent=83 // pred_check_branch
          %556 = sbr.rel (%p554) target = $region88
        $region87: #{tpu_custom_call.1} parent=83 // pred_region
          %558 = dma.done %s550, 128
        $region88: #{tpu_custom_call.1} parent=83 // pred_fallthru
          _
        %s559 = sand.u32 %s138, 1
        %s560 = scalar_lea.sflag [#allocation8], %s559
        %s561 = sand.u32 %s138, 1
        %s562 = smul.addr %s561, 8
        %s563 = scalar_lea.vmem [#allocation7], %s562
        // Predicated region
        $region89: #{tpu_custom_call.1} parent=83 // pred_check
          %p564 = pneg %p151
        $region90: #{tpu_custom_call.1} parent=83 // pred_check_branch
          %566 = sbr.rel (%p564) target = $region92
        $region91: #{tpu_custom_call.1} parent=83 // pred_region
          %568 = dma.done %s560, 128
        $region92: #{tpu_custom_call.1} parent=83 // pred_fallthru
          _
        %p569 = scmp.lt.s32.totalorder %s40, 1
        %s570 = scalar_select %p569, %s40, 1
        %p571 = scmp.lt.s32.totalorder %s41, 0
        %s572 = scalar_select %p571, %s41, 0
        %s573 = sadd.s32 %s572, %s570
        %s574 = smul.addr %s573, 8
        %s575 = scalar_lea.vmem %s0, %s574
        %p576 = pneg %p71
        %p577 = pneg %p68
        %p578 = scmp.lt.s32.totalorder %s40, 1
        %s579 = scalar_select %p578, %s40, 1
        %s580 = smul.addr %s579, 8
        %s581 = scalar_lea.vmem %s1, %s580
        %p582 = pneg %p97
        %p583 = pneg %p94
        %s584 = sand.u32 %s110, 1
        %s585 = scalar_lea.sflag [#allocation5], %s584
        %s586 = sand.u32 %s110, 1
        %s587 = smul.addr %s586, 8
        %s588 = scalar_lea.vmem [#allocation4], %s587
        %p589 = pneg %p123
        %p590 = pneg %p120
        %s591 = sand.u32 %s138, 1
        %s592 = scalar_lea.sflag [#allocation8], %s591
        %s593 = sand.u32 %s138, 1
        %s594 = smul.addr %s593, 8
        %s595 = scalar_lea.vmem [#allocation7], %s594
        %p596 = pneg %p151
        %p597 = pneg %p148
        %p598 = pneg %p172
        %p599 = pneg %p169
        %p600 = pneg %p193
        %p601 = pneg %p190
        %p602 = pneg %p214
        %p603 = pneg %p211
        %p604 = pneg %p235
        %p605 = pneg %p232
        %p606 = pneg %p256
        %p607 = pneg %p253
        %p608 = pneg %p277
        %p609 = pneg %p274
        %p610 = pneg %p298
        %p611 = pneg %p295
        %p612 = pneg %p319
        %p613 = pneg %p316
        %p614 = pneg %p340
        %p615 = pneg %p337
        %p616 = pneg %p361
        %p617 = pneg %p358
        %p618 = pneg %p382
        %p619 = pneg %p379
        %p620 = pneg %p403
        %p621 = pneg %p400
        %p622 = pneg %p431
        %p623 = pneg %p428
        %s624 = sand.u32 %s418, 1
        %s625 = scalar_lea.sflag [#allocation6], %s624
        %s626 = sand.u32 %s418, 1
        %s627 = smul.addr %s626, 8
        %s628 = scalar_lea.vmem [#allocation9], %s627
        %p629 = scmp.lt.s32.totalorder %s40, 1
        %s630 = scalar_select %p629, %s40, 1
        %p631 = scmp.lt.s32.totalorder %s41, 0
        %s632 = scalar_select %p631, %s41, 0
        %s633 = sadd.s32 %s632, %s630
        %s634 = smul.addr %s633, 8
        %s635 = scalar_lea.vmem %s0, %s634
        %p636 = scmp.lt.s32.totalorder %s40, 1
        %s637 = scalar_select %p636, %s40, 1
        %s638 = smul.addr %s637, 8
        %s639 = scalar_lea.vmem %s1, %s638
        %p640 = scmp.eq.s32.totalorder %s41, 0
        // Predicated region
        $region93: #{tpu_custom_call.1} parent=83 // pred_check
          %p641 = pneg %p640
        $region94: #{tpu_custom_call.1} parent=83 // pred_check_branch
          %643 = sbr.rel (%p641) target = $region96
        $region95: #{tpu_custom_call.1} parent=83 // pred_region
          %v644 = vld [vmem:[%s639] sm:$0xff]
          %v645 = vld [vmem:[%s553] sm:$0xff]
          %v646 = vld [vmem:[%s6] sm:$0xff]
          %v647 = vld [vmem:[%s6 + $0x8] sm:$0xff]
          %v648 = vld [vmem:[%s6 + $0x10] sm:$0xff]
          %v649 = vld [vmem:[%s6 + $0x18] sm:$0xff]
          %v650 = vld [vmem:[%s7] sm:$0xff]
          %v651 = vld [vmem:[%s7 + $0x8] sm:$0xff]
          %v652 = vld [vmem:[%s7 + $0x10] sm:$0xff]
          %v653 = vld [vmem:[%s7 + $0x18] sm:$0xff]
          %655 = vset.pattern.permute.xlu0 0
          %656 = vperm.xlu0 %655, %v650
          %v657 = vpop.permute.xlu0 %656
          %660 = vset.pattern.permute.xlu0 0
          %661 = vperm.xlu0 %660, %v651
          %v662 = vpop.permute.xlu0 %661
          %665 = vset.pattern.permute.xlu0 0
          %666 = vperm.xlu0 %665, %v652
          %v667 = vpop.permute.xlu0 %666
          %670 = vset.pattern.permute.xlu0 0
          %671 = vperm.xlu0 %670, %v653
          %v672 = vpop.permute.xlu0 %671
          %vm674 = vcmask 261120
          %v676 = vsel %vm674, %v646, 0
          %v679 = vsel %vm674, %v647, 0
          %v682 = vsel %vm674, %v648, 0
          %v685 = vsel %vm674, %v649, 0
          %v688 = vsel %vm674, %v644, 0
          %690 = vmatpush.xpose.msra.mxu0 0.0
          %691 = vmatpush.xpose.msra.mxu0 0.0
          %692 = vmatpush.xpose.msra.mxu0 0.0
          %693 = vmatpush.xpose.msra.mxu0 0.0
          %694 = vmatpush.xpose.msra.mxu0 0.0
          %695 = vmatpush.xpose.msra.mxu0 0.0
          %696 = vmatpush.xpose.msra.mxu0 0.0
          %697 = vmatpush.xpose.msra.mxu0 0.0
          %698 = vmatpush.xpose.msra.mxu0 0.0
          %699 = vmatpush.xpose.msra.mxu0 0.0
          %700 = vmatpush.xpose.msra.mxu0 0.0
          %701 = vmatpush.xpose.msra.mxu0 0.0
          %702 = vmatpush.xpose.msra.mxu0 0.0
          %703 = vmatpush.xpose.msra.mxu0 0.0
          %704 = vmatpush.xpose.msra.mxu0 0.0
          %v705 = vand.u32 %v688, 4294901760
          %706 = vmatpush.xpose.msra.mxu0 %v705
          %v707 = vand.u32 %v676, 4294901760
          %v708 = vsub.f32 %v676, %v707
          %v709 = vand.u32 %v708, 4294901760
          %v710 = vsub.f32 %v708, %v709
          %v711 = vand.u32 %v710, 4294901760
          %712 = vmatmul.f32.gmra.mxu0 %v711
          %v713 = vpop.f32.mrf.mxu0
          %v714 = vadd.f32 %v657, %v713
          %v715 = vand.u32 %v679, 4294901760
          %v716 = vsub.f32 %v679, %v715
          %v717 = vand.u32 %v716, 4294901760
          %v718 = vsub.f32 %v716, %v717
          %v719 = vand.u32 %v718, 4294901760
          %720 = vmatmul.f32.gmra.mxu0 %v719
          %v721 = vpop.f32.mrf.mxu0
          %v722 = vadd.f32 %v662, %v721
          %v723 = vand.u32 %v682, 4294901760
          %v724 = vsub.f32 %v682, %v723
          %v725 = vand.u32 %v724, 4294901760
          %v726 = vsub.f32 %v724, %v725
          %v727 = vand.u32 %v726, 4294901760
          %728 = vmatmul.f32.gmra.mxu0 %v727
          %v729 = vpop.f32.mrf.mxu0
          %v730 = vadd.f32 %v667, %v729
          %v731 = vand.u32 %v685, 4294901760
          %v732 = vsub.f32 %v685, %v731
          %v733 = vand.u32 %v732, 4294901760
          %v734 = vsub.f32 %v732, %v733
          %v735 = vand.u32 %v734, 4294901760
          %736 = vmatmul.f32.gmra.mxu0 %v735
          %v737 = vpop.f32.mrf.mxu0
          %v738 = vadd.f32 %v672, %v737
          %739 = vdwg.mxu0
          %740 = vmatpush.xpose.msra.mxu0 0.0
          %741 = vmatpush.xpose.msra.mxu0 0.0
          %742 = vmatpush.xpose.msra.mxu0 0.0
          %743 = vmatpush.xpose.msra.mxu0 0.0
          %744 = vmatpush.xpose.msra.mxu0 0.0
          %745 = vmatpush.xpose.msra.mxu0 0.0
          %746 = vmatpush.xpose.msra.mxu0 0.0
          %747 = vmatpush.xpose.msra.mxu0 0.0
          %748 = vmatpush.xpose.msra.mxu0 0.0
          %749 = vmatpush.xpose.msra.mxu0 0.0
          %750 = vmatpush.xpose.msra.mxu0 0.0
          %751 = vmatpush.xpose.msra.mxu0 0.0
          %752 = vmatpush.xpose.msra.mxu0 0.0
          %753 = vmatpush.xpose.msra.mxu0 0.0
          %754 = vmatpush.xpose.msra.mxu0 0.0
          %v755 = vand.u32 %v688, 4294901760
          %v756 = vsub.f32 %v688, %v755
          %v757 = vand.u32 %v756, 4294901760
          %v758 = vsub.f32 %v756, %v757
          %v759 = vand.u32 %v758, 4294901760
          %760 = vmatpush.xpose.msra.mxu0 %v759
          %v761 = vand.u32 %v676, 4294901760
          %762 = vmatmul.f32.gmra.mxu0 %v761
          %v763 = vpop.f32.mrf.mxu0
          %v764 = vadd.f32 %v714, %v763
          %v765 = vand.u32 %v679, 4294901760
          %766 = vmatmul.f32.gmra.mxu0 %v765
          %v767 = vpop.f32.mrf.mxu0
          %v768 = vadd.f32 %v722, %v767
          %v769 = vand.u32 %v682, 4294901760
          %770 = vmatmul.f32.gmra.mxu0 %v769
          %v771 = vpop.f32.mrf.mxu0
          %v772 = vadd.f32 %v730, %v771
          %v773 = vand.u32 %v685, 4294901760
          %774 = vmatmul.f32.gmra.mxu0 %v773
          %v775 = vpop.f32.mrf.mxu0
          %v776 = vadd.f32 %v738, %v775
          %777 = vdwg.mxu0
          %778 = vmatpush.xpose.msra.mxu0 0.0
          %779 = vmatpush.xpose.msra.mxu0 0.0
          %780 = vmatpush.xpose.msra.mxu0 0.0
          %781 = vmatpush.xpose.msra.mxu0 0.0
          %782 = vmatpush.xpose.msra.mxu0 0.0
          %783 = vmatpush.xpose.msra.mxu0 0.0
          %784 = vmatpush.xpose.msra.mxu0 0.0
          %785 = vmatpush.xpose.msra.mxu0 0.0
          %786 = vmatpush.xpose.msra.mxu0 0.0
          %787 = vmatpush.xpose.msra.mxu0 0.0
          %788 = vmatpush.xpose.msra.mxu0 0.0
          %789 = vmatpush.xpose.msra.mxu0 0.0
          %790 = vmatpush.xpose.msra.mxu0 0.0
          %791 = vmatpush.xpose.msra.mxu0 0.0
          %792 = vmatpush.xpose.msra.mxu0 0.0
          %v793 = vand.u32 %v688, 4294901760
          %v794 = vsub.f32 %v688, %v793
          %795 = vmatpush.xpose.msra.mxu0 %v794
          %v796 = vand.u32 %v676, 4294901760
          %v797 = vsub.f32 %v676, %v796
          %798 = vmatmul.f32.gmra.mxu0 %v797
          %v799 = vpop.f32.mrf.mxu0
          %v800 = vadd.f32 %v764, %v799
          %v801 = vand.u32 %v679, 4294901760
          %v802 = vsub.f32 %v679, %v801
          %803 = vmatmul.f32.gmra.mxu0 %v802
          %v804 = vpop.f32.mrf.mxu0
          %v805 = vadd.f32 %v768, %v804
          %v806 = vand.u32 %v682, 4294901760
          %v807 = vsub.f32 %v682, %v806
          %808 = vmatmul.f32.gmra.mxu0 %v807
          %v809 = vpop.f32.mrf.mxu0
          %v810 = vadd.f32 %v772, %v809
          %v811 = vand.u32 %v685, 4294901760
          %v812 = vsub.f32 %v685, %v811
          %813 = vmatmul.f32.gmra.mxu0 %v812
          %v814 = vpop.f32.mrf.mxu0
          %v815 = vadd.f32 %v776, %v814
          %816 = vdwg.mxu0
          %817 = vmatpush.xpose.msra.mxu0 0.0
          %818 = vmatpush.xpose.msra.mxu0 0.0
          %819 = vmatpush.xpose.msra.mxu0 0.0
          %820 = vmatpush.xpose.msra.mxu0 0.0
          %821 = vmatpush.xpose.msra.mxu0 0.0
          %822 = vmatpush.xpose.msra.mxu0 0.0
          %823 = vmatpush.xpose.msra.mxu0 0.0
          %824 = vmatpush.xpose.msra.mxu0 0.0
          %825 = vmatpush.xpose.msra.mxu0 0.0
          %826 = vmatpush.xpose.msra.mxu0 0.0
          %827 = vmatpush.xpose.msra.mxu0 0.0
          %828 = vmatpush.xpose.msra.mxu0 0.0
          %829 = vmatpush.xpose.msra.mxu0 0.0
          %830 = vmatpush.xpose.msra.mxu0 0.0
          %831 = vmatpush.xpose.msra.mxu0 0.0
          %v832 = vand.u32 %v688, 4294901760
          %833 = vmatpush.xpose.msra.mxu0 %v832
          %v834 = vand.u32 %v676, 4294901760
          %v835 = vsub.f32 %v676, %v834
          %v836 = vand.u32 %v835, 4294901760
          %837 = vmatmul.f32.gmra.mxu0 %v836
          %v838 = vpop.f32.mrf.mxu0
          %v839 = vadd.f32 %v800, %v838
          %v840 = vand.u32 %v679, 4294901760
          %v841 = vsub.f32 %v679, %v840
          %v842 = vand.u32 %v841, 4294901760
          %843 = vmatmul.f32.gmra.mxu0 %v842
          %v844 = vpop.f32.mrf.mxu0
          %v845 = vadd.f32 %v805, %v844
          %v846 = vand.u32 %v682, 4294901760
          %v847 = vsub.f32 %v682, %v846
          %v848 = vand.u32 %v847, 4294901760
          %849 = vmatmul.f32.gmra.mxu0 %v848
          %v850 = vpop.f32.mrf.mxu0
          %v851 = vadd.f32 %v810, %v850
          %v852 = vand.u32 %v685, 4294901760
          %v853 = vsub.f32 %v685, %v852
          %v854 = vand.u32 %v853, 4294901760
          %855 = vmatmul.f32.gmra.mxu0 %v854
          %v856 = vpop.f32.mrf.mxu0
          %v857 = vadd.f32 %v815, %v856
          %858 = vdwg.mxu0
          %859 = vmatpush.xpose.msra.mxu0 0.0
          %860 = vmatpush.xpose.msra.mxu0 0.0
          %861 = vmatpush.xpose.msra.mxu0 0.0
          %862 = vmatpush.xpose.msra.mxu0 0.0
          %863 = vmatpush.xpose.msra.mxu0 0.0
          %864 = vmatpush.xpose.msra.mxu0 0.0
          %865 = vmatpush.xpose.msra.mxu0 0.0
          %866 = vmatpush.xpose.msra.mxu0 0.0
          %867 = vmatpush.xpose.msra.mxu0 0.0
          %868 = vmatpush.xpose.msra.mxu0 0.0
          %869 = vmatpush.xpose.msra.mxu0 0.0
          %870 = vmatpush.xpose.msra.mxu0 0.0
          %871 = vmatpush.xpose.msra.mxu0 0.0
          %872 = vmatpush.xpose.msra.mxu0 0.0
          %873 = vmatpush.xpose.msra.mxu0 0.0
          %v874 = vand.u32 %v688, 4294901760
          %v875 = vsub.f32 %v688, %v874
          %v876 = vand.u32 %v875, 4294901760
          %877 = vmatpush.xpose.msra.mxu0 %v876
          %v878 = vand.u32 %v676, 4294901760
          %879 = vmatmul.f32.gmra.mxu0 %v878
          %v880 = vpop.f32.mrf.mxu0
          %v881 = vadd.f32 %v839, %v880
          %v882 = vand.u32 %v679, 4294901760
          %883 = vmatmul.f32.gmra.mxu0 %v882
          %v884 = vpop.f32.mrf.mxu0
          %v885 = vadd.f32 %v845, %v884
          %v886 = vand.u32 %v682, 4294901760
          %887 = vmatmul.f32.gmra.mxu0 %v886
          %v888 = vpop.f32.mrf.mxu0
          %v889 = vadd.f32 %v851, %v888
          %v890 = vand.u32 %v685, 4294901760
          %891 = vmatmul.f32.gmra.mxu0 %v890
          %v892 = vpop.f32.mrf.mxu0
          %v893 = vadd.f32 %v857, %v892
          %894 = vdwg.mxu0
          %895 = vmatpush.xpose.msra.mxu0 0.0
          %896 = vmatpush.xpose.msra.mxu0 0.0
          %897 = vmatpush.xpose.msra.mxu0 0.0
          %898 = vmatpush.xpose.msra.mxu0 0.0
          %899 = vmatpush.xpose.msra.mxu0 0.0
          %900 = vmatpush.xpose.msra.mxu0 0.0
          %901 = vmatpush.xpose.msra.mxu0 0.0
          %902 = vmatpush.xpose.msra.mxu0 0.0
          %903 = vmatpush.xpose.msra.mxu0 0.0
          %904 = vmatpush.xpose.msra.mxu0 0.0
          %905 = vmatpush.xpose.msra.mxu0 0.0
          %906 = vmatpush.xpose.msra.mxu0 0.0
          %907 = vmatpush.xpose.msra.mxu0 0.0
          %908 = vmatpush.xpose.msra.mxu0 0.0
          %909 = vmatpush.xpose.msra.mxu0 0.0
          %v910 = vand.u32 %v688, 4294901760
          %911 = vmatpush.xpose.msra.mxu0 %v910
          %v912 = vand.u32 %v676, 4294901760
          %913 = vmatmul.f32.gmra.mxu0 %v912
          %v914 = vpop.f32.mrf.mxu0
          %v915 = vadd.f32 %v881, %v914
          %v916 = vand.u32 %v679, 4294901760
          %917 = vmatmul.f32.gmra.mxu0 %v916
          %v918 = vpop.f32.mrf.mxu0
          %v919 = vadd.f32 %v885, %v918
          %v920 = vand.u32 %v682, 4294901760
          %921 = vmatmul.f32.gmra.mxu0 %v920
          %v922 = vpop.f32.mrf.mxu0
          %v923 = vadd.f32 %v889, %v922
          %v924 = vand.u32 %v685, 4294901760
          %925 = vmatmul.f32.gmra.mxu0 %v924
          %v926 = vpop.f32.mrf.mxu0
          %v927 = vadd.f32 %v893, %v926
          %928 = vdwg.mxu0
          %vm929 = vcmask 64512
          %930 = vst.msk [vmem:[#allocation2] sm:$0xff] %vm929, %v915
          %931 = vst.msk [vmem:[#allocation2 + $0x8] sm:$0xff] %vm929, %v919
          %932 = vst.msk [vmem:[#allocation2 + $0x10] sm:$0xff] %vm929, %v923
          %933 = vst.msk [vmem:[#allocation2 + $0x18] sm:$0xff] %vm929, %v927
          %v934 = vld [vmem:[%s8] sm:$0xff]
          %v935 = vld [vmem:[%s8 + $0x8] sm:$0xff]
          %v936 = vld [vmem:[%s8 + $0x10] sm:$0xff]
          %v937 = vld [vmem:[%s8 + $0x18] sm:$0xff]
          %v938 = vld [vmem:[%s9] sm:$0x1]
          %v940 = vperm.slane %v938, 0
          %v943 = vsel %vm674, %v645, 0
          %945 = vmatpush.msra.mxu0 0.0
          %946 = vmatpush.msra.mxu0 0.0
          %947 = vmatpush.msra.mxu0 0.0
          %948 = vmatpush.msra.mxu0 0.0
          %949 = vmatpush.msra.mxu0 0.0
          %950 = vmatpush.msra.mxu0 0.0
          %951 = vmatpush.msra.mxu0 0.0
          %952 = vmatpush.msra.mxu0 0.0
          %953 = vmatpush.msra.mxu0 0.0
          %954 = vmatpush.msra.mxu0 0.0
          %955 = vmatpush.msra.mxu0 0.0
          %956 = vmatpush.msra.mxu0 0.0
          %v957 = vand.u32 %v937, 4294901760
          %958 = vmatpush.msra.mxu0 %v957
          %v959 = vand.u32 %v936, 4294901760
          %960 = vmatpush.msra.mxu0 %v959
          %v961 = vand.u32 %v935, 4294901760
          %962 = vmatpush.msra.mxu0 %v961
          %v963 = vand.u32 %v934, 4294901760
          %964 = vmatpush.msra.mxu0 %v963
          %v965 = vand.u32 %v943, 4294901760
          %v966 = vsub.f32 %v943, %v965
          %v967 = vand.u32 %v966, 4294901760
          %v968 = vsub.f32 %v966, %v967
          %v969 = vand.u32 %v968, 4294901760
          %970 = vmatmul.f32.gmra.mxu0 %v969
          %v971 = vpop.f32.mrf.mxu0
          %v972 = vadd.f32 %v940, %v971
          %973 = vdwg.mxu0
          %974 = vmatpush.msra.mxu0 0.0
          %975 = vmatpush.msra.mxu0 0.0
          %976 = vmatpush.msra.mxu0 0.0
          %977 = vmatpush.msra.mxu0 0.0
          %978 = vmatpush.msra.mxu0 0.0
          %979 = vmatpush.msra.mxu0 0.0
          %980 = vmatpush.msra.mxu0 0.0
          %981 = vmatpush.msra.mxu0 0.0
          %982 = vmatpush.msra.mxu0 0.0
          %983 = vmatpush.msra.mxu0 0.0
          %984 = vmatpush.msra.mxu0 0.0
          %985 = vmatpush.msra.mxu0 0.0
          %v986 = vand.u32 %v937, 4294901760
          %v987 = vsub.f32 %v937, %v986
          %v988 = vand.u32 %v987, 4294901760
          %v989 = vsub.f32 %v987, %v988
          %v990 = vand.u32 %v989, 4294901760
          %991 = vmatpush.msra.mxu0 %v990
          %v992 = vand.u32 %v936, 4294901760
          %v993 = vsub.f32 %v936, %v992
          %v994 = vand.u32 %v993, 4294901760
          %v995 = vsub.f32 %v993, %v994
          %v996 = vand.u32 %v995, 4294901760
          %997 = vmatpush.msra.mxu0 %v996
          %v998 = vand.u32 %v935, 4294901760
          %v999 = vsub.f32 %v935, %v998
          %v1000 = vand.u32 %v999, 4294901760
          %v1001 = vsub.f32 %v999, %v1000
          %v1002 = vand.u32 %v1001, 4294901760
          %1003 = vmatpush.msra.mxu0 %v1002
          %v1004 = vand.u32 %v934, 4294901760
          %v1005 = vsub.f32 %v934, %v1004
          %v1006 = vand.u32 %v1005, 4294901760
          %v1007 = vsub.f32 %v1005, %v1006
          %v1008 = vand.u32 %v1007, 4294901760
          %1009 = vmatpush.msra.mxu0 %v1008
          %v1010 = vand.u32 %v943, 4294901760
          %1011 = vmatmul.f32.gmra.mxu0 %v1010
          %v1012 = vpop.f32.mrf.mxu0
          %v1013 = vadd.f32 %v972, %v1012
          %1014 = vdwg.mxu0
          %1015 = vmatpush.msra.mxu0 0.0
          %1016 = vmatpush.msra.mxu0 0.0
          %1017 = vmatpush.msra.mxu0 0.0
          %1018 = vmatpush.msra.mxu0 0.0
          %1019 = vmatpush.msra.mxu0 0.0
          %1020 = vmatpush.msra.mxu0 0.0
          %1021 = vmatpush.msra.mxu0 0.0
          %1022 = vmatpush.msra.mxu0 0.0
          %1023 = vmatpush.msra.mxu0 0.0
          %1024 = vmatpush.msra.mxu0 0.0
          %1025 = vmatpush.msra.mxu0 0.0
          %1026 = vmatpush.msra.mxu0 0.0
          %v1027 = vand.u32 %v937, 4294901760
          %v1028 = vsub.f32 %v937, %v1027
          %1029 = vmatpush.msra.mxu0 %v1028
          %v1030 = vand.u32 %v936, 4294901760
          %v1031 = vsub.f32 %v936, %v1030
          %1032 = vmatpush.msra.mxu0 %v1031
          %v1033 = vand.u32 %v935, 4294901760
          %v1034 = vsub.f32 %v935, %v1033
          %1035 = vmatpush.msra.mxu0 %v1034
          %v1036 = vand.u32 %v934, 4294901760
          %v1037 = vsub.f32 %v934, %v1036
          %1038 = vmatpush.msra.mxu0 %v1037
          %v1039 = vand.u32 %v943, 4294901760
          %v1040 = vsub.f32 %v943, %v1039
          %1041 = vmatmul.f32.gmra.mxu0 %v1040
          %v1042 = vpop.f32.mrf.mxu0
          %v1043 = vadd.f32 %v1013, %v1042
          %1044 = vdwg.mxu0
          %1045 = vmatpush.msra.mxu0 0.0
          %1046 = vmatpush.msra.mxu0 0.0
          %1047 = vmatpush.msra.mxu0 0.0
          %1048 = vmatpush.msra.mxu0 0.0
          %1049 = vmatpush.msra.mxu0 0.0
          %1050 = vmatpush.msra.mxu0 0.0
          %1051 = vmatpush.msra.mxu0 0.0
          %1052 = vmatpush.msra.mxu0 0.0
          %1053 = vmatpush.msra.mxu0 0.0
          %1054 = vmatpush.msra.mxu0 0.0
          %1055 = vmatpush.msra.mxu0 0.0
          %1056 = vmatpush.msra.mxu0 0.0
          %v1057 = vand.u32 %v937, 4294901760
          %1058 = vmatpush.msra.mxu0 %v1057
          %v1059 = vand.u32 %v936, 4294901760
          %1060 = vmatpush.msra.mxu0 %v1059
          %v1061 = vand.u32 %v935, 4294901760
          %1062 = vmatpush.msra.mxu0 %v1061
          %v1063 = vand.u32 %v934, 4294901760
          %1064 = vmatpush.msra.mxu0 %v1063
          %v1065 = vand.u32 %v943, 4294901760
          %v1066 = vsub.f32 %v943, %v1065
          %v1067 = vand.u32 %v1066, 4294901760
          %1068 = vmatmul.f32.gmra.mxu0 %v1067
          %v1069 = vpop.f32.mrf.mxu0
          %v1070 = vadd.f32 %v1043, %v1069
          %1071 = vdwg.mxu0
          %1072 = vmatpush.msra.mxu0 0.0
          %1073 = vmatpush.msra.mxu0 0.0
          %1074 = vmatpush.msra.mxu0 0.0
          %1075 = vmatpush.msra.mxu0 0.0
          %1076 = vmatpush.msra.mxu0 0.0
          %1077 = vmatpush.msra.mxu0 0.0
          %1078 = vmatpush.msra.mxu0 0.0
          %1079 = vmatpush.msra.mxu0 0.0
          %1080 = vmatpush.msra.mxu0 0.0
          %1081 = vmatpush.msra.mxu0 0.0
          %1082 = vmatpush.msra.mxu0 0.0
          %1083 = vmatpush.msra.mxu0 0.0
          %v1084 = vand.u32 %v937, 4294901760
          %v1085 = vsub.f32 %v937, %v1084
          %v1086 = vand.u32 %v1085, 4294901760
          %1087 = vmatpush.msra.mxu0 %v1086
          %v1088 = vand.u32 %v936, 4294901760
          %v1089 = vsub.f32 %v936, %v1088
          %v1090 = vand.u32 %v1089, 4294901760
          %1091 = vmatpush.msra.mxu0 %v1090
          %v1092 = vand.u32 %v935, 4294901760
          %v1093 = vsub.f32 %v935, %v1092
          %v1094 = vand.u32 %v1093, 4294901760
          %1095 = vmatpush.msra.mxu0 %v1094
          %v1096 = vand.u32 %v934, 4294901760
          %v1097 = vsub.f32 %v934, %v1096
          %v1098 = vand.u32 %v1097, 4294901760
          %1099 = vmatpush.msra.mxu0 %v1098
          %v1100 = vand.u32 %v943, 4294901760
          %1101 = vmatmul.f32.gmra.mxu0 %v1100
          %v1102 = vpop.f32.mrf.mxu0
          %v1103 = vadd.f32 %v1070, %v1102
          %1104 = vdwg.mxu0
          %1105 = vmatpush.msra.mxu0 0.0
          %1106 = vmatpush.msra.mxu0 0.0
          %1107 = vmatpush.msra.mxu0 0.0
          %1108 = vmatpush.msra.mxu0 0.0
          %1109 = vmatpush.msra.mxu0 0.0
          %1110 = vmatpush.msra.mxu0 0.0
          %1111 = vmatpush.msra.mxu0 0.0
          %1112 = vmatpush.msra.mxu0 0.0
          %1113 = vmatpush.msra.mxu0 0.0
          %1114 = vmatpush.msra.mxu0 0.0
          %1115 = vmatpush.msra.mxu0 0.0
          %1116 = vmatpush.msra.mxu0 0.0
          %v1117 = vand.u32 %v937, 4294901760
          %1118 = vmatpush.msra.mxu0 %v1117
          %v1119 = vand.u32 %v936, 4294901760
          %1120 = vmatpush.msra.mxu0 %v1119
          %v1121 = vand.u32 %v935, 4294901760
          %1122 = vmatpush.msra.mxu0 %v1121
          %v1123 = vand.u32 %v934, 4294901760
          %1124 = vmatpush.msra.mxu0 %v1123
          %v1125 = vand.u32 %v943, 4294901760
          %1126 = vmatmul.f32.gmra.mxu0 %v1125
          %v1127 = vpop.f32.mrf.mxu0
          %v1128 = vadd.f32 %v1103, %v1127
          %1129 = vdwg.mxu0
          %1130 = vst.msk [vmem:[#allocation3] sm:$0xff] %vm674, %v1128
        $region96: #{tpu_custom_call.1} parent=83 // pred_fallthru
          _
        %v1131 = vld [vmem:[%s635] sm:$0xff]
        %v1132 = vld [vmem:[%s4] sm:$0xff]
        %v1133 = vld [vmem:[%s4 + $0x8] sm:$0xff]
        %v1134 = vld [vmem:[%s4 + $0x10] sm:$0xff]
        %v1135 = vld [vmem:[%s4 + $0x18] sm:$0xff]
        %v1136 = vld [vmem:[%s5] sm:$0x1]
        %v1138 = vperm.slane %v1136, 0
        %vm1140 = vcmask 261120
        %v1142 = vsel %vm1140, %v1131, 0
        %1144 = vmatpush.msra.mxu0 0.0
        %1145 = vmatpush.msra.mxu0 0.0
        %1146 = vmatpush.msra.mxu0 0.0
        %1147 = vmatpush.msra.mxu0 0.0
        %1148 = vmatpush.msra.mxu0 0.0
        %1149 = vmatpush.msra.mxu0 0.0
        %1150 = vmatpush.msra.mxu0 0.0
        %1151 = vmatpush.msra.mxu0 0.0
        %1152 = vmatpush.msra.mxu0 0.0
        %1153 = vmatpush.msra.mxu0 0.0
        %1154 = vmatpush.msra.mxu0 0.0
        %1155 = vmatpush.msra.mxu0 0.0
        %v1156 = vand.u32 %v1135, 4294901760
        %1157 = vmatpush.msra.mxu0 %v1156
        %v1158 = vand.u32 %v1134, 4294901760
        %1159 = vmatpush.msra.mxu0 %v1158
        %v1160 = vand.u32 %v1133, 4294901760
        %1161 = vmatpush.msra.mxu0 %v1160
        %v1162 = vand.u32 %v1132, 4294901760
        %1163 = vmatpush.msra.mxu0 %v1162
        %v1164 = vand.u32 %v1142, 4294901760
        %v1165 = vsub.f32 %v1142, %v1164
        %v1166 = vand.u32 %v1165, 4294901760
        %v1167 = vsub.f32 %v1165, %v1166
        %v1168 = vand.u32 %v1167, 4294901760
        %1169 = vmatmul.f32.gmra.mxu0 %v1168
        %v1170 = vpop.f32.mrf.mxu0
        %v1171 = vadd.f32 %v1138, %v1170
        %1172 = vdwg.mxu0
        %1173 = vmatpush.msra.mxu0 0.0
        %1174 = vmatpush.msra.mxu0 0.0
        %1175 = vmatpush.msra.mxu0 0.0
        %1176 = vmatpush.msra.mxu0 0.0
        %1177 = vmatpush.msra.mxu0 0.0
        %1178 = vmatpush.msra.mxu0 0.0
        %1179 = vmatpush.msra.mxu0 0.0
        %1180 = vmatpush.msra.mxu0 0.0
        %1181 = vmatpush.msra.mxu0 0.0
        %1182 = vmatpush.msra.mxu0 0.0
        %1183 = vmatpush.msra.mxu0 0.0
        %1184 = vmatpush.msra.mxu0 0.0
        %v1185 = vand.u32 %v1135, 4294901760
        %v1186 = vsub.f32 %v1135, %v1185
        %v1187 = vand.u32 %v1186, 4294901760
        %v1188 = vsub.f32 %v1186, %v1187
        %v1189 = vand.u32 %v1188, 4294901760
        %1190 = vmatpush.msra.mxu0 %v1189
        %v1191 = vand.u32 %v1134, 4294901760
        %v1192 = vsub.f32 %v1134, %v1191
        %v1193 = vand.u32 %v1192, 4294901760
        %v1194 = vsub.f32 %v1192, %v1193
        %v1195 = vand.u32 %v1194, 4294901760
        %1196 = vmatpush.msra.mxu0 %v1195
        %v1197 = vand.u32 %v1133, 4294901760
        %v1198 = vsub.f32 %v1133, %v1197
        %v1199 = vand.u32 %v1198, 4294901760
        %v1200 = vsub.f32 %v1198, %v1199
        %v1201 = vand.u32 %v1200, 4294901760
        %1202 = vmatpush.msra.mxu0 %v1201
        %v1203 = vand.u32 %v1132, 4294901760
        %v1204 = vsub.f32 %v1132, %v1203
        %v1205 = vand.u32 %v1204, 4294901760
        %v1206 = vsub.f32 %v1204, %v1205
        %v1207 = vand.u32 %v1206, 4294901760
        %1208 = vmatpush.msra.mxu0 %v1207
        %v1209 = vand.u32 %v1142, 4294901760
        %1210 = vmatmul.f32.gmra.mxu0 %v1209
        %v1211 = vpop.f32.mrf.mxu0
        %v1212 = vadd.f32 %v1171, %v1211
        %1213 = vdwg.mxu0
        %1214 = vmatpush.msra.mxu0 0.0
        %1215 = vmatpush.msra.mxu0 0.0
        %1216 = vmatpush.msra.mxu0 0.0
        %1217 = vmatpush.msra.mxu0 0.0
        %1218 = vmatpush.msra.mxu0 0.0
        %1219 = vmatpush.msra.mxu0 0.0
        %1220 = vmatpush.msra.mxu0 0.0
        %1221 = vmatpush.msra.mxu0 0.0
        %1222 = vmatpush.msra.mxu0 0.0
        %1223 = vmatpush.msra.mxu0 0.0
        %1224 = vmatpush.msra.mxu0 0.0
        %1225 = vmatpush.msra.mxu0 0.0
        %v1226 = vand.u32 %v1135, 4294901760
        %v1227 = vsub.f32 %v1135, %v1226
        %1228 = vmatpush.msra.mxu0 %v1227
        %v1229 = vand.u32 %v1134, 4294901760
        %v1230 = vsub.f32 %v1134, %v1229
        %1231 = vmatpush.msra.mxu0 %v1230
        %v1232 = vand.u32 %v1133, 4294901760
        %v1233 = vsub.f32 %v1133, %v1232
        %1234 = vmatpush.msra.mxu0 %v1233
        %v1235 = vand.u32 %v1132, 4294901760
        %v1236 = vsub.f32 %v1132, %v1235
        %1237 = vmatpush.msra.mxu0 %v1236
        %v1238 = vand.u32 %v1142, 4294901760
        %v1239 = vsub.f32 %v1142, %v1238
        %1240 = vmatmul.f32.gmra.mxu0 %v1239
        %v1241 = vpop.f32.mrf.mxu0
        %v1242 = vadd.f32 %v1212, %v1241
        %1243 = vdwg.mxu0
        %1244 = vmatpush.msra.mxu0 0.0
        %1245 = vmatpush.msra.mxu0 0.0
        %1246 = vmatpush.msra.mxu0 0.0
        %1247 = vmatpush.msra.mxu0 0.0
        %1248 = vmatpush.msra.mxu0 0.0
        %1249 = vmatpush.msra.mxu0 0.0
        %1250 = vmatpush.msra.mxu0 0.0
        %1251 = vmatpush.msra.mxu0 0.0
        %1252 = vmatpush.msra.mxu0 0.0
        %1253 = vmatpush.msra.mxu0 0.0
        %1254 = vmatpush.msra.mxu0 0.0
        %1255 = vmatpush.msra.mxu0 0.0
        %v1256 = vand.u32 %v1135, 4294901760
        %1257 = vmatpush.msra.mxu0 %v1256
        %v1258 = vand.u32 %v1134, 4294901760
        %1259 = vmatpush.msra.mxu0 %v1258
        %v1260 = vand.u32 %v1133, 4294901760
        %1261 = vmatpush.msra.mxu0 %v1260
        %v1262 = vand.u32 %v1132, 4294901760
        %1263 = vmatpush.msra.mxu0 %v1262
        %v1264 = vand.u32 %v1142, 4294901760
        %v1265 = vsub.f32 %v1142, %v1264
        %v1266 = vand.u32 %v1265, 4294901760
        %1267 = vmatmul.f32.gmra.mxu0 %v1266
        %v1268 = vpop.f32.mrf.mxu0
        %v1269 = vadd.f32 %v1242, %v1268
        %1270 = vdwg.mxu0
        %1271 = vmatpush.msra.mxu0 0.0
        %1272 = vmatpush.msra.mxu0 0.0
        %1273 = vmatpush.msra.mxu0 0.0
        %1274 = vmatpush.msra.mxu0 0.0
        %1275 = vmatpush.msra.mxu0 0.0
        %1276 = vmatpush.msra.mxu0 0.0
        %1277 = vmatpush.msra.mxu0 0.0
        %1278 = vmatpush.msra.mxu0 0.0
        %1279 = vmatpush.msra.mxu0 0.0
        %1280 = vmatpush.msra.mxu0 0.0
        %1281 = vmatpush.msra.mxu0 0.0
        %1282 = vmatpush.msra.mxu0 0.0
        %v1283 = vand.u32 %v1135, 4294901760
        %v1284 = vsub.f32 %v1135, %v1283
        %v1285 = vand.u32 %v1284, 4294901760
        %1286 = vmatpush.msra.mxu0 %v1285
        %v1287 = vand.u32 %v1134, 4294901760
        %v1288 = vsub.f32 %v1134, %v1287
        %v1289 = vand.u32 %v1288, 4294901760
        %1290 = vmatpush.msra.mxu0 %v1289
        %v1291 = vand.u32 %v1133, 4294901760
        %v1292 = vsub.f32 %v1133, %v1291
        %v1293 = vand.u32 %v1292, 4294901760
        %1294 = vmatpush.msra.mxu0 %v1293
        %v1295 = vand.u32 %v1132, 4294901760
        %v1296 = vsub.f32 %v1132, %v1295
        %v1297 = vand.u32 %v1296, 4294901760
        %1298 = vmatpush.msra.mxu0 %v1297
        %v1299 = vand.u32 %v1142, 4294901760
        %1300 = vmatmul.f32.gmra.mxu0 %v1299
        %v1301 = vpop.f32.mrf.mxu0
        %v1302 = vadd.f32 %v1269, %v1301
        %1303 = vdwg.mxu0
        %1304 = vmatpush.msra.mxu0 0.0
        %1305 = vmatpush.msra.mxu0 0.0
        %1306 = vmatpush.msra.mxu0 0.0
        %1307 = vmatpush.msra.mxu0 0.0
        %1308 = vmatpush.msra.mxu0 0.0
        %1309 = vmatpush.msra.mxu0 0.0
        %1310 = vmatpush.msra.mxu0 0.0
        %1311 = vmatpush.msra.mxu0 0.0
        %1312 = vmatpush.msra.mxu0 0.0
        %1313 = vmatpush.msra.mxu0 0.0
        %1314 = vmatpush.msra.mxu0 0.0
        %1315 = vmatpush.msra.mxu0 0.0
        %v1316 = vand.u32 %v1135, 4294901760
        %1317 = vmatpush.msra.mxu0 %v1316
        %v1318 = vand.u32 %v1134, 4294901760
        %1319 = vmatpush.msra.mxu0 %v1318
        %v1320 = vand.u32 %v1133, 4294901760
        %1321 = vmatpush.msra.mxu0 %v1320
        %v1322 = vand.u32 %v1132, 4294901760
        %1323 = vmatpush.msra.mxu0 %v1322
        %v1324 = vand.u32 %v1142, 4294901760
        %1325 = vmatmul.f32.gmra.mxu0 %v1324
        %v1326 = vpop.f32.mrf.mxu0
        %v1327 = vadd.f32 %v1302, %v1326
        %1328 = vdwg.mxu0
        %v1329 = vmul.f32 %v1327, 0.17677669
        %v1330 = vld [vmem:[#allocation2] sm:$0xff]
        %v1331 = vld [vmem:[#allocation2 + $0x8] sm:$0xff]
        %v1332 = vld [vmem:[#allocation2 + $0x10] sm:$0xff]
        %v1333 = vld [vmem:[#allocation2 + $0x18] sm:$0xff]
        %v1335 = vsel %vm1140, %v1329, 0
        %1337 = vmatpush.msra.mxu0 0.0
        %1338 = vmatpush.msra.mxu0 0.0
        %1339 = vmatpush.msra.mxu0 0.0
        %1340 = vmatpush.msra.mxu0 0.0
        %1341 = vmatpush.msra.mxu0 0.0
        %1342 = vmatpush.msra.mxu0 0.0
        %1343 = vmatpush.msra.mxu0 0.0
        %1344 = vmatpush.msra.mxu0 0.0
        %1345 = vmatpush.msra.mxu0 0.0
        %1346 = vmatpush.msra.mxu0 0.0
        %1347 = vmatpush.msra.mxu0 0.0
        %1348 = vmatpush.msra.mxu0 0.0
        %v1349 = vand.u32 %v1333, 4294901760
        %1350 = vmatpush.msra.mxu0 %v1349
        %v1351 = vand.u32 %v1332, 4294901760
        %1352 = vmatpush.msra.mxu0 %v1351
        %v1353 = vand.u32 %v1331, 4294901760
        %1354 = vmatpush.msra.mxu0 %v1353
        %v1355 = vand.u32 %v1330, 4294901760
        %1356 = vmatpush.msra.mxu0 %v1355
        %v1357 = vand.u32 %v1335, 4294901760
        %v1358 = vsub.f32 %v1335, %v1357
        %v1359 = vand.u32 %v1358, 4294901760
        %v1360 = vsub.f32 %v1358, %v1359
        %v1361 = vand.u32 %v1360, 4294901760
        %1362 = vmatmul.f32.gmra.mxu0 %v1361
        %v1363 = vpop.f32.mrf.mxu0
        %v1364 = vadd.f32 0.0, %v1363
        %1365 = vdwg.mxu0
        %1366 = vmatpush.msra.mxu0 0.0
        %1367 = vmatpush.msra.mxu0 0.0
        %1368 = vmatpush.msra.mxu0 0.0
        %1369 = vmatpush.msra.mxu0 0.0
        %1370 = vmatpush.msra.mxu0 0.0
        %1371 = vmatpush.msra.mxu0 0.0
        %1372 = vmatpush.msra.mxu0 0.0
        %1373 = vmatpush.msra.mxu0 0.0
        %1374 = vmatpush.msra.mxu0 0.0
        %1375 = vmatpush.msra.mxu0 0.0
        %1376 = vmatpush.msra.mxu0 0.0
        %1377 = vmatpush.msra.mxu0 0.0
        %v1378 = vand.u32 %v1333, 4294901760
        %v1379 = vsub.f32 %v1333, %v1378
        %v1380 = vand.u32 %v1379, 4294901760
        %v1381 = vsub.f32 %v1379, %v1380
        %v1382 = vand.u32 %v1381, 4294901760
        %1383 = vmatpush.msra.mxu0 %v1382
        %v1384 = vand.u32 %v1332, 4294901760
        %v1385 = vsub.f32 %v1332, %v1384
        %v1386 = vand.u32 %v1385, 4294901760
        %v1387 = vsub.f32 %v1385, %v1386
        %v1388 = vand.u32 %v1387, 4294901760
        %1389 = vmatpush.msra.mxu0 %v1388
        %v1390 = vand.u32 %v1331, 4294901760
        %v1391 = vsub.f32 %v1331, %v1390
        %v1392 = vand.u32 %v1391, 4294901760
        %v1393 = vsub.f32 %v1391, %v1392
        %v1394 = vand.u32 %v1393, 4294901760
        %1395 = vmatpush.msra.mxu0 %v1394
        %v1396 = vand.u32 %v1330, 4294901760
        %v1397 = vsub.f32 %v1330, %v1396
        %v1398 = vand.u32 %v1397, 4294901760
        %v1399 = vsub.f32 %v1397, %v1398
        %v1400 = vand.u32 %v1399, 4294901760
        %1401 = vmatpush.msra.mxu0 %v1400
        %v1402 = vand.u32 %v1335, 4294901760
        %1403 = vmatmul.f32.gmra.mxu0 %v1402
        %v1404 = vpop.f32.mrf.mxu0
        %v1405 = vadd.f32 %v1364, %v1404
        %1406 = vdwg.mxu0
        %1407 = vmatpush.msra.mxu0 0.0
        %1408 = vmatpush.msra.mxu0 0.0
        %1409 = vmatpush.msra.mxu0 0.0
        %1410 = vmatpush.msra.mxu0 0.0
        %1411 = vmatpush.msra.mxu0 0.0
        %1412 = vmatpush.msra.mxu0 0.0
        %1413 = vmatpush.msra.mxu0 0.0
        %1414 = vmatpush.msra.mxu0 0.0
        %1415 = vmatpush.msra.mxu0 0.0
        %1416 = vmatpush.msra.mxu0 0.0
        %1417 = vmatpush.msra.mxu0 0.0
        %1418 = vmatpush.msra.mxu0 0.0
        %v1419 = vand.u32 %v1333, 4294901760
        %v1420 = vsub.f32 %v1333, %v1419
        %1421 = vmatpush.msra.mxu0 %v1420
        %v1422 = vand.u32 %v1332, 4294901760
        %v1423 = vsub.f32 %v1332, %v1422
        %1424 = vmatpush.msra.mxu0 %v1423
        %v1425 = vand.u32 %v1331, 4294901760
        %v1426 = vsub.f32 %v1331, %v1425
        %1427 = vmatpush.msra.mxu0 %v1426
        %v1428 = vand.u32 %v1330, 4294901760
        %v1429 = vsub.f32 %v1330, %v1428
        %1430 = vmatpush.msra.mxu0 %v1429
        %v1431 = vand.u32 %v1335, 4294901760
        %v1432 = vsub.f32 %v1335, %v1431
        %1433 = vmatmul.f32.gmra.mxu0 %v1432
        %v1434 = vpop.f32.mrf.mxu0
        %v1435 = vadd.f32 %v1405, %v1434
        %1436 = vdwg.mxu0
        %1437 = vmatpush.msra.mxu0 0.0
        %1438 = vmatpush.msra.mxu0 0.0
        %1439 = vmatpush.msra.mxu0 0.0
        %1440 = vmatpush.msra.mxu0 0.0
        %1441 = vmatpush.msra.mxu0 0.0
        %1442 = vmatpush.msra.mxu0 0.0
        %1443 = vmatpush.msra.mxu0 0.0
        %1444 = vmatpush.msra.mxu0 0.0
        %1445 = vmatpush.msra.mxu0 0.0
        %1446 = vmatpush.msra.mxu0 0.0
        %1447 = vmatpush.msra.mxu0 0.0
        %1448 = vmatpush.msra.mxu0 0.0
        %v1449 = vand.u32 %v1333, 4294901760
        %1450 = vmatpush.msra.mxu0 %v1449
        %v1451 = vand.u32 %v1332, 4294901760
        %1452 = vmatpush.msra.mxu0 %v1451
        %v1453 = vand.u32 %v1331, 4294901760
        %1454 = vmatpush.msra.mxu0 %v1453
        %v1455 = vand.u32 %v1330, 4294901760
        %1456 = vmatpush.msra.mxu0 %v1455
        %v1457 = vand.u32 %v1335, 4294901760
        %v1458 = vsub.f32 %v1335, %v1457
        %v1459 = vand.u32 %v1458, 4294901760
        %1460 = vmatmul.f32.gmra.mxu0 %v1459
        %v1461 = vpop.f32.mrf.mxu0
        %v1462 = vadd.f32 %v1435, %v1461
        %1463 = vdwg.mxu0
        %1464 = vmatpush.msra.mxu0 0.0
        %1465 = vmatpush.msra.mxu0 0.0
        %1466 = vmatpush.msra.mxu0 0.0
        %1467 = vmatpush.msra.mxu0 0.0
        %1468 = vmatpush.msra.mxu0 0.0
        %1469 = vmatpush.msra.mxu0 0.0
        %1470 = vmatpush.msra.mxu0 0.0
        %1471 = vmatpush.msra.mxu0 0.0
        %1472 = vmatpush.msra.mxu0 0.0
        %1473 = vmatpush.msra.mxu0 0.0
        %1474 = vmatpush.msra.mxu0 0.0
        %1475 = vmatpush.msra.mxu0 0.0
        %v1476 = vand.u32 %v1333, 4294901760
        %v1477 = vsub.f32 %v1333, %v1476
        %v1478 = vand.u32 %v1477, 4294901760
        %1479 = vmatpush.msra.mxu0 %v1478
        %v1480 = vand.u32 %v1332, 4294901760
        %v1481 = vsub.f32 %v1332, %v1480
        %v1482 = vand.u32 %v1481, 4294901760
        %1483 = vmatpush.msra.mxu0 %v1482
        %v1484 = vand.u32 %v1331, 4294901760
        %v1485 = vsub.f32 %v1331, %v1484
        %v1486 = vand.u32 %v1485, 4294901760
        %1487 = vmatpush.msra.mxu0 %v1486
        %v1488 = vand.u32 %v1330, 4294901760
        %v1489 = vsub.f32 %v1330, %v1488
        %v1490 = vand.u32 %v1489, 4294901760
        %1491 = vmatpush.msra.mxu0 %v1490
        %v1492 = vand.u32 %v1335, 4294901760
        %1493 = vmatmul.f32.gmra.mxu0 %v1492
        %v1494 = vpop.f32.mrf.mxu0
        %v1495 = vadd.f32 %v1462, %v1494
        %1496 = vdwg.mxu0
        %1497 = vmatpush.msra.mxu0 0.0
        %1498 = vmatpush.msra.mxu0 0.0
        %1499 = vmatpush.msra.mxu0 0.0
        %1500 = vmatpush.msra.mxu0 0.0
        %1501 = vmatpush.msra.mxu0 0.0
        %1502 = vmatpush.msra.mxu0 0.0
        %1503 = vmatpush.msra.mxu0 0.0
        %1504 = vmatpush.msra.mxu0 0.0
        %1505 = vmatpush.msra.mxu0 0.0
        %1506 = vmatpush.msra.mxu0 0.0
        %1507 = vmatpush.msra.mxu0 0.0
        %1508 = vmatpush.msra.mxu0 0.0
        %v1509 = vand.u32 %v1333, 4294901760
        %1510 = vmatpush.msra.mxu0 %v1509
        %v1511 = vand.u32 %v1332, 4294901760
        %1512 = vmatpush.msra.mxu0 %v1511
        %v1513 = vand.u32 %v1331, 4294901760
        %1514 = vmatpush.msra.mxu0 %v1513
        %v1515 = vand.u32 %v1330, 4294901760
        %1516 = vmatpush.msra.mxu0 %v1515
        %v1517 = vand.u32 %v1335, 4294901760
        %1518 = vmatmul.f32.gmra.mxu0 %v1517
        %v1519 = vpop.f32.mrf.mxu0
        %v1520 = vadd.f32 %v1495, %v1519
        %1521 = vdwg.mxu0
        %vm1522 = vcmask 64512
        %v1523 = vsel %vm1522, %v1520, -inf
        %1524 = vmax.xlane.f32.xlu0 %v1523
        %v1525 = vpop.xlane.xlu0 %1524
        %v1526 = vsub.f32 %v1520, %v1525
        %v1527 = vmul.f32 %v1526, 1.442695
        %v1528 = vpow.pop %v1527
        %v1529 = vsel %vm1522, %v1528, 0.0
        %1530 = vadd.xlane.f32.xlu0 %v1529
        %v1531 = vpop.xlane.xlu0 %1530
        %v1532 = vrcp.pop %v1531
        %v1533 = vmul.f32 %v1531, %v1532
        %v1534 = vsub.f32 1.0, %v1533
        %v1535 = vmul.f32 %v1532, %v1534
        %v1536 = vadd.f32 %v1532, %v1535
        %vm1537 = vweird.f32 %v1531
        %vm1538 = vweird.f32 %v1532
        %vm1539 = vmor %vm1537, %vm1538
        %v1540 = vsel %vm1539, %v1532, %v1536
        %v1541 = vand.u32 2147483647, %v1531
        %vm1542 = vcmp.eq.f32.partialorder %v1541, 8.507059e+37
        %v1543 = vand.u32 %v1531, 2147483648
        %v1544 = vor.u32 1.1754944e-38, %v1543
        %v1545 = vsel %vm1542, %v1544, %v1540
        %v1546 = vld [vmem:[%s563] sm:$0xff]
        %v1547 = vsel %vm1522, %v1546, -inf
        %1548 = vmax.xlane.f32.xlu0 %v1547
        %v1549 = vpop.xlane.xlu0 %1548
        %v1550 = vsub.f32 %v1546, %v1549
        %v1551 = vmul.f32 %v1550, 1.442695
        %v1552 = vpow.pop %v1551
        %v1553 = vsel %vm1522, %v1552, 0.0
        %1554 = vadd.xlane.f32.xlu0 %v1553
        %v1555 = vpop.xlane.xlu0 %1554
        %v1556 = vrcp.pop %v1555
        %v1557 = vmul.f32 %v1555, %v1556
        %v1558 = vsub.f32 1.0, %v1557
        %v1559 = vmul.f32 %v1556, %v1558
        %v1560 = vadd.f32 %v1556, %v1559
        %vm1561 = vweird.f32 %v1555
        %vm1562 = vweird.f32 %v1556
        %vm1563 = vmor %vm1561, %vm1562
        %v1564 = vsel %vm1563, %v1556, %v1560
        %v1565 = vand.u32 2147483647, %v1555
        %vm1566 = vcmp.eq.f32.partialorder %v1565, 8.507059e+37
        %v1567 = vand.u32 %v1555, 2147483648
        %v1568 = vor.u32 1.1754944e-38, %v1567
        %v1569 = vsel %vm1566, %v1568, %v1564
        %v1570 = vmul.f32 %v1528, %v1545
        %v1571 = vmul.f32 %v1552, %v1569
        %v1572 = vadd.f32 %v1570, %v1571
        %v1573 = vld [vmem:[#allocation3] sm:$0xff]
        %v1575 = vsel %vm1522, %v1572, 0
        %1577 = vmatpush.msra.mxu0 0.0
        %1578 = vmatpush.msra.mxu0 0.0
        %1579 = vmatpush.msra.mxu0 0.0
        %1580 = vmatpush.msra.mxu0 0.0
        %1581 = vmatpush.msra.mxu0 0.0
        %1582 = vmatpush.msra.mxu0 0.0
        %1583 = vmatpush.msra.mxu0 0.0
        %1584 = vmatpush.msra.mxu0 0.0
        %1585 = vmatpush.msra.mxu0 0.0
        %1586 = vmatpush.msra.mxu0 0.0
        %1587 = vmatpush.msra.mxu0 0.0
        %1588 = vmatpush.msra.mxu0 0.0
        %1589 = vmatpush.msra.mxu0 0.0
        %1590 = vmatpush.msra.mxu0 0.0
        %1591 = vmatpush.msra.mxu0 0.0
        %v1592 = vand.u32 %v1573, 4294901760
        %1593 = vmatpush.msra.mxu0 %v1592
        %v1594 = vand.u32 %v1575, 4294901760
        %v1595 = vsub.f32 %v1575, %v1594
        %v1596 = vand.u32 %v1595, 4294901760
        %v1597 = vsub.f32 %v1595, %v1596
        %v1598 = vand.u32 %v1597, 4294901760
        %1599 = vmatmul.f32.gmra.mxu0 %v1598
        %v1600 = vpop.f32.mrf.mxu0
        %v1601 = vadd.f32 0.0, %v1600
        %1602 = vdwg.mxu0
        %1603 = vmatpush.msra.mxu0 0.0
        %1604 = vmatpush.msra.mxu0 0.0
        %1605 = vmatpush.msra.mxu0 0.0
        %1606 = vmatpush.msra.mxu0 0.0
        %1607 = vmatpush.msra.mxu0 0.0
        %1608 = vmatpush.msra.mxu0 0.0
        %1609 = vmatpush.msra.mxu0 0.0
        %1610 = vmatpush.msra.mxu0 0.0
        %1611 = vmatpush.msra.mxu0 0.0
        %1612 = vmatpush.msra.mxu0 0.0
        %1613 = vmatpush.msra.mxu0 0.0
        %1614 = vmatpush.msra.mxu0 0.0
        %1615 = vmatpush.msra.mxu0 0.0
        %1616 = vmatpush.msra.mxu0 0.0
        %1617 = vmatpush.msra.mxu0 0.0
        %v1618 = vand.u32 %v1573, 4294901760
        %v1619 = vsub.f32 %v1573, %v1618
        %v1620 = vand.u32 %v1619, 4294901760
        %v1621 = vsub.f32 %v1619, %v1620
        %v1622 = vand.u32 %v1621, 4294901760
        %1623 = vmatpush.msra.mxu0 %v1622
        %v1624 = vand.u32 %v1575, 4294901760
        %1625 = vmatmul.f32.gmra.mxu0 %v1624
        %v1626 = vpop.f32.mrf.mxu0
        %v1627 = vadd.f32 %v1601, %v1626
        %1628 = vdwg.mxu0
        %1629 = vmatpush.msra.mxu0 0.0
        %1630 = vmatpush.msra.mxu0 0.0
        %1631 = vmatpush.msra.mxu0 0.0
        %1632 = vmatpush.msra.mxu0 0.0
        %1633 = vmatpush.msra.mxu0 0.0
        %1634 = vmatpush.msra.mxu0 0.0
        %1635 = vmatpush.msra.mxu0 0.0
        %1636 = vmatpush.msra.mxu0 0.0
        %1637 = vmatpush.msra.mxu0 0.0
        %1638 = vmatpush.msra.mxu0 0.0
        %1639 = vmatpush.msra.mxu0 0.0
        %1640 = vmatpush.msra.mxu0 0.0
        %1641 = vmatpush.msra.mxu0 0.0
        %1642 = vmatpush.msra.mxu0 0.0
        %1643 = vmatpush.msra.mxu0 0.0
        %v1644 = vand.u32 %v1573, 4294901760
        %v1645 = vsub.f32 %v1573, %v1644
        %1646 = vmatpush.msra.mxu0 %v1645
        %v1647 = vand.u32 %v1575, 4294901760
        %v1648 = vsub.f32 %v1575, %v1647
        %1649 = vmatmul.f32.gmra.mxu0 %v1648
        %v1650 = vpop.f32.mrf.mxu0
        %v1651 = vadd.f32 %v1627, %v1650
        %1652 = vdwg.mxu0
        %1653 = vmatpush.msra.mxu0 0.0
        %1654 = vmatpush.msra.mxu0 0.0
        %1655 = vmatpush.msra.mxu0 0.0
        %1656 = vmatpush.msra.mxu0 0.0
        %1657 = vmatpush.msra.mxu0 0.0
        %1658 = vmatpush.msra.mxu0 0.0
        %1659 = vmatpush.msra.mxu0 0.0
        %1660 = vmatpush.msra.mxu0 0.0
        %1661 = vmatpush.msra.mxu0 0.0
        %1662 = vmatpush.msra.mxu0 0.0
        %1663 = vmatpush.msra.mxu0 0.0
        %1664 = vmatpush.msra.mxu0 0.0
        %1665 = vmatpush.msra.mxu0 0.0
        %1666 = vmatpush.msra.mxu0 0.0
        %1667 = vmatpush.msra.mxu0 0.0
        %v1668 = vand.u32 %v1573, 4294901760
        %1669 = vmatpush.msra.mxu0 %v1668
        %v1670 = vand.u32 %v1575, 4294901760
        %v1671 = vsub.f32 %v1575, %v1670
        %v1672 = vand.u32 %v1671, 4294901760
        %1673 = vmatmul.f32.gmra.mxu0 %v1672
        %v1674 = vpop.f32.mrf.mxu0
        %v1675 = vadd.f32 %v1651, %v1674
        %1676 = vdwg.mxu0
        %1677 = vmatpush.msra.mxu0 0.0
        %1678 = vmatpush.msra.mxu0 0.0
        %1679 = vmatpush.msra.mxu0 0.0
        %1680 = vmatpush.msra.mxu0 0.0
        %1681 = vmatpush.msra.mxu0 0.0
        %1682 = vmatpush.msra.mxu0 0.0
        %1683 = vmatpush.msra.mxu0 0.0
        %1684 = vmatpush.msra.mxu0 0.0
        %1685 = vmatpush.msra.mxu0 0.0
        %1686 = vmatpush.msra.mxu0 0.0
        %1687 = vmatpush.msra.mxu0 0.0
        %1688 = vmatpush.msra.mxu0 0.0
        %1689 = vmatpush.msra.mxu0 0.0
        %1690 = vmatpush.msra.mxu0 0.0
        %1691 = vmatpush.msra.mxu0 0.0
        %v1692 = vand.u32 %v1573, 4294901760
        %v1693 = vsub.f32 %v1573, %v1692
        %v1694 = vand.u32 %v1693, 4294901760
        %1695 = vmatpush.msra.mxu0 %v1694
        %v1696 = vand.u32 %v1575, 4294901760
        %1697 = vmatmul.f32.gmra.mxu0 %v1696
        %v1698 = vpop.f32.mrf.mxu0
        %v1699 = vadd.f32 %v1675, %v1698
        %1700 = vdwg.mxu0
        %1701 = vmatpush.msra.mxu0 0.0
        %1702 = vmatpush.msra.mxu0 0.0
        %1703 = vmatpush.msra.mxu0 0.0
        %1704 = vmatpush.msra.mxu0 0.0
        %1705 = vmatpush.msra.mxu0 0.0
        %1706 = vmatpush.msra.mxu0 0.0
        %1707 = vmatpush.msra.mxu0 0.0
        %1708 = vmatpush.msra.mxu0 0.0
        %1709 = vmatpush.msra.mxu0 0.0
        %1710 = vmatpush.msra.mxu0 0.0
        %1711 = vmatpush.msra.mxu0 0.0
        %1712 = vmatpush.msra.mxu0 0.0
        %1713 = vmatpush.msra.mxu0 0.0
        %1714 = vmatpush.msra.mxu0 0.0
        %1715 = vmatpush.msra.mxu0 0.0
        %v1716 = vand.u32 %v1573, 4294901760
        %1717 = vmatpush.msra.mxu0 %v1716
        %v1718 = vand.u32 %v1575, 4294901760
        %1719 = vmatmul.f32.gmra.mxu0 %v1718
        %v1720 = vpop.f32.mrf.mxu0
        %v1721 = vadd.f32 %v1699, %v1720
        %1722 = vdwg.mxu0
        %v1723 = vadd.f32 %v1327, %v1721
        %v1724 = vld [vmem:[%s10] sm:$0xff]
        %v1725 = vld [vmem:[%s10 + $0x8] sm:$0xff]
        %v1726 = vld [vmem:[%s10 + $0x10] sm:$0xff]
        %v1727 = vld [vmem:[%s10 + $0x18] sm:$0xff]
        %v1728 = vld [vmem:[%s11] sm:$0x1]
        %v1730 = vperm.slane %v1728, 0
        %v1733 = vsel %vm1140, %v1723, 0
        %1735 = vmatpush.msra.mxu0 0.0
        %1736 = vmatpush.msra.mxu0 0.0
        %1737 = vmatpush.msra.mxu0 0.0
        %1738 = vmatpush.msra.mxu0 0.0
        %1739 = vmatpush.msra.mxu0 0.0
        %1740 = vmatpush.msra.mxu0 0.0
        %1741 = vmatpush.msra.mxu0 0.0
        %1742 = vmatpush.msra.mxu0 0.0
        %1743 = vmatpush.msra.mxu0 0.0
        %1744 = vmatpush.msra.mxu0 0.0
        %1745 = vmatpush.msra.mxu0 0.0
        %1746 = vmatpush.msra.mxu0 0.0
        %v1747 = vand.u32 %v1727, 4294901760
        %1748 = vmatpush.msra.mxu0 %v1747
        %v1749 = vand.u32 %v1726, 4294901760
        %1750 = vmatpush.msra.mxu0 %v1749
        %v1751 = vand.u32 %v1725, 4294901760
        %1752 = vmatpush.msra.mxu0 %v1751
        %v1753 = vand.u32 %v1724, 4294901760
        %1754 = vmatpush.msra.mxu0 %v1753
        %v1755 = vand.u32 %v1733, 4294901760
        %v1756 = vsub.f32 %v1733, %v1755
        %v1757 = vand.u32 %v1756, 4294901760
        %v1758 = vsub.f32 %v1756, %v1757
        %v1759 = vand.u32 %v1758, 4294901760
        %1760 = vmatmul.f32.gmra.mxu0 %v1759
        %v1761 = vpop.f32.mrf.mxu0
        %v1762 = vadd.f32 %v1730, %v1761
        %1763 = vdwg.mxu0
        %1764 = vmatpush.msra.mxu0 0.0
        %1765 = vmatpush.msra.mxu0 0.0
        %1766 = vmatpush.msra.mxu0 0.0
        %1767 = vmatpush.msra.mxu0 0.0
        %1768 = vmatpush.msra.mxu0 0.0
        %1769 = vmatpush.msra.mxu0 0.0
        %1770 = vmatpush.msra.mxu0 0.0
        %1771 = vmatpush.msra.mxu0 0.0
        %1772 = vmatpush.msra.mxu0 0.0
        %1773 = vmatpush.msra.mxu0 0.0
        %1774 = vmatpush.msra.mxu0 0.0
        %1775 = vmatpush.msra.mxu0 0.0
        %v1776 = vand.u32 %v1727, 4294901760
        %v1777 = vsub.f32 %v1727, %v1776
        %v1778 = vand.u32 %v1777, 4294901760
        %v1779 = vsub.f32 %v1777, %v1778
        %v1780 = vand.u32 %v1779, 4294901760
        %1781 = vmatpush.msra.mxu0 %v1780
        %v1782 = vand.u32 %v1726, 4294901760
        %v1783 = vsub.f32 %v1726, %v1782
        %v1784 = vand.u32 %v1783, 4294901760
        %v1785 = vsub.f32 %v1783, %v1784
        %v1786 = vand.u32 %v1785, 4294901760
        %1787 = vmatpush.msra.mxu0 %v1786
        %v1788 = vand.u32 %v1725, 4294901760
        %v1789 = vsub.f32 %v1725, %v1788
        %v1790 = vand.u32 %v1789, 4294901760
        %v1791 = vsub.f32 %v1789, %v1790
        %v1792 = vand.u32 %v1791, 4294901760
        %1793 = vmatpush.msra.mxu0 %v1792
        %v1794 = vand.u32 %v1724, 4294901760
        %v1795 = vsub.f32 %v1724, %v1794
        %v1796 = vand.u32 %v1795, 4294901760
        %v1797 = vsub.f32 %v1795, %v1796
        %v1798 = vand.u32 %v1797, 4294901760
        %1799 = vmatpush.msra.mxu0 %v1798
        %v1800 = vand.u32 %v1733, 4294901760
        %1801 = vmatmul.f32.gmra.mxu0 %v1800
        %v1802 = vpop.f32.mrf.mxu0
        %v1803 = vadd.f32 %v1762, %v1802
        %1804 = vdwg.mxu0
        %1805 = vmatpush.msra.mxu0 0.0
        %1806 = vmatpush.msra.mxu0 0.0
        %1807 = vmatpush.msra.mxu0 0.0
        %1808 = vmatpush.msra.mxu0 0.0
        %1809 = vmatpush.msra.mxu0 0.0
        %1810 = vmatpush.msra.mxu0 0.0
        %1811 = vmatpush.msra.mxu0 0.0
        %1812 = vmatpush.msra.mxu0 0.0
        %1813 = vmatpush.msra.mxu0 0.0
        %1814 = vmatpush.msra.mxu0 0.0
        %1815 = vmatpush.msra.mxu0 0.0
        %1816 = vmatpush.msra.mxu0 0.0
        %v1817 = vand.u32 %v1727, 4294901760
        %v1818 = vsub.f32 %v1727, %v1817
        %1819 = vmatpush.msra.mxu0 %v1818
        %v1820 = vand.u32 %v1726, 4294901760
        %v1821 = vsub.f32 %v1726, %v1820
        %1822 = vmatpush.msra.mxu0 %v1821
        %v1823 = vand.u32 %v1725, 4294901760
        %v1824 = vsub.f32 %v1725, %v1823
        %1825 = vmatpush.msra.mxu0 %v1824
        %v1826 = vand.u32 %v1724, 4294901760
        %v1827 = vsub.f32 %v1724, %v1826
        %1828 = vmatpush.msra.mxu0 %v1827
        %v1829 = vand.u32 %v1733, 4294901760
        %v1830 = vsub.f32 %v1733, %v1829
        %1831 = vmatmul.f32.gmra.mxu0 %v1830
        %v1832 = vpop.f32.mrf.mxu0
        %v1833 = vadd.f32 %v1803, %v1832
        %1834 = vdwg.mxu0
        %1835 = vmatpush.msra.mxu0 0.0
        %1836 = vmatpush.msra.mxu0 0.0
        %1837 = vmatpush.msra.mxu0 0.0
        %1838 = vmatpush.msra.mxu0 0.0
        %1839 = vmatpush.msra.mxu0 0.0
        %1840 = vmatpush.msra.mxu0 0.0
        %1841 = vmatpush.msra.mxu0 0.0
        %1842 = vmatpush.msra.mxu0 0.0
        %1843 = vmatpush.msra.mxu0 0.0
        %1844 = vmatpush.msra.mxu0 0.0
        %1845 = vmatpush.msra.mxu0 0.0
        %1846 = vmatpush.msra.mxu0 0.0
        %v1847 = vand.u32 %v1727, 4294901760
        %1848 = vmatpush.msra.mxu0 %v1847
        %v1849 = vand.u32 %v1726, 4294901760
        %1850 = vmatpush.msra.mxu0 %v1849
        %v1851 = vand.u32 %v1725, 4294901760
        %1852 = vmatpush.msra.mxu0 %v1851
        %v1853 = vand.u32 %v1724, 4294901760
        %1854 = vmatpush.msra.mxu0 %v1853
        %v1855 = vand.u32 %v1733, 4294901760
        %v1856 = vsub.f32 %v1733, %v1855
        %v1857 = vand.u32 %v1856, 4294901760
        %1858 = vmatmul.f32.gmra.mxu0 %v1857
        %v1859 = vpop.f32.mrf.mxu0
        %v1860 = vadd.f32 %v1833, %v1859
        %1861 = vdwg.mxu0
        %1862 = vmatpush.msra.mxu0 0.0
        %1863 = vmatpush.msra.mxu0 0.0
        %1864 = vmatpush.msra.mxu0 0.0
        %1865 = vmatpush.msra.mxu0 0.0
        %1866 = vmatpush.msra.mxu0 0.0
        %1867 = vmatpush.msra.mxu0 0.0
        %1868 = vmatpush.msra.mxu0 0.0
        %1869 = vmatpush.msra.mxu0 0.0
        %1870 = vmatpush.msra.mxu0 0.0
        %1871 = vmatpush.msra.mxu0 0.0
        %1872 = vmatpush.msra.mxu0 0.0
        %1873 = vmatpush.msra.mxu0 0.0
        %v1874 = vand.u32 %v1727, 4294901760
        %v1875 = vsub.f32 %v1727, %v1874
        %v1876 = vand.u32 %v1875, 4294901760
        %1877 = vmatpush.msra.mxu0 %v1876
        %v1878 = vand.u32 %v1726, 4294901760
        %v1879 = vsub.f32 %v1726, %v1878
        %v1880 = vand.u32 %v1879, 4294901760
        %1881 = vmatpush.msra.mxu0 %v1880
        %v1882 = vand.u32 %v1725, 4294901760
        %v1883 = vsub.f32 %v1725, %v1882
        %v1884 = vand.u32 %v1883, 4294901760
        %1885 = vmatpush.msra.mxu0 %v1884
        %v1886 = vand.u32 %v1724, 4294901760
        %v1887 = vsub.f32 %v1724, %v1886
        %v1888 = vand.u32 %v1887, 4294901760
        %1889 = vmatpush.msra.mxu0 %v1888
        %v1890 = vand.u32 %v1733, 4294901760
        %1891 = vmatmul.f32.gmra.mxu0 %v1890
        %v1892 = vpop.f32.mrf.mxu0
        %v1893 = vadd.f32 %v1860, %v1892
        %1894 = vdwg.mxu0
        %1895 = vmatpush.msra.mxu0 0.0
        %1896 = vmatpush.msra.mxu0 0.0
        %1897 = vmatpush.msra.mxu0 0.0
        %1898 = vmatpush.msra.mxu0 0.0
        %1899 = vmatpush.msra.mxu0 0.0
        %1900 = vmatpush.msra.mxu0 0.0
        %1901 = vmatpush.msra.mxu0 0.0
        %1902 = vmatpush.msra.mxu0 0.0
        %1903 = vmatpush.msra.mxu0 0.0
        %1904 = vmatpush.msra.mxu0 0.0
        %1905 = vmatpush.msra.mxu0 0.0
        %1906 = vmatpush.msra.mxu0 0.0
        %v1907 = vand.u32 %v1727, 4294901760
        %1908 = vmatpush.msra.mxu0 %v1907
        %v1909 = vand.u32 %v1726, 4294901760
        %1910 = vmatpush.msra.mxu0 %v1909
        %v1911 = vand.u32 %v1725, 4294901760
        %1912 = vmatpush.msra.mxu0 %v1911
        %v1913 = vand.u32 %v1724, 4294901760
        %1914 = vmatpush.msra.mxu0 %v1913
        %v1915 = vand.u32 %v1733, 4294901760
        %1916 = vmatmul.f32.gmra.mxu0 %v1915
        %v1917 = vpop.f32.mrf.mxu0
        %v1918 = vadd.f32 %v1893, %v1917
        %1919 = vdwg.mxu0
        %v1920 = vmax.f32 %v1918, 0.0
        %v1921 = vld [vmem:[%s12] sm:$0xff]
        %v1922 = vld [vmem:[%s12 + $0x8] sm:$0xff]
        %v1923 = vld [vmem:[%s12 + $0x10] sm:$0xff]
        %v1924 = vld [vmem:[%s12 + $0x18] sm:$0xff]
        %v1925 = vld [vmem:[%s12 + $0x20] sm:$0xff]
        %v1926 = vld [vmem:[%s12 + $0x28] sm:$0xff]
        %v1927 = vld [vmem:[%s12 + $0x30] sm:$0xff]
        %v1928 = vld [vmem:[%s12 + $0x38] sm:$0xff]
        %v1929 = vld [vmem:[%s12 + $0x40] sm:$0xff]
        %v1930 = vld [vmem:[%s12 + $0x48] sm:$0xff]
        %v1931 = vld [vmem:[%s12 + $0x50] sm:$0xff]
        %v1932 = vld [vmem:[%s12 + $0x58] sm:$0xff]
        %v1933 = vld [vmem:[%s12 + $0x60] sm:$0xff]
        %v1934 = vld [vmem:[%s12 + $0x68] sm:$0xff]
        %v1935 = vld [vmem:[%s12 + $0x70] sm:$0xff]
        %v1936 = vld [vmem:[%s12 + $0x78] sm:$0xff]
        %v1937 = vld [vmem:[%s13] sm:$0x1]
        %v1939 = vperm.slane %v1937, 0
        %v1941 = vand.u32 %v1936, 4294901760
        %1942 = vmatpush.msra.mxu0 %v1941
        %v1943 = vand.u32 %v1935, 4294901760
        %1944 = vmatpush.msra.mxu0 %v1943
        %v1945 = vand.u32 %v1934, 4294901760
        %1946 = vmatpush.msra.mxu0 %v1945
        %v1947 = vand.u32 %v1933, 4294901760
        %1948 = vmatpush.msra.mxu0 %v1947
        %v1949 = vand.u32 %v1932, 4294901760
        %1950 = vmatpush.msra.mxu0 %v1949
        %v1951 = vand.u32 %v1931, 4294901760
        %1952 = vmatpush.msra.mxu0 %v1951
        %v1953 = vand.u32 %v1930, 4294901760
        %1954 = vmatpush.msra.mxu0 %v1953
        %v1955 = vand.u32 %v1929, 4294901760
        %1956 = vmatpush.msra.mxu0 %v1955
        %v1957 = vand.u32 %v1928, 4294901760
        %1958 = vmatpush.msra.mxu0 %v1957
        %v1959 = vand.u32 %v1927, 4294901760
        %1960 = vmatpush.msra.mxu0 %v1959
        %v1961 = vand.u32 %v1926, 4294901760
        %1962 = vmatpush.msra.mxu0 %v1961
        %v1963 = vand.u32 %v1925, 4294901760
        %1964 = vmatpush.msra.mxu0 %v1963
        %v1965 = vand.u32 %v1924, 4294901760
        %1966 = vmatpush.msra.mxu0 %v1965
        %v1967 = vand.u32 %v1923, 4294901760
        %1968 = vmatpush.msra.mxu0 %v1967
        %v1969 = vand.u32 %v1922, 4294901760
        %1970 = vmatpush.msra.mxu0 %v1969
        %v1971 = vand.u32 %v1921, 4294901760
        %1972 = vmatpush.msra.mxu0 %v1971
        %v1973 = vand.u32 %v1920, 4294901760
        %v1974 = vsub.f32 %v1920, %v1973
        %v1975 = vand.u32 %v1974, 4294901760
        %v1976 = vsub.f32 %v1974, %v1975
        %v1977 = vand.u32 %v1976, 4294901760
        %1978 = vmatmul.f32.gmra.mxu0 %v1977
        %v1979 = vpop.f32.mrf.mxu0
        %v1980 = vadd.f32 %v1939, %v1979
        %1981 = vdwg.mxu0
        %v1982 = vand.u32 %v1936, 4294901760
        %v1983 = vsub.f32 %v1936, %v1982
        %v1984 = vand.u32 %v1983, 4294901760
        %v1985 = vsub.f32 %v1983, %v1984
        %v1986 = vand.u32 %v1985, 4294901760
        %1987 = vmatpush.msra.mxu0 %v1986
        %v1988 = vand.u32 %v1935, 4294901760
        %v1989 = vsub.f32 %v1935, %v1988
        %v1990 = vand.u32 %v1989, 4294901760
        %v1991 = vsub.f32 %v1989, %v1990
        %v1992 = vand.u32 %v1991, 4294901760
        %1993 = vmatpush.msra.mxu0 %v1992
        %v1994 = vand.u32 %v1934, 4294901760
        %v1995 = vsub.f32 %v1934, %v1994
        %v1996 = vand.u32 %v1995, 4294901760
        %v1997 = vsub.f32 %v1995, %v1996
        %v1998 = vand.u32 %v1997, 4294901760
        %1999 = vmatpush.msra.mxu0 %v1998
        %v2000 = vand.u32 %v1933, 4294901760
        %v2001 = vsub.f32 %v1933, %v2000
        %v2002 = vand.u32 %v2001, 4294901760
        %v2003 = vsub.f32 %v2001, %v2002
        %v2004 = vand.u32 %v2003, 4294901760
        %2005 = vmatpush.msra.mxu0 %v2004
        %v2006 = vand.u32 %v1932, 4294901760
        %v2007 = vsub.f32 %v1932, %v2006
        %v2008 = vand.u32 %v2007, 4294901760
        %v2009 = vsub.f32 %v2007, %v2008
        %v2010 = vand.u32 %v2009, 4294901760
        %2011 = vmatpush.msra.mxu0 %v2010
        %v2012 = vand.u32 %v1931, 4294901760
        %v2013 = vsub.f32 %v1931, %v2012
        %v2014 = vand.u32 %v2013, 4294901760
        %v2015 = vsub.f32 %v2013, %v2014
        %v2016 = vand.u32 %v2015, 4294901760
        %2017 = vmatpush.msra.mxu0 %v2016
        %v2018 = vand.u32 %v1930, 4294901760
        %v2019 = vsub.f32 %v1930, %v2018
        %v2020 = vand.u32 %v2019, 4294901760
        %v2021 = vsub.f32 %v2019, %v2020
        %v2022 = vand.u32 %v2021, 4294901760
        %2023 = vmatpush.msra.mxu0 %v2022
        %v2024 = vand.u32 %v1929, 4294901760
        %v2025 = vsub.f32 %v1929, %v2024
        %v2026 = vand.u32 %v2025, 4294901760
        %v2027 = vsub.f32 %v2025, %v2026
        %v2028 = vand.u32 %v2027, 4294901760
        %2029 = vmatpush.msra.mxu0 %v2028
        %v2030 = vand.u32 %v1928, 4294901760
        %v2031 = vsub.f32 %v1928, %v2030
        %v2032 = vand.u32 %v2031, 4294901760
        %v2033 = vsub.f32 %v2031, %v2032
        %v2034 = vand.u32 %v2033, 4294901760
        %2035 = vmatpush.msra.mxu0 %v2034
        %v2036 = vand.u32 %v1927, 4294901760
        %v2037 = vsub.f32 %v1927, %v2036
        %v2038 = vand.u32 %v2037, 4294901760
        %v2039 = vsub.f32 %v2037, %v2038
        %v2040 = vand.u32 %v2039, 4294901760
        %2041 = vmatpush.msra.mxu0 %v2040
        %v2042 = vand.u32 %v1926, 4294901760
        %v2043 = vsub.f32 %v1926, %v2042
        %v2044 = vand.u32 %v2043, 4294901760
        %v2045 = vsub.f32 %v2043, %v2044
        %v2046 = vand.u32 %v2045, 4294901760
        %2047 = vmatpush.msra.mxu0 %v2046
        %v2048 = vand.u32 %v1925, 4294901760
        %v2049 = vsub.f32 %v1925, %v2048
        %v2050 = vand.u32 %v2049, 4294901760
        %v2051 = vsub.f32 %v2049, %v2050
        %v2052 = vand.u32 %v2051, 4294901760
        %2053 = vmatpush.msra.mxu0 %v2052
        %v2054 = vand.u32 %v1924, 4294901760
        %v2055 = vsub.f32 %v1924, %v2054
        %v2056 = vand.u32 %v2055, 4294901760
        %v2057 = vsub.f32 %v2055, %v2056
        %v2058 = vand.u32 %v2057, 4294901760
        %2059 = vmatpush.msra.mxu0 %v2058
        %v2060 = vand.u32 %v1923, 4294901760
        %v2061 = vsub.f32 %v1923, %v2060
        %v2062 = vand.u32 %v2061, 4294901760
        %v2063 = vsub.f32 %v2061, %v2062
        %v2064 = vand.u32 %v2063, 4294901760
        %2065 = vmatpush.msra.mxu0 %v2064
        %v2066 = vand.u32 %v1922, 4294901760
        %v2067 = vsub.f32 %v1922, %v2066
        %v2068 = vand.u32 %v2067, 4294901760
        %v2069 = vsub.f32 %v2067, %v2068
        %v2070 = vand.u32 %v2069, 4294901760
        %2071 = vmatpush.msra.mxu0 %v2070
        %v2072 = vand.u32 %v1921, 4294901760
        %v2073 = vsub.f32 %v1921, %v2072
        %v2074 = vand.u32 %v2073, 4294901760
        %v2075 = vsub.f32 %v2073, %v2074
        %v2076 = vand.u32 %v2075, 4294901760
        %2077 = vmatpush.msra.mxu0 %v2076
        %v2078 = vand.u32 %v1920, 4294901760
        %2079 = vmatmul.f32.gmra.mxu0 %v2078
        %v2080 = vpop.f32.mrf.mxu0
        %v2081 = vadd.f32 %v1980, %v2080
        %2082 = vdwg.mxu0
        %v2083 = vand.u32 %v1936, 4294901760
        %v2084 = vsub.f32 %v1936, %v2083
        %2085 = vmatpush.msra.mxu0 %v2084
        %v2086 = vand.u32 %v1935, 4294901760
        %v2087 = vsub.f32 %v1935, %v2086
        %2088 = vmatpush.msra.mxu0 %v2087
        %v2089 = vand.u32 %v1934, 4294901760
        %v2090 = vsub.f32 %v1934, %v2089
        %2091 = vmatpush.msra.mxu0 %v2090
        %v2092 = vand.u32 %v1933, 4294901760
        %v2093 = vsub.f32 %v1933, %v2092
        %2094 = vmatpush.msra.mxu0 %v2093
        %v2095 = vand.u32 %v1932, 4294901760
        %v2096 = vsub.f32 %v1932, %v2095
        %2097 = vmatpush.msra.mxu0 %v2096
        %v2098 = vand.u32 %v1931, 4294901760
        %v2099 = vsub.f32 %v1931, %v2098
        %2100 = vmatpush.msra.mxu0 %v2099
        %v2101 = vand.u32 %v1930, 4294901760
        %v2102 = vsub.f32 %v1930, %v2101
        %2103 = vmatpush.msra.mxu0 %v2102
        %v2104 = vand.u32 %v1929, 4294901760
        %v2105 = vsub.f32 %v1929, %v2104
        %2106 = vmatpush.msra.mxu0 %v2105
        %v2107 = vand.u32 %v1928, 4294901760
        %v2108 = vsub.f32 %v1928, %v2107
        %2109 = vmatpush.msra.mxu0 %v2108
        %v2110 = vand.u32 %v1927, 4294901760
        %v2111 = vsub.f32 %v1927, %v2110
        %2112 = vmatpush.msra.mxu0 %v2111
        %v2113 = vand.u32 %v1926, 4294901760
        %v2114 = vsub.f32 %v1926, %v2113
        %2115 = vmatpush.msra.mxu0 %v2114
        %v2116 = vand.u32 %v1925, 4294901760
        %v2117 = vsub.f32 %v1925, %v2116
        %2118 = vmatpush.msra.mxu0 %v2117
        %v2119 = vand.u32 %v1924, 4294901760
        %v2120 = vsub.f32 %v1924, %v2119
        %2121 = vmatpush.msra.mxu0 %v2120
        %v2122 = vand.u32 %v1923, 4294901760
        %v2123 = vsub.f32 %v1923, %v2122
        %2124 = vmatpush.msra.mxu0 %v2123
        %v2125 = vand.u32 %v1922, 4294901760
        %v2126 = vsub.f32 %v1922, %v2125
        %2127 = vmatpush.msra.mxu0 %v2126
        %v2128 = vand.u32 %v1921, 4294901760
        %v2129 = vsub.f32 %v1921, %v2128
        %2130 = vmatpush.msra.mxu0 %v2129
        %v2131 = vand.u32 %v1920, 4294901760
        %v2132 = vsub.f32 %v1920, %v2131
        %2133 = vmatmul.f32.gmra.mxu0 %v2132
        %v2134 = vpop.f32.mrf.mxu0
        %v2135 = vadd.f32 %v2081, %v2134
        %2136 = vdwg.mxu0
        %v2137 = vand.u32 %v1936, 4294901760
        %2138 = vmatpush.msra.mxu0 %v2137
        %v2139 = vand.u32 %v1935, 4294901760
        %2140 = vmatpush.msra.mxu0 %v2139
        %v2141 = vand.u32 %v1934, 4294901760
        %2142 = vmatpush.msra.mxu0 %v2141
        %v2143 = vand.u32 %v1933, 4294901760
        %2144 = vmatpush.msra.mxu0 %v2143
        %v2145 = vand.u32 %v1932, 4294901760
        %2146 = vmatpush.msra.mxu0 %v2145
        %v2147 = vand.u32 %v1931, 4294901760
        %2148 = vmatpush.msra.mxu0 %v2147
        %v2149 = vand.u32 %v1930, 4294901760
        %2150 = vmatpush.msra.mxu0 %v2149
        %v2151 = vand.u32 %v1929, 4294901760
        %2152 = vmatpush.msra.mxu0 %v2151
        %v2153 = vand.u32 %v1928, 4294901760
        %2154 = vmatpush.msra.mxu0 %v2153
        %v2155 = vand.u32 %v1927, 4294901760
        %2156 = vmatpush.msra.mxu0 %v2155
        %v2157 = vand.u32 %v1926, 4294901760
        %2158 = vmatpush.msra.mxu0 %v2157
        %v2159 = vand.u32 %v1925, 4294901760
        %2160 = vmatpush.msra.mxu0 %v2159
        %v2161 = vand.u32 %v1924, 4294901760
        %2162 = vmatpush.msra.mxu0 %v2161
        %v2163 = vand.u32 %v1923, 4294901760
        %2164 = vmatpush.msra.mxu0 %v2163
        %v2165 = vand.u32 %v1922, 4294901760
        %2166 = vmatpush.msra.mxu0 %v2165
        %v2167 = vand.u32 %v1921, 4294901760
        %2168 = vmatpush.msra.mxu0 %v2167
        %v2169 = vand.u32 %v1920, 4294901760
        %v2170 = vsub.f32 %v1920, %v2169
        %v2171 = vand.u32 %v2170, 4294901760
        %2172 = vmatmul.f32.gmra.mxu0 %v2171
        %v2173 = vpop.f32.mrf.mxu0
        %v2174 = vadd.f32 %v2135, %v2173
        %2175 = vdwg.mxu0
        %v2176 = vand.u32 %v1936, 4294901760
        %v2177 = vsub.f32 %v1936, %v2176
        %v2178 = vand.u32 %v2177, 4294901760
        %2179 = vmatpush.msra.mxu0 %v2178
        %v2180 = vand.u32 %v1935, 4294901760
        %v2181 = vsub.f32 %v1935, %v2180
        %v2182 = vand.u32 %v2181, 4294901760
        %2183 = vmatpush.msra.mxu0 %v2182
        %v2184 = vand.u32 %v1934, 4294901760
        %v2185 = vsub.f32 %v1934, %v2184
        %v2186 = vand.u32 %v2185, 4294901760
        %2187 = vmatpush.msra.mxu0 %v2186
        %v2188 = vand.u32 %v1933, 4294901760
        %v2189 = vsub.f32 %v1933, %v2188
        %v2190 = vand.u32 %v2189, 4294901760
        %2191 = vmatpush.msra.mxu0 %v2190
        %v2192 = vand.u32 %v1932, 4294901760
        %v2193 = vsub.f32 %v1932, %v2192
        %v2194 = vand.u32 %v2193, 4294901760
        %2195 = vmatpush.msra.mxu0 %v2194
        %v2196 = vand.u32 %v1931, 4294901760
        %v2197 = vsub.f32 %v1931, %v2196
        %v2198 = vand.u32 %v2197, 4294901760
        %2199 = vmatpush.msra.mxu0 %v2198
        %v2200 = vand.u32 %v1930, 4294901760
        %v2201 = vsub.f32 %v1930, %v2200
        %v2202 = vand.u32 %v2201, 4294901760
        %2203 = vmatpush.msra.mxu0 %v2202
        %v2204 = vand.u32 %v1929, 4294901760
        %v2205 = vsub.f32 %v1929, %v2204
        %v2206 = vand.u32 %v2205, 4294901760
        %2207 = vmatpush.msra.mxu0 %v2206
        %v2208 = vand.u32 %v1928, 4294901760
        %v2209 = vsub.f32 %v1928, %v2208
        %v2210 = vand.u32 %v2209, 4294901760
        %2211 = vmatpush.msra.mxu0 %v2210
        %v2212 = vand.u32 %v1927, 4294901760
        %v2213 = vsub.f32 %v1927, %v2212
        %v2214 = vand.u32 %v2213, 4294901760
        %2215 = vmatpush.msra.mxu0 %v2214
        %v2216 = vand.u32 %v1926, 4294901760
        %v2217 = vsub.f32 %v1926, %v2216
        %v2218 = vand.u32 %v2217, 4294901760
        %2219 = vmatpush.msra.mxu0 %v2218
        %v2220 = vand.u32 %v1925, 4294901760
        %v2221 = vsub.f32 %v1925, %v2220
        %v2222 = vand.u32 %v2221, 4294901760
        %2223 = vmatpush.msra.mxu0 %v2222
        %v2224 = vand.u32 %v1924, 4294901760
        %v2225 = vsub.f32 %v1924, %v2224
        %v2226 = vand.u32 %v2225, 4294901760
        %2227 = vmatpush.msra.mxu0 %v2226
        %v2228 = vand.u32 %v1923, 4294901760
        %v2229 = vsub.f32 %v1923, %v2228
        %v2230 = vand.u32 %v2229, 4294901760
        %2231 = vmatpush.msra.mxu0 %v2230
        %v2232 = vand.u32 %v1922, 4294901760
        %v2233 = vsub.f32 %v1922, %v2232
        %v2234 = vand.u32 %v2233, 4294901760
        %2235 = vmatpush.msra.mxu0 %v2234
        %v2236 = vand.u32 %v1921, 4294901760
        %v2237 = vsub.f32 %v1921, %v2236
        %v2238 = vand.u32 %v2237, 4294901760
        %2239 = vmatpush.msra.mxu0 %v2238
        %v2240 = vand.u32 %v1920, 4294901760
        %2241 = vmatmul.f32.gmra.mxu0 %v2240
        %v2242 = vpop.f32.mrf.mxu0
        %v2243 = vadd.f32 %v2174, %v2242
        %2244 = vdwg.mxu0
        %v2245 = vand.u32 %v1936, 4294901760
        %2246 = vmatpush.msra.mxu0 %v2245
        %v2247 = vand.u32 %v1935, 4294901760
        %2248 = vmatpush.msra.mxu0 %v2247
        %v2249 = vand.u32 %v1934, 4294901760
        %2250 = vmatpush.msra.mxu0 %v2249
        %v2251 = vand.u32 %v1933, 4294901760
        %2252 = vmatpush.msra.mxu0 %v2251
        %v2253 = vand.u32 %v1932, 4294901760
        %2254 = vmatpush.msra.mxu0 %v2253
        %v2255 = vand.u32 %v1931, 4294901760
        %2256 = vmatpush.msra.mxu0 %v2255
        %v2257 = vand.u32 %v1930, 4294901760
        %2258 = vmatpush.msra.mxu0 %v2257
        %v2259 = vand.u32 %v1929, 4294901760
        %2260 = vmatpush.msra.mxu0 %v2259
        %v2261 = vand.u32 %v1928, 4294901760
        %2262 = vmatpush.msra.mxu0 %v2261
        %v2263 = vand.u32 %v1927, 4294901760
        %2264 = vmatpush.msra.mxu0 %v2263
        %v2265 = vand.u32 %v1926, 4294901760
        %2266 = vmatpush.msra.mxu0 %v2265
        %v2267 = vand.u32 %v1925, 4294901760
        %2268 = vmatpush.msra.mxu0 %v2267
        %v2269 = vand.u32 %v1924, 4294901760
        %2270 = vmatpush.msra.mxu0 %v2269
        %v2271 = vand.u32 %v1923, 4294901760
        %2272 = vmatpush.msra.mxu0 %v2271
        %v2273 = vand.u32 %v1922, 4294901760
        %2274 = vmatpush.msra.mxu0 %v2273
        %v2275 = vand.u32 %v1921, 4294901760
        %2276 = vmatpush.msra.mxu0 %v2275
        %v2277 = vand.u32 %v1920, 4294901760
        %2278 = vmatmul.f32.gmra.mxu0 %v2277
        %v2279 = vpop.f32.mrf.mxu0
        %v2280 = vadd.f32 %v2243, %v2279
        %2281 = vdwg.mxu0
        %v2282 = vadd.f32 %v1723, %v2280
        %v2283 = vsel %vm1140, %v2282, 0.0
        %2284 = vadd.xlane.f32.xlu0 %v2283
        %v2285 = vpop.xlane.xlu0 %2284
        %v2286 = vrcp.pop 32.0
        %v2287 = vmul.f32 32.0, %v2286
        %v2288 = vsub.f32 1.0, %v2287
        %v2289 = vmul.f32 %v2286, %v2288
        %v2290 = vadd.f32 %v2286, %v2289
        %vm2291 = vweird.f32 %v2286
        %v2292 = vsel %vm2291, %v2286, %v2290
        %v2293 = vmul.f32 %v2285, %v2292
        %v2294 = vsub.f32 %v2282, %v2293
        %v2295 = vmul.f32 %v2294, %v2294
        %v2296 = vsel %vm1140, %v2295, 0.0
        %2297 = vadd.xlane.f32.xlu0 %v2296
        %v2298 = vpop.xlane.xlu0 %2297
        %v2299 = vmul.f32 %v2298, %v2292
        %v2300 = vadd.f32 %v2299, 1e-05
        %v2301 = vrsqrt.pop %v2300
        %v2302 = vmul.f32 %v2301, %v2300
        %v2303 = vmul.f32 %v2302, %v2301
        %v2304 = vmul.f32 0.5, %v2303
        %v2305 = vsub.f32 1.5, %v2304
        %v2306 = vmul.f32 %v2301, %v2305
        %vm2307 = vweird.f32 %v2300
        %vm2308 = vweird.f32 %v2301
        %vm2309 = vmor %vm2307, %vm2308
        %v2310 = vsel %vm2309, %v2301, %v2306
        %v2311 = vmul.f32 %v2294, %v2310
        %v2312 = vld [vmem:[%s14] sm:$0x1]
        %v2314 = vperm.slane %v2312, 0
        %v2316 = vmul.f32 %v2311, %v2314
        %v2317 = vld [vmem:[%s15] sm:$0x1]
        %v2319 = vperm.slane %v2317, 0
        %v2321 = vadd.f32 %v2316, %v2319
        %2322 = vst.msk [vmem:[%s628] sm:$0xff] %vm1140, %v2321
        %s2323 = sand.u32 %s418, 1
        %s2324 = scalar_lea.sflag [#allocation6], %s2323
        %s2325 = sand.u32 %s418, 1
        %s2326 = smul.addr %s2325, 8
        %s2327 = scalar_lea.vmem [#allocation9], %s2326
        // Predicated region
        $region97: #{tpu_custom_call.1} parent=83 // pred_check
          %p2328 = pneg %p428
        $region98: #{tpu_custom_call.1} parent=83 // pred_check_branch
          %2330 = sbr.rel (%p2328) target = $region100
        $region99: #{tpu_custom_call.1} parent=83 // pred_region
          %2332 = vsyncadd %s2324, 0
          %s2333 = sadd.s32 %s41, %s40
          %s2334 = smul.addr %s2333, 8
          %s2335 = scalar_lea.hbm %s16, %s2334
          %s2337 = sshll.u32 %s2327, 4
          %s2338 = int_to_ptr.vmem [resolvable:$true] %s2337
          %s2339 = sshll.u32 %s2335, 4
          %s2340 = int_to_ptr.hbm [resolvable:$true] %s2339
          %2342 = dma.vmem_to_hbm [thread:$0]  %s2338, 128, %s2340, %s2324
        $region100: #{tpu_custom_call.1} parent=83 // pred_fallthru
          _
      $region84: #{tpu_custom_call.1} parent=5 // pred_fallthru
        _
      %p2343 = scmp.le.s32.totalorder 2, %s31
      // Predicated region
      $region101: #{tpu_custom_call.1} parent=5 // pred_check
        %p2344 = pneg %p2343
      $region102: #{tpu_custom_call.1} parent=5 // pred_check_branch
        %2346 = sbr.rel (%p2344) target = $region104
      $region103: #{tpu_custom_call.1} parent=5 // pred_region
        %s2347 = ssub.s32 %s31, 2
        // Predicated region
        $region105: #{tpu_custom_call.1} parent=103 // pred_check
          %p2348 = pneg %p434
        $region106: #{tpu_custom_call.1} parent=103 // pred_check_branch
          %2350 = sbr.rel (%p2348) target = $region108
        $region107: #{tpu_custom_call.1} parent=103 // pred_region
          %s2351 = sand.u32 %s419, 1
          %s2352 = scalar_lea.sflag [#allocation6], %s2351
          %s2353 = sand.u32 %s419, 1
          %s2354 = smul.addr %s2353, 8
          %s2355 = scalar_lea.vmem [#allocation9], %s2354
          %2357 = dma.done %s2352, 128
        $region108: #{tpu_custom_call.1} parent=103 // pred_fallthru
          _
      $region104: #{tpu_custom_call.1} parent=5 // pred_fallthru
        _
    $region6: #{tpu_custom_call.1} parent=1 // loop_footer
      %s35 = sadd.s32 1, %s31
    $region7: #{tpu_custom_call.1} parent=1 // loop_footer_branch
      %30 = sbr.rel target = $region3
    $region8: #{tpu_custom_call.1} parent=1 // loop_exit
      _
    %2358 = vsyncpa [#allocation5], 1
    %s2359 = scalar_lea.sflag [#allocation5], 1
    %2360 = vsyncpa %s2359, 1
    %2361 = vsyncpa [#allocation8], 1
    %s2362 = scalar_lea.sflag [#allocation8], 1
    %2363 = vsyncpa %s2362, 1
    %2364 = vsyncpa [#allocation6], 1
    %s2365 = scalar_lea.sflag [#allocation6], 1
    %2366 = vsyncpa %s2365, 1

</llo_original>
